<compile_context>
chip_gen: v6e
topology: v6e:2x2x1
jax: 0.10.0
libtpu: 0.0.40
codegen_flags: <defaults>
</compile_context>

<pallas_src>
import functools

import numpy as np
import jax
import jax.numpy as jnp
from jax.experimental import pallas as pl
from jax.experimental.pallas import tpu as pltpu


_CIN_PAD = 8   # input channels zero-padded 4 -> 8 (keeps sublane chunks tile-aligned)

# Packed-weight table: name -> (row0, cout, kcols=9*cin).  Rows are reserved in
# multiples of 16 so every bf16 row-slice starts on a (16,128) tile boundary.
_SEG = {
    "enc1":    (0,   8,  72),
    "enc2":    (16,  16, 72),
    "enc3":    (32,  32, 144),
    "edge3":   (64,  16, 288),
    "edge2_u": (80,  16, 144),   # up(e3) part of edge2 (owns the bias)
    "edge2_s": (96,  16, 144),   # f2 skip part
    "edge1_u": (112, 8,  144),   # up(e2) part
    "edge1_s": (128, 8,  72),    # f1 skip part
    "cor3":    (144, 16, 144),
    "cor2_u":  (160, 8,  144),   # up(c3) part
    "cor2_s":  (176, 8,  144),   # e2 skip part
    "cor1_u":  (192, 8,  72),    # up(c2) part
    "cor1_s":  (208, 8,  72),    # e1 skip part
    "heads":   (224, 2,  16),    # both 1x1 heads, block-structured
}
_TOTAL_ROWS = 240
_MAX_K = 288


# ---------------------------------------------------------------------------
# Host-side constant builders (0/1 matrices & masks; exact in bf16)
# ---------------------------------------------------------------------------
def _tap_masks(h, w, b):
    """(9, b*h*w) 0/1: output (y,x) has tap (dy,dx) in-bounds (padding=1)."""
    m = np.zeros((9, b, h, w), np.float32)
    for dy in range(3):
        for dx in range(3):
            ys = slice(max(0, 1 - dy), min(h, h - dy + 1))
            xs = slice(max(0, 1 - dx), min(w, w - dx + 1))
            m[3 * dy + dx, :, ys, xs] = 1.0
    return m.reshape(9, b * h * w)


def _shift_select4(h, w, b):
    """(9, b*h*w, b*h*w) one-hot shift-select (used only at the tiny 4x4 stage)."""
    hw = h * w
    s = np.zeros((9, b, hw, b, hw), np.float32)
    for dy in range(3):
        for dx in range(3):
            t = 3 * dy + dx
            for bb in range(b):
                for yo in range(h):
                    yi = yo + dy - 1
                    if not 0 <= yi < h:
                        continue
                    for xo in range(w):
                        xi = xo + dx - 1
                        if 0 <= xi < w:
                            s[t, bb, yi * w + xi, bb, yo * w + xo] = 1.0
    return s.reshape(9, b * hw, b * hw)


def _decimate2x(h, w, b):
    """(b*h*w, b*(h//2)*(w//2)) one-hot: keep even rows / even cols."""
    ho, wo = h // 2, w // 2
    d = np.zeros((b, h * w, b, ho * wo), np.float32)
    for bb in range(b):
        for yo in range(ho):
            for xo in range(wo):
                d[bb, (2 * yo) * w + 2 * xo, bb, yo * wo + xo] = 1.0
    return d.reshape(b * h * w, b * ho * wo)


def _upsample2x(h, w, b):
    """(b*h*w, b*4*h*w) one-hot: nearest-neighbour 2x upsample."""
    u = np.zeros((b, h * w, b, 4 * h * w), np.float32)
    for bb in range(b):
        for y2 in range(2 * h):
            for x2 in range(2 * w):
                u[bb, (y2 // 2) * w + (x2 // 2), bb, y2 * (2 * w) + x2] = 1.0
    return u.reshape(b * h * w, b * 4 * h * w)


# ---------------------------------------------------------------------------
# The single fused kernel: whole forward pass for one batch tile
# ---------------------------------------------------------------------------
def _fused_forward_kernel(x_ref, m16_ref, m8_ref, s4_ref, d168_ref, d84_ref,
                          u48_ref, u816_ref, w_ref, b_ref, out_ref, *, w0):
    n16 = x_ref.shape[1]                  # B_TILE * 16 * 16 (always multiple of 128)
    n8 = n16 // 4
    n4 = n16 // 16

    m16 = m16_ref[...]                    # (9, n16) f32 tap-validity masks @ 16x16
    m8 = m8_ref[...]                      # (9, n8)  f32 tap-validity masks @ 8x8

    def bf(v):
        return v.astype(jnp.bfloat16)

    def stack_roll(act, masks, width, n):
        """act (cin, n) f32 -> (9*cin, n) bf16 of masked shifted copies (tap-major).

        shifted_tap[:, j] = act[:, j + (dy-1)*width + (dx-1)]  (0 outside image).
        Shifts are XLU lane rotations; masks kill wrapped / out-of-image lanes.
        """
        parts = []
        for dy in range(3):
            for dx in range(3):
                s = (dy - 1) * width + (dx - 1)
                if s == 0:                         # centre tap: no shift, mask == 1
                    parts.append(act)
                    continue
                shifted = pltpu.roll(act, shift=(-s) % n, axis=1)
                parts.append(shifted * masks[3 * dy + dx:3 * dy + dx + 1, :])
        return bf(jnp.concatenate(parts, axis=0))

    def stack_s4(act_bf):
        """4x4 stage (tiny, <128 lanes): shifted copies via one-hot matmuls."""
        parts = [jnp.dot(act_bf, s4_ref[t], preferred_element_type=jnp.float32)
                 for t in range(9)]
        return bf(jnp.concatenate(parts, axis=0))

    def wdot(name, stack):
        r0, cout, kc = _SEG[name]
        return jnp.dot(w_ref[r0:r0 + cout, 0:kc], stack,
                       preferred_element_type=jnp.float32)

    def bias(name, acc):
        r0, cout, _ = _SEG[name]
        return acc + b_ref[r0:r0 + cout, :]

    def relu(v):
        return jnp.maximum(v, 0.0)

    # ---------------- Encoder ----------------
    x = x_ref[...].astype(jnp.float32)                                     # (8, n16)
    f1 = relu(bias("enc1", wdot("enc1", stack_roll(x, m16, w0, n16))))     # (8, n16)

    st_f1 = stack_roll(f1, m16, w0, n16)            # shared: enc2 + edge1 skip
    t = wdot("enc2", st_f1)                         # full-res stride-1 result
    f2 = relu(bias("enc2", jnp.dot(bf(t), d168_ref[...],                   # stride 2
                                   preferred_element_type=jnp.float32)))   # (16, n8)

    st_f2 = stack_roll(f2, m8, w0 // 2, n8)         # shared: enc3 + edge2 skip
    t = wdot("enc3", st_f2)
    f3 = relu(bias("enc3", jnp.dot(bf(t), d84_ref[...],
                                   preferred_element_type=jnp.float32)))   # (32, n4)

    # ---------------- Edge decoder ----------------
    e3 = relu(bias("edge3", wdot("edge3", stack_s4(bf(f3)))))              # (16, n4)
    e3b = bf(e3)

    up = jnp.dot(e3b, u48_ref[...], preferred_element_type=jnp.float32)    # (16, n8)
    e2 = relu(bias("edge2_u", wdot("edge2_u", stack_roll(up, m8, w0 // 2, n8))
                              + wdot("edge2_s", st_f2)))                   # (16, n8)

    up = jnp.dot(bf(e2), u816_ref[...], preferred_element_type=jnp.float32)  # (16, n16)
    e1 = relu(bias("edge1_u", wdot("edge1_u", stack_roll(up, m16, w0, n16))
                              + wdot("edge1_s", st_f1)))                   # (8, n16)

    # ---------------- Corner decoder ----------------
    c3 = relu(bias("cor3", wdot("cor3", stack_s4(e3b))))                   # (16, n4)

    up = jnp.dot(bf(c3), u48_ref[...], preferred_element_type=jnp.float32)  # (16, n8)
    c2 = relu(bias("cor2_u", wdot("cor2_u", stack_roll(up, m8, w0 // 2, n8))
                             + wdot("cor2_s", stack_roll(e2, m8, w0 // 2, n8))))  # (8, n8)

    up = jnp.dot(bf(c2), u816_ref[...], preferred_element_type=jnp.float32)  # (8, n16)
    c1 = relu(bias("cor1_u", wdot("cor1_u", stack_roll(up, m16, w0, n16))
                             + wdot("cor1_s", stack_roll(e1, m16, w0, n16))))     # (8, n16)

    # -------- Heads: both 1x1 sigmoid convs as one (2,16) matmul, one store ---
    ec = bf(jnp.concatenate([e1, c1], axis=0))                             # (16, n16)
    out_ref[...] = jax.nn.sigmoid(bias("heads", wdot("heads", ec)))        # (2, n16)


# ---------------------------------------------------------------------------
# Parameters (PyTorch layout: (Cout, Cin, kh, kw) / (Cout,)); weights_init analogue
# ---------------------------------------------------------------------------
def init_params(key):
    ks = jax.random.split(key, 11)

    def cw(k, cout, cin, ksz):
        return jax.random.normal(k, (cout, cin, ksz, ksz), jnp.float32) * 0.1

    def z(c):
        return jnp.zeros((c,), jnp.float32)

    return {
        "enc1": (cw(ks[0], 8, 4, 3), z(8)),
        "enc2": (cw(ks[1], 16, 8, 3), z(16)),
        "enc3": (cw(ks[2], 32, 16, 3), z(32)),
        "edge3": (cw(ks[3], 16, 32, 3), z(16)),
        "edge2": (cw(ks[4], 16, 32, 3), z(16)),     # in = up(e3)[16] + f2[16]
        "edge1": (cw(ks[5], 8, 24, 3), z(8)),       # in = up(e2)[16] + f1[8]
        "edge_head": (cw(ks[6], 1, 8, 1), z(1)),
        "cor3": (cw(ks[7], 16, 16, 3), z(16)),
        "cor2": (cw(ks[8], 8, 32, 3), z(8)),        # in = up(c3)[16] + e2[16]
        "cor1": (cw(ks[9], 8, 16, 3), z(8)),        # in = up(c2)[8]  + e1[8]
        "cor_head": (cw(ks[10], 1, 8, 1), z(1)),
    }


def build_kernel_operands(params, h, w, b_tile):
    """Constants + consolidated packed weights for a B_TILE-sized batch tile."""
    m16 = _tap_masks(h, w, b_tile)
    m8 = _tap_masks(h // 2, w // 2, b_tile)
    s4 = _shift_select4(h // 4, w // 4, b_tile)
    d168 = _decimate2x(h, w, b_tile)
    d84 = _decimate2x(h // 2, w // 2, b_tile)
    u48 = _upsample2x(h // 4, w // 4, b_tile)
    u816 = _upsample2x(h // 2, w // 2, b_tile)

    W = np.zeros((_TOTAL_ROWS, _MAX_K), np.float32)
    B = np.zeros((_TOTAL_ROWS, 1), np.float32)

    def pack(w4d, cin_pad=None):
        w4d = np.asarray(w4d, np.float32)
        co, ci, kh, kw = w4d.shape
        if cin_pad is not None and cin_pad > ci:
            w4d = np.concatenate(
                [w4d, np.zeros((co, cin_pad - ci, kh, kw), np.float32)], axis=1)
        # column = (3*dy + dx) * cin + ci   (tap-major, matches stack_roll/stack_s4)
        return np.transpose(w4d, (0, 2, 3, 1)).reshape(co, -1)

    def put(name, mat, bias_vec=None):
        r0, co, kc = _SEG[name]
        assert mat.shape == (co, kc), (name, mat.shape, (co, kc))
        W[r0:r0 + co, :kc] = mat
        if bias_vec is not None:
            B[r0:r0 + co, 0] = np.asarray(bias_vec, np.float32)

    put("enc1", pack(params["enc1"][0], cin_pad=_CIN_PAD), params["enc1"][1])
    put("enc2", pack(params["enc2"][0]), params["enc2"][1])
    put("enc3", pack(params["enc3"][0]), params["enc3"][1])
    put("edge3", pack(params["edge3"][0]), params["edge3"][1])

    w_e2 = np.asarray(params["edge2"][0], np.float32)
    put("edge2_u", pack(w_e2[:, :16]), params["edge2"][1])
    put("edge2_s", pack(w_e2[:, 16:]))

    w_e1 = np.asarray(params["edge1"][0], np.float32)
    put("edge1_u", pack(w_e1[:, :16]), params["edge1"][1])
    put("edge1_s", pack(w_e1[:, 16:]))

    put("cor3", pack(params["cor3"][0]), params["cor3"][1])

    w_c2 = np.asarray(params["cor2"][0], np.float32)
    put("cor2_u", pack(w_c2[:, :16]), params["cor2"][1])
    put("cor2_s", pack(w_c2[:, 16:]))

    w_c1 = np.asarray(params["cor1"][0], np.float32)
    put("cor1_u", pack(w_c1[:, :8]), params["cor1"][1])
    put("cor1_s", pack(w_c1[:, 8:]))

    r0 = _SEG["heads"][0]
    W[r0, 0:8] = np.asarray(params["edge_head"][0], np.float32).reshape(8)
    W[r0 + 1, 8:16] = np.asarray(params["cor_head"][0], np.float32).reshape(8)
    B[r0, 0] = float(np.asarray(params["edge_head"][1])[0])
    B[r0 + 1, 0] = float(np.asarray(params["cor_head"][1])[0])

    return [
        jnp.asarray(m16, jnp.float32),
        jnp.asarray(m8, jnp.float32),
        jnp.asarray(s4, jnp.bfloat16),
        jnp.asarray(d168, jnp.bfloat16),
        jnp.asarray(d84, jnp.bfloat16),
        jnp.asarray(u48, jnp.bfloat16),
        jnp.asarray(u816, jnp.bfloat16),
        jnp.asarray(W, jnp.bfloat16),
        jnp.asarray(B, jnp.float32),
    ]


# ---------------------------------------------------------------------------
# Public forward: x (NCHW) -> (edge_out, corner_out), both NCHW
# ---------------------------------------------------------------------------
@jax.jit
def model_forward(operands, x_nchw):
    n, c, h, w = x_nchw.shape
    hw = h * w
    b_tile = operands[0].shape[1] // hw          # static (from mask shape)
    assert n % b_tile == 0 and c <= _CIN_PAD

    # NCHW -> lane-major (C, N*H*W) with channels zero-padded to 8; bf16 for MXU.
    x_pad = jnp.pad(x_nchw, ((0, 0), (0, _CIN_PAD - c), (0, 0), (0, 0)))
    x_flat = jnp.transpose(x_pad, (1, 0, 2, 3)).reshape(_CIN_PAD, n * hw)
    x_flat = x_flat.astype(jnp.bfloat16)

    def const_spec(op):
        zeros = (0,) * op.ndim
        return pl.BlockSpec(op.shape, lambda i, _z=zeros: _z)

    in_specs = ([pl.BlockSpec((_CIN_PAD, b_tile * hw), lambda i: (0, i))]
                + [const_spec(op) for op in operands])
    out_specs = pl.BlockSpec((2, b_tile * hw), lambda i: (0, i))

    out = pl.pallas_call(
        functools.partial(_fused_forward_kernel, w0=w),
        grid=(n // b_tile,),
        in_specs=in_specs,
        out_specs=out_specs,
        out_shape=jax.ShapeDtypeStruct((2, n * hw), jnp.float32),
        compiler_params=pltpu.CompilerParams(
            dimension_semantics=("parallel",)),
    )(x_flat, *operands)

    out = out.reshape(2, n, h, w)
    return out[0][:, None], out[1][:, None]


# ---------------------------------------------------------------------------
# Pure-JAX (XLA conv) reference of the same network, for correctness checking
# ---------------------------------------------------------------------------
def reference_forward(params, x):
    def conv(v, name, stride=1, pad=1):
        wgt, b = params[name]
        out = jax.lax.conv_general_dilated(
            v, wgt, window_strides=(stride, stride),
            padding=[(pad, pad), (pad, pad)],
            dimension_numbers=("NCHW", "OIHW", "NCHW"),
            precision=jax.lax.Precision.HIGHEST)
        return out + b.reshape(1, -1, 1, 1)

    def relu(v):
        return jnp.maximum(v, 0.0)

    def up(v):
        return jnp.repeat(jnp.repeat(v, 2, axis=2), 2, axis=3)

    f1 = relu(conv(x, "enc1"))
    f2 = relu(conv(f1, "enc2", stride=2))
    f3 = relu(conv(f2, "enc3", stride=2))

    e3 = relu(conv(f3, "edge3"))
    e2 = relu(conv(jnp.concatenate([up(e3), f2], axis=1), "edge2"))
    e1 = relu(conv(jnp.concatenate([up(e2), f1], axis=1), "edge1"))
    edge = jax.nn.sigmoid(conv(e1, "edge_head", pad=0))

    c3 = relu(conv(e3, "cor3"))
    c2 = relu(conv(jnp.concatenate([up(c3), e2], axis=1), "cor2"))
    c1 = relu(conv(jnp.concatenate([up(c2), e1], axis=1), "cor1"))
    corner = jax.nn.sigmoid(conv(c1, "cor_head", pad=0))
    return edge, corner


if __name__ == "__main__":
    key = jax.random.PRNGKey(0)
    pkey, xkey = jax.random.split(key)

    params = init_params(pkey)
    x = jax.random.normal(xkey, (2, 4, 16, 16), jnp.float32)   # NCHW

    B_TILE = 2   # batch elements stacked on the lane axis per grid step
    operands = build_kernel_operands(params, 16, 16, B_TILE)

    edge_out, corner_out = model_forward(operands, x)
    jax.block_until_ready((edge_out, corner_out))

    assert edge_out.shape == (2, 1, 16, 16)
    assert corner_out.shape == (2, 1, 16, 16)
    assert bool(jnp.all(jnp.isfinite(edge_out)))
    assert bool(jnp.all(jnp.isfinite(corner_out)))

    # Validate the fused Pallas kernel against a pure-JAX reference (f32 HIGHEST).
    edge_ref, corner_ref = jax.jit(reference_forward)(params, x)
    assert bool(jnp.allclose(edge_out, edge_ref, atol=5e-3, rtol=2e-2)), \
        float(jnp.max(jnp.abs(edge_out - edge_ref)))
    assert bool(jnp.allclose(corner_out, corner_ref, atol=5e-3, rtol=2e-2)), \
        float(jnp.max(jnp.abs(corner_out - corner_ref)))

    print("KERNEL_OK")
</pallas_src>

<mosaic_0001>
module attributes {stable_mosaic.version = 11 : i64} {
  func.func @_fused_forward_kernel(%arg0: i32, %arg1: memref<8x512xbf16, #tpu.memory_space<vmem>>, %arg2: memref<9x512xf32, #tpu.memory_space<vmem>>, %arg3: memref<9x128xf32, #tpu.memory_space<vmem>>, %arg4: memref<9x32x32xbf16, #tpu.memory_space<vmem>>, %arg5: memref<512x128xbf16, #tpu.memory_space<vmem>>, %arg6: memref<128x32xbf16, #tpu.memory_space<vmem>>, %arg7: memref<32x128xbf16, #tpu.memory_space<vmem>>, %arg8: memref<128x512xbf16, #tpu.memory_space<vmem>>, %arg9: memref<240x288xbf16, #tpu.memory_space<vmem>>, %arg10: memref<240x1xf32, #tpu.memory_space<vmem>>, %arg11: memref<2x512xf32, #tpu.memory_space<vmem>>) attributes {dimension_semantics = [#tpu.dimension_semantics<parallel>], iteration_bounds = array<i64: 1>, scalar_prefetch = 0 : i64, scratch_operands = 0 : i64, tpu.core_type = #tpu.core_type<tc>, window_params = [{transform_indices = @transform_0, window_bounds = array<i64: 8, 512>}, {pipeline_mode = #tpu.pipeline_mode<synchronous>, transform_indices = @transform_1, window_bounds = array<i64: 9, 512>}, {pipeline_mode = #tpu.pipeline_mode<synchronous>, transform_indices = @transform_2, window_bounds = array<i64: 9, 128>}, {pipeline_mode = #tpu.pipeline_mode<synchronous>, transform_indices = @transform_3, window_bounds = array<i64: 9, 32, 32>}, {pipeline_mode = #tpu.pipeline_mode<synchronous>, transform_indices = @transform_4, window_bounds = array<i64: 512, 128>}, {pipeline_mode = #tpu.pipeline_mode<synchronous>, transform_indices = @transform_5, window_bounds = array<i64: 128, 32>}, {pipeline_mode = #tpu.pipeline_mode<synchronous>, transform_indices = @transform_6, window_bounds = array<i64: 32, 128>}, {pipeline_mode = #tpu.pipeline_mode<synchronous>, transform_indices = @transform_7, window_bounds = array<i64: 128, 512>}, {pipeline_mode = #tpu.pipeline_mode<synchronous>, transform_indices = @transform_8, window_bounds = array<i64: 240, 288>}, {pipeline_mode = #tpu.pipeline_mode<synchronous>, transform_indices = @transform_9, window_bounds = array<i64: 240, 1>}, {transform_indices = @transform_10, window_bounds = array<i64: 2, 512>}]} {
    %c0 = arith.constant 0 : index
    %c0_0 = arith.constant 0 : index
    %0 = vector.load %arg2[%c0, %c0_0] : memref<9x512xf32, #tpu.memory_space<vmem>>, vector<9x512xf32>
    %c0_1 = arith.constant 0 : index
    %c0_2 = arith.constant 0 : index
    %1 = vector.load %arg3[%c0_1, %c0_2] : memref<9x128xf32, #tpu.memory_space<vmem>>, vector<9x128xf32>
    %c0_3 = arith.constant 0 : index
    %c0_4 = arith.constant 0 : index
    %2 = vector.load %arg1[%c0_3, %c0_4] : memref<8x512xbf16, #tpu.memory_space<vmem>>, vector<8x512xbf16>
    %3 = arith.extf %2 : vector<8x512xbf16> to vector<8x512xf32>
    %c17_i32 = arith.constant 17 : i32
    %4 = tpu.dynamic_rotate %3 by %c17_i32 dim 1 : vector<8x512xf32>, i32 -> vector<8x512xf32>
    %5 = vector.extract_strided_slice %0 {offsets = [0, 0], sizes = [1, 512], strides = [1, 1]} : vector<9x512xf32> to vector<1x512xf32>
    %6 = vector.broadcast %5 : vector<1x512xf32> to vector<8x512xf32>
    %7 = arith.mulf %4, %6 : vector<8x512xf32>
    %c16_i32 = arith.constant 16 : i32
    %8 = tpu.dynamic_rotate %3 by %c16_i32 dim 1 : vector<8x512xf32>, i32 -> vector<8x512xf32>
    %9 = vector.extract_strided_slice %0 {offsets = [1, 0], sizes = [1, 512], strides = [1, 1]} : vector<9x512xf32> to vector<1x512xf32>
    %10 = vector.broadcast %9 : vector<1x512xf32> to vector<8x512xf32>
    %11 = arith.mulf %8, %10 : vector<8x512xf32>
    %c15_i32 = arith.constant 15 : i32
    %12 = tpu.dynamic_rotate %3 by %c15_i32 dim 1 : vector<8x512xf32>, i32 -> vector<8x512xf32>
    %13 = vector.extract_strided_slice %0 {offsets = [2, 0], sizes = [1, 512], strides = [1, 1]} : vector<9x512xf32> to vector<1x512xf32>
    %14 = vector.broadcast %13 : vector<1x512xf32> to vector<8x512xf32>
    %15 = arith.mulf %12, %14 : vector<8x512xf32>
    %c1_i32 = arith.constant 1 : i32
    %16 = tpu.dynamic_rotate %3 by %c1_i32 dim 1 : vector<8x512xf32>, i32 -> vector<8x512xf32>
    %17 = vector.extract_strided_slice %0 {offsets = [3, 0], sizes = [1, 512], strides = [1, 1]} : vector<9x512xf32> to vector<1x512xf32>
    %18 = vector.broadcast %17 : vector<1x512xf32> to vector<8x512xf32>
    %19 = arith.mulf %16, %18 : vector<8x512xf32>
    %c511_i32 = arith.constant 511 : i32
    %20 = tpu.dynamic_rotate %3 by %c511_i32 dim 1 : vector<8x512xf32>, i32 -> vector<8x512xf32>
    %21 = vector.extract_strided_slice %0 {offsets = [5, 0], sizes = [1, 512], strides = [1, 1]} : vector<9x512xf32> to vector<1x512xf32>
    %22 = vector.broadcast %21 : vector<1x512xf32> to vector<8x512xf32>
    %23 = arith.mulf %20, %22 : vector<8x512xf32>
    %c497_i32 = arith.constant 497 : i32
    %24 = tpu.dynamic_rotate %3 by %c497_i32 dim 1 : vector<8x512xf32>, i32 -> vector<8x512xf32>
    %25 = vector.extract_strided_slice %0 {offsets = [6, 0], sizes = [1, 512], strides = [1, 1]} : vector<9x512xf32> to vector<1x512xf32>
    %26 = vector.broadcast %25 : vector<1x512xf32> to vector<8x512xf32>
    %27 = arith.mulf %24, %26 : vector<8x512xf32>
    %c496_i32 = arith.constant 496 : i32
    %28 = tpu.dynamic_rotate %3 by %c496_i32 dim 1 : vector<8x512xf32>, i32 -> vector<8x512xf32>
    %29 = vector.extract_strided_slice %0 {offsets = [7, 0], sizes = [1, 512], strides = [1, 1]} : vector<9x512xf32> to vector<1x512xf32>
    %30 = vector.broadcast %29 : vector<1x512xf32> to vector<8x512xf32>
    %31 = arith.mulf %28, %30 : vector<8x512xf32>
    %c495_i32 = arith.constant 495 : i32
    %32 = tpu.dynamic_rotate %3 by %c495_i32 dim 1 : vector<8x512xf32>, i32 -> vector<8x512xf32>
    %33 = vector.extract_strided_slice %0 {offsets = [8, 0], sizes = [1, 512], strides = [1, 1]} : vector<9x512xf32> to vector<1x512xf32>
    %34 = vector.broadcast %33 : vector<1x512xf32> to vector<8x512xf32>
    %35 = arith.mulf %32, %34 : vector<8x512xf32>
    %36 = tpu.concatenate %7, %11, %15, %19, %3, %23, %27, %31, %35 in 0 : vector<8x512xf32>, vector<8x512xf32>, vector<8x512xf32>, vector<8x512xf32>, vector<8x512xf32>, vector<8x512xf32>, vector<8x512xf32>, vector<8x512xf32>, vector<8x512xf32> -> vector<72x512xf32>
    %37 = arith.truncf %36 : vector<72x512xf32> to vector<72x512xbf16>
    %c0_5 = arith.constant 0 : index
    %c0_6 = arith.constant 0 : index
    %38 = vector.load %arg9[%c0_5, %c0_6] : memref<240x288xbf16, #tpu.memory_space<vmem>>, vector<8x72xbf16>
    %cst = arith.constant dense<0.000000e+00> : vector<8x512xf32>
    %39 = tpu.matmul %38, %37, %cst {dimension_numbers = #tpu.dot_dimension_numbers<[1], [0], [0], [1], [0, 0, 1, 1], [], []>} : vector<8x72xbf16>, vector<72x512xbf16>, vector<8x512xf32> -> vector<8x512xf32>
    %c0_7 = arith.constant 0 : index
    %c0_8 = arith.constant 0 : index
    %40 = vector.load %arg10[%c0_7, %c0_8] : memref<240x1xf32, #tpu.memory_space<vmem>>, vector<8x1xf32>
    %41 = vector.broadcast %40 : vector<8x1xf32> to vector<8x512xf32>
    %42 = arith.addf %39, %41 : vector<8x512xf32>
    %cst_9 = arith.constant 0.000000e+00 : f32
    %43 = vector.broadcast %cst_9 : f32 to vector<8x512xf32>
    %44 = arith.maximumf %42, %43 : vector<8x512xf32>
    %c17_i32_10 = arith.constant 17 : i32
    %45 = tpu.dynamic_rotate %44 by %c17_i32_10 dim 1 : vector<8x512xf32>, i32 -> vector<8x512xf32>
    %46 = vector.extract_strided_slice %0 {offsets = [0, 0], sizes = [1, 512], strides = [1, 1]} : vector<9x512xf32> to vector<1x512xf32>
    %47 = vector.broadcast %46 : vector<1x512xf32> to vector<8x512xf32>
    %48 = arith.mulf %45, %47 : vector<8x512xf32>
    %c16_i32_11 = arith.constant 16 : i32
    %49 = tpu.dynamic_rotate %44 by %c16_i32_11 dim 1 : vector<8x512xf32>, i32 -> vector<8x512xf32>
    %50 = vector.extract_strided_slice %0 {offsets = [1, 0], sizes = [1, 512], strides = [1, 1]} : vector<9x512xf32> to vector<1x512xf32>
    %51 = vector.broadcast %50 : vector<1x512xf32> to vector<8x512xf32>
    %52 = arith.mulf %49, %51 : vector<8x512xf32>
    %c15_i32_12 = arith.constant 15 : i32
    %53 = tpu.dynamic_rotate %44 by %c15_i32_12 dim 1 : vector<8x512xf32>, i32 -> vector<8x512xf32>
    %54 = vector.extract_strided_slice %0 {offsets = [2, 0], sizes = [1, 512], strides = [1, 1]} : vector<9x512xf32> to vector<1x512xf32>
    %55 = vector.broadcast %54 : vector<1x512xf32> to vector<8x512xf32>
    %56 = arith.mulf %53, %55 : vector<8x512xf32>
    %c1_i32_13 = arith.constant 1 : i32
    %57 = tpu.dynamic_rotate %44 by %c1_i32_13 dim 1 : vector<8x512xf32>, i32 -> vector<8x512xf32>
    %58 = vector.extract_strided_slice %0 {offsets = [3, 0], sizes = [1, 512], strides = [1, 1]} : vector<9x512xf32> to vector<1x512xf32>
    %59 = vector.broadcast %58 : vector<1x512xf32> to vector<8x512xf32>
    %60 = arith.mulf %57, %59 : vector<8x512xf32>
    %c511_i32_14 = arith.constant 511 : i32
    %61 = tpu.dynamic_rotate %44 by %c511_i32_14 dim 1 : vector<8x512xf32>, i32 -> vector<8x512xf32>
    %62 = vector.extract_strided_slice %0 {offsets = [5, 0], sizes = [1, 512], strides = [1, 1]} : vector<9x512xf32> to vector<1x512xf32>
    %63 = vector.broadcast %62 : vector<1x512xf32> to vector<8x512xf32>
    %64 = arith.mulf %61, %63 : vector<8x512xf32>
    %c497_i32_15 = arith.constant 497 : i32
    %65 = tpu.dynamic_rotate %44 by %c497_i32_15 dim 1 : vector<8x512xf32>, i32 -> vector<8x512xf32>
    %66 = vector.extract_strided_slice %0 {offsets = [6, 0], sizes = [1, 512], strides = [1, 1]} : vector<9x512xf32> to vector<1x512xf32>
    %67 = vector.broadcast %66 : vector<1x512xf32> to vector<8x512xf32>
    %68 = arith.mulf %65, %67 : vector<8x512xf32>
    %c496_i32_16 = arith.constant 496 : i32
    %69 = tpu.dynamic_rotate %44 by %c496_i32_16 dim 1 : vector<8x512xf32>, i32 -> vector<8x512xf32>
    %70 = vector.extract_strided_slice %0 {offsets = [7, 0], sizes = [1, 512], strides = [1, 1]} : vector<9x512xf32> to vector<1x512xf32>
    %71 = vector.broadcast %70 : vector<1x512xf32> to vector<8x512xf32>
    %72 = arith.mulf %69, %71 : vector<8x512xf32>
    %c495_i32_17 = arith.constant 495 : i32
    %73 = tpu.dynamic_rotate %44 by %c495_i32_17 dim 1 : vector<8x512xf32>, i32 -> vector<8x512xf32>
    %74 = vector.extract_strided_slice %0 {offsets = [8, 0], sizes = [1, 512], strides = [1, 1]} : vector<9x512xf32> to vector<1x512xf32>
    %75 = vector.broadcast %74 : vector<1x512xf32> to vector<8x512xf32>
    %76 = arith.mulf %73, %75 : vector<8x512xf32>
    %77 = tpu.concatenate %48, %52, %56, %60, %44, %64, %68, %72, %76 in 0 : vector<8x512xf32>, vector<8x512xf32>, vector<8x512xf32>, vector<8x512xf32>, vector<8x512xf32>, vector<8x512xf32>, vector<8x512xf32>, vector<8x512xf32>, vector<8x512xf32> -> vector<72x512xf32>
    %78 = arith.truncf %77 : vector<72x512xf32> to vector<72x512xbf16>
    %c16 = arith.constant 16 : index
    %c0_18 = arith.constant 0 : index
    %79 = vector.load %arg9[%c16, %c0_18] : memref<240x288xbf16, #tpu.memory_space<vmem>>, vector<16x72xbf16>
    %cst_19 = arith.constant dense<0.000000e+00> : vector<16x512xf32>
    %80 = tpu.matmul %79, %78, %cst_19 {dimension_numbers = #tpu.dot_dimension_numbers<[1], [0], [0], [1], [0, 0, 1, 1], [], []>} : vector<16x72xbf16>, vector<72x512xbf16>, vector<16x512xf32> -> vector<16x512xf32>
    %81 = arith.truncf %80 : vector<16x512xf32> to vector<16x512xbf16>
    %c0_20 = arith.constant 0 : index
    %c0_21 = arith.constant 0 : index
    %82 = vector.load %arg5[%c0_20, %c0_21] : memref<512x128xbf16, #tpu.memory_space<vmem>>, vector<512x128xbf16>
    %cst_22 = arith.constant dense<0.000000e+00> : vector<16x128xf32>
    %83 = tpu.matmul %81, %82, %cst_22 {dimension_numbers = #tpu.dot_dimension_numbers<[1], [0], [0], [1], [0, 0, 1, 1], [], []>} : vector<16x512xbf16>, vector<512x128xbf16>, vector<16x128xf32> -> vector<16x128xf32>
    %c16_23 = arith.constant 16 : index
    %c0_24 = arith.constant 0 : index
    %84 = vector.load %arg10[%c16_23, %c0_24] : memref<240x1xf32, #tpu.memory_space<vmem>>, vector<16x1xf32>
    %85 = vector.broadcast %84 : vector<16x1xf32> to vector<16x128xf32>
    %86 = arith.addf %83, %85 : vector<16x128xf32>
    %cst_25 = arith.constant 0.000000e+00 : f32
    %87 = vector.broadcast %cst_25 : f32 to vector<16x128xf32>
    %88 = arith.maximumf %86, %87 : vector<16x128xf32>
    %c9_i32 = arith.constant 9 : i32
    %89 = tpu.dynamic_rotate %88 by %c9_i32 dim 1 : vector<16x128xf32>, i32 -> vector<16x128xf32>
    %90 = vector.extract_strided_slice %1 {offsets = [0, 0], sizes = [1, 128], strides = [1, 1]} : vector<9x128xf32> to vector<1x128xf32>
    %91 = vector.broadcast %90 : vector<1x128xf32> to vector<16x128xf32>
    %92 = arith.mulf %89, %91 : vector<16x128xf32>
    %c8_i32 = arith.constant 8 : i32
    %93 = tpu.dynamic_rotate %88 by %c8_i32 dim 1 : vector<16x128xf32>, i32 -> vector<16x128xf32>
    %94 = vector.extract_strided_slice %1 {offsets = [1, 0], sizes = [1, 128], strides = [1, 1]} : vector<9x128xf32> to vector<1x128xf32>
    %95 = vector.broadcast %94 : vector<1x128xf32> to vector<16x128xf32>
    %96 = arith.mulf %93, %95 : vector<16x128xf32>
    %c7_i32 = arith.constant 7 : i32
    %97 = tpu.dynamic_rotate %88 by %c7_i32 dim 1 : vector<16x128xf32>, i32 -> vector<16x128xf32>
    %98 = vector.extract_strided_slice %1 {offsets = [2, 0], sizes = [1, 128], strides = [1, 1]} : vector<9x128xf32> to vector<1x128xf32>
    %99 = vector.broadcast %98 : vector<1x128xf32> to vector<16x128xf32>
    %100 = arith.mulf %97, %99 : vector<16x128xf32>
    %c1_i32_26 = arith.constant 1 : i32
    %101 = tpu.dynamic_rotate %88 by %c1_i32_26 dim 1 : vector<16x128xf32>, i32 -> vector<16x128xf32>
    %102 = vector.extract_strided_slice %1 {offsets = [3, 0], sizes = [1, 128], strides = [1, 1]} : vector<9x128xf32> to vector<1x128xf32>
    %103 = vector.broadcast %102 : vector<1x128xf32> to vector<16x128xf32>
    %104 = arith.mulf %101, %103 : vector<16x128xf32>
    %c127_i32 = arith.constant 127 : i32
    %105 = tpu.dynamic_rotate %88 by %c127_i32 dim 1 : vector<16x128xf32>, i32 -> vector<16x128xf32>
    %106 = vector.extract_strided_slice %1 {offsets = [5, 0], sizes = [1, 128], strides = [1, 1]} : vector<9x128xf32> to vector<1x128xf32>
    %107 = vector.broadcast %106 : vector<1x128xf32> to vector<16x128xf32>
    %108 = arith.mulf %105, %107 : vector<16x128xf32>
    %c121_i32 = arith.constant 121 : i32
    %109 = tpu.dynamic_rotate %88 by %c121_i32 dim 1 : vector<16x128xf32>, i32 -> vector<16x128xf32>
    %110 = vector.extract_strided_slice %1 {offsets = [6, 0], sizes = [1, 128], strides = [1, 1]} : vector<9x128xf32> to vector<1x128xf32>
    %111 = vector.broadcast %110 : vector<1x128xf32> to vector<16x128xf32>
    %112 = arith.mulf %109, %111 : vector<16x128xf32>
    %c120_i32 = arith.constant 120 : i32
    %113 = tpu.dynamic_rotate %88 by %c120_i32 dim 1 : vector<16x128xf32>, i32 -> vector<16x128xf32>
    %114 = vector.extract_strided_slice %1 {offsets = [7, 0], sizes = [1, 128], strides = [1, 1]} : vector<9x128xf32> to vector<1x128xf32>
    %115 = vector.broadcast %114 : vector<1x128xf32> to vector<16x128xf32>
    %116 = arith.mulf %113, %115 : vector<16x128xf32>
    %c119_i32 = arith.constant 119 : i32
    %117 = tpu.dynamic_rotate %88 by %c119_i32 dim 1 : vector<16x128xf32>, i32 -> vector<16x128xf32>
    %118 = vector.extract_strided_slice %1 {offsets = [8, 0], sizes = [1, 128], strides = [1, 1]} : vector<9x128xf32> to vector<1x128xf32>
    %119 = vector.broadcast %118 : vector<1x128xf32> to vector<16x128xf32>
    %120 = arith.mulf %117, %119 : vector<16x128xf32>
    %121 = tpu.concatenate %92, %96, %100, %104, %88, %108, %112, %116, %120 in 0 : vector<16x128xf32>, vector<16x128xf32>, vector<16x128xf32>, vector<16x128xf32>, vector<16x128xf32>, vector<16x128xf32>, vector<16x128xf32>, vector<16x128xf32>, vector<16x128xf32> -> vector<144x128xf32>
    %122 = arith.truncf %121 : vector<144x128xf32> to vector<144x128xbf16>
    %c32 = arith.constant 32 : index
    %c0_27 = arith.constant 0 : index
    %123 = vector.load %arg9[%c32, %c0_27] : memref<240x288xbf16, #tpu.memory_space<vmem>>, vector<32x144xbf16>
    %cst_28 = arith.constant dense<0.000000e+00> : vector<32x128xf32>
    %124 = tpu.matmul %123, %122, %cst_28 {dimension_numbers = #tpu.dot_dimension_numbers<[1], [0], [0], [1], [0, 0, 1, 1], [], []>} : vector<32x144xbf16>, vector<144x128xbf16>, vector<32x128xf32> -> vector<32x128xf32>
    %125 = arith.truncf %124 : vector<32x128xf32> to vector<32x128xbf16>
    %c0_29 = arith.constant 0 : index
    %c0_30 = arith.constant 0 : index
    %126 = vector.load %arg6[%c0_29, %c0_30] : memref<128x32xbf16, #tpu.memory_space<vmem>>, vector<128x32xbf16>
    %cst_31 = arith.constant dense<0.000000e+00> : vector<32x32xf32>
    %127 = tpu.matmul %125, %126, %cst_31 {dimension_numbers = #tpu.dot_dimension_numbers<[1], [0], [0], [1], [0, 0, 1, 1], [], []>} : vector<32x128xbf16>, vector<128x32xbf16>, vector<32x32xf32> -> vector<32x32xf32>
    %c32_32 = arith.constant 32 : index
    %c0_33 = arith.constant 0 : index
    %128 = vector.load %arg10[%c32_32, %c0_33] : memref<240x1xf32, #tpu.memory_space<vmem>>, vector<32x1xf32>
    %129 = vector.broadcast %128 : vector<32x1xf32> to vector<32x32xf32>
    %130 = arith.addf %127, %129 : vector<32x32xf32>
    %cst_34 = arith.constant 0.000000e+00 : f32
    %131 = vector.broadcast %cst_34 : f32 to vector<32x32xf32>
    %132 = arith.maximumf %130, %131 : vector<32x32xf32>
    %133 = arith.truncf %132 : vector<32x32xf32> to vector<32x32xbf16>
    %c0_35 = arith.constant 0 : index
    %c0_36 = arith.constant 0 : index
    %c0_37 = arith.constant 0 : index
    %134 = vector.load %arg4[%c0_35, %c0_36, %c0_37] : memref<9x32x32xbf16, #tpu.memory_space<vmem>>, vector<1x32x32xbf16>
    %135 = vector.shape_cast %134 : vector<1x32x32xbf16> to vector<32x32xbf16>
    %cst_38 = arith.constant dense<0.000000e+00> : vector<32x32xf32>
    %136 = tpu.matmul %133, %135, %cst_38 {dimension_numbers = #tpu.dot_dimension_numbers<[1], [0], [0], [1], [0, 0, 1, 1], [], []>} : vector<32x32xbf16>, vector<32x32xbf16>, vector<32x32xf32> -> vector<32x32xf32>
    %c1 = arith.constant 1 : index
    %c0_39 = arith.constant 0 : index
    %c0_40 = arith.constant 0 : index
    %137 = vector.load %arg4[%c1, %c0_39, %c0_40] : memref<9x32x32xbf16, #tpu.memory_space<vmem>>, vector<1x32x32xbf16>
    %138 = vector.shape_cast %137 : vector<1x32x32xbf16> to vector<32x32xbf16>
    %cst_41 = arith.constant dense<0.000000e+00> : vector<32x32xf32>
    %139 = tpu.matmul %133, %138, %cst_41 {dimension_numbers = #tpu.dot_dimension_numbers<[1], [0], [0], [1], [0, 0, 1, 1], [], []>} : vector<32x32xbf16>, vector<32x32xbf16>, vector<32x32xf32> -> vector<32x32xf32>
    %c2 = arith.constant 2 : index
    %c0_42 = arith.constant 0 : index
    %c0_43 = arith.constant 0 : index
    %140 = vector.load %arg4[%c2, %c0_42, %c0_43] : memref<9x32x32xbf16, #tpu.memory_space<vmem>>, vector<1x32x32xbf16>
    %141 = vector.shape_cast %140 : vector<1x32x32xbf16> to vector<32x32xbf16>
    %cst_44 = arith.constant dense<0.000000e+00> : vector<32x32xf32>
    %142 = tpu.matmul %133, %141, %cst_44 {dimension_numbers = #tpu.dot_dimension_numbers<[1], [0], [0], [1], [0, 0, 1, 1], [], []>} : vector<32x32xbf16>, vector<32x32xbf16>, vector<32x32xf32> -> vector<32x32xf32>
    %c3 = arith.constant 3 : index
    %c0_45 = arith.constant 0 : index
    %c0_46 = arith.constant 0 : index
    %143 = vector.load %arg4[%c3, %c0_45, %c0_46] : memref<9x32x32xbf16, #tpu.memory_space<vmem>>, vector<1x32x32xbf16>
    %144 = vector.shape_cast %143 : vector<1x32x32xbf16> to vector<32x32xbf16>
    %cst_47 = arith.constant dense<0.000000e+00> : vector<32x32xf32>
    %145 = tpu.matmul %133, %144, %cst_47 {dimension_numbers = #tpu.dot_dimension_numbers<[1], [0], [0], [1], [0, 0, 1, 1], [], []>} : vector<32x32xbf16>, vector<32x32xbf16>, vector<32x32xf32> -> vector<32x32xf32>
    %c4 = arith.constant 4 : index
    %c0_48 = arith.constant 0 : index
    %c0_49 = arith.constant 0 : index
    %146 = vector.load %arg4[%c4, %c0_48, %c0_49] : memref<9x32x32xbf16, #tpu.memory_space<vmem>>, vector<1x32x32xbf16>
    %147 = vector.shape_cast %146 : vector<1x32x32xbf16> to vector<32x32xbf16>
    %cst_50 = arith.constant dense<0.000000e+00> : vector<32x32xf32>
    %148 = tpu.matmul %133, %147, %cst_50 {dimension_numbers = #tpu.dot_dimension_numbers<[1], [0], [0], [1], [0, 0, 1, 1], [], []>} : vector<32x32xbf16>, vector<32x32xbf16>, vector<32x32xf32> -> vector<32x32xf32>
    %c5 = arith.constant 5 : index
    %c0_51 = arith.constant 0 : index
    %c0_52 = arith.constant 0 : index
    %149 = vector.load %arg4[%c5, %c0_51, %c0_52] : memref<9x32x32xbf16, #tpu.memory_space<vmem>>, vector<1x32x32xbf16>
    %150 = vector.shape_cast %149 : vector<1x32x32xbf16> to vector<32x32xbf16>
    %cst_53 = arith.constant dense<0.000000e+00> : vector<32x32xf32>
    %151 = tpu.matmul %133, %150, %cst_53 {dimension_numbers = #tpu.dot_dimension_numbers<[1], [0], [0], [1], [0, 0, 1, 1], [], []>} : vector<32x32xbf16>, vector<32x32xbf16>, vector<32x32xf32> -> vector<32x32xf32>
    %c6 = arith.constant 6 : index
    %c0_54 = arith.constant 0 : index
    %c0_55 = arith.constant 0 : index
    %152 = vector.load %arg4[%c6, %c0_54, %c0_55] : memref<9x32x32xbf16, #tpu.memory_space<vmem>>, vector<1x32x32xbf16>
    %153 = vector.shape_cast %152 : vector<1x32x32xbf16> to vector<32x32xbf16>
    %cst_56 = arith.constant dense<0.000000e+00> : vector<32x32xf32>
    %154 = tpu.matmul %133, %153, %cst_56 {dimension_numbers = #tpu.dot_dimension_numbers<[1], [0], [0], [1], [0, 0, 1, 1], [], []>} : vector<32x32xbf16>, vector<32x32xbf16>, vector<32x32xf32> -> vector<32x32xf32>
    %c7 = arith.constant 7 : index
    %c0_57 = arith.constant 0 : index
    %c0_58 = arith.constant 0 : index
    %155 = vector.load %arg4[%c7, %c0_57, %c0_58] : memref<9x32x32xbf16, #tpu.memory_space<vmem>>, vector<1x32x32xbf16>
    %156 = vector.shape_cast %155 : vector<1x32x32xbf16> to vector<32x32xbf16>
    %cst_59 = arith.constant dense<0.000000e+00> : vector<32x32xf32>
    %157 = tpu.matmul %133, %156, %cst_59 {dimension_numbers = #tpu.dot_dimension_numbers<[1], [0], [0], [1], [0, 0, 1, 1], [], []>} : vector<32x32xbf16>, vector<32x32xbf16>, vector<32x32xf32> -> vector<32x32xf32>
    %c8 = arith.constant 8 : index
    %c0_60 = arith.constant 0 : index
    %c0_61 = arith.constant 0 : index
    %158 = vector.load %arg4[%c8, %c0_60, %c0_61] : memref<9x32x32xbf16, #tpu.memory_space<vmem>>, vector<1x32x32xbf16>
    %159 = vector.shape_cast %158 : vector<1x32x32xbf16> to vector<32x32xbf16>
    %cst_62 = arith.constant dense<0.000000e+00> : vector<32x32xf32>
    %160 = tpu.matmul %133, %159, %cst_62 {dimension_numbers = #tpu.dot_dimension_numbers<[1], [0], [0], [1], [0, 0, 1, 1], [], []>} : vector<32x32xbf16>, vector<32x32xbf16>, vector<32x32xf32> -> vector<32x32xf32>
    %161 = tpu.concatenate %136, %139, %142, %145, %148, %151, %154, %157, %160 in 0 : vector<32x32xf32>, vector<32x32xf32>, vector<32x32xf32>, vector<32x32xf32>, vector<32x32xf32>, vector<32x32xf32>, vector<32x32xf32>, vector<32x32xf32>, vector<32x32xf32> -> vector<288x32xf32>
    %162 = arith.truncf %161 : vector<288x32xf32> to vector<288x32xbf16>
    %c64 = arith.constant 64 : index
    %c0_63 = arith.constant 0 : index
    %163 = vector.load %arg9[%c64, %c0_63] : memref<240x288xbf16, #tpu.memory_space<vmem>>, vector<16x288xbf16>
    %cst_64 = arith.constant dense<0.000000e+00> : vector<16x32xf32>
    %164 = tpu.matmul %163, %162, %cst_64 {dimension_numbers = #tpu.dot_dimension_numbers<[1], [0], [0], [1], [0, 0, 1, 1], [], []>} : vector<16x288xbf16>, vector<288x32xbf16>, vector<16x32xf32> -> vector<16x32xf32>
    %c64_65 = arith.constant 64 : index
    %c0_66 = arith.constant 0 : index
    %165 = vector.load %arg10[%c64_65, %c0_66] : memref<240x1xf32, #tpu.memory_space<vmem>>, vector<16x1xf32>
    %166 = vector.broadcast %165 : vector<16x1xf32> to vector<16x32xf32>
    %167 = arith.addf %164, %166 : vector<16x32xf32>
    %cst_67 = arith.constant 0.000000e+00 : f32
    %168 = vector.broadcast %cst_67 : f32 to vector<16x32xf32>
    %169 = arith.maximumf %167, %168 : vector<16x32xf32>
    %170 = arith.truncf %169 : vector<16x32xf32> to vector<16x32xbf16>
    %c0_68 = arith.constant 0 : index
    %c0_69 = arith.constant 0 : index
    %171 = vector.load %arg7[%c0_68, %c0_69] : memref<32x128xbf16, #tpu.memory_space<vmem>>, vector<32x128xbf16>
    %cst_70 = arith.constant dense<0.000000e+00> : vector<16x128xf32>
    %172 = tpu.matmul %170, %171, %cst_70 {dimension_numbers = #tpu.dot_dimension_numbers<[1], [0], [0], [1], [0, 0, 1, 1], [], []>} : vector<16x32xbf16>, vector<32x128xbf16>, vector<16x128xf32> -> vector<16x128xf32>
    %c9_i32_71 = arith.constant 9 : i32
    %173 = tpu.dynamic_rotate %172 by %c9_i32_71 dim 1 : vector<16x128xf32>, i32 -> vector<16x128xf32>
    %174 = vector.extract_strided_slice %1 {offsets = [0, 0], sizes = [1, 128], strides = [1, 1]} : vector<9x128xf32> to vector<1x128xf32>
    %175 = vector.broadcast %174 : vector<1x128xf32> to vector<16x128xf32>
    %176 = arith.mulf %173, %175 : vector<16x128xf32>
    %c8_i32_72 = arith.constant 8 : i32
    %177 = tpu.dynamic_rotate %172 by %c8_i32_72 dim 1 : vector<16x128xf32>, i32 -> vector<16x128xf32>
    %178 = vector.extract_strided_slice %1 {offsets = [1, 0], sizes = [1, 128], strides = [1, 1]} : vector<9x128xf32> to vector<1x128xf32>
    %179 = vector.broadcast %178 : vector<1x128xf32> to vector<16x128xf32>
    %180 = arith.mulf %177, %179 : vector<16x128xf32>
    %c7_i32_73 = arith.constant 7 : i32
    %181 = tpu.dynamic_rotate %172 by %c7_i32_73 dim 1 : vector<16x128xf32>, i32 -> vector<16x128xf32>
    %182 = vector.extract_strided_slice %1 {offsets = [2, 0], sizes = [1, 128], strides = [1, 1]} : vector<9x128xf32> to vector<1x128xf32>
    %183 = vector.broadcast %182 : vector<1x128xf32> to vector<16x128xf32>
    %184 = arith.mulf %181, %183 : vector<16x128xf32>
    %c1_i32_74 = arith.constant 1 : i32
    %185 = tpu.dynamic_rotate %172 by %c1_i32_74 dim 1 : vector<16x128xf32>, i32 -> vector<16x128xf32>
    %186 = vector.extract_strided_slice %1 {offsets = [3, 0], sizes = [1, 128], strides = [1, 1]} : vector<9x128xf32> to vector<1x128xf32>
    %187 = vector.broadcast %186 : vector<1x128xf32> to vector<16x128xf32>
    %188 = arith.mulf %185, %187 : vector<16x128xf32>
    %c127_i32_75 = arith.constant 127 : i32
    %189 = tpu.dynamic_rotate %172 by %c127_i32_75 dim 1 : vector<16x128xf32>, i32 -> vector<16x128xf32>
    %190 = vector.extract_strided_slice %1 {offsets = [5, 0], sizes = [1, 128], strides = [1, 1]} : vector<9x128xf32> to vector<1x128xf32>
    %191 = vector.broadcast %190 : vector<1x128xf32> to vector<16x128xf32>
    %192 = arith.mulf %189, %191 : vector<16x128xf32>
    %c121_i32_76 = arith.constant 121 : i32
    %193 = tpu.dynamic_rotate %172 by %c121_i32_76 dim 1 : vector<16x128xf32>, i32 -> vector<16x128xf32>
    %194 = vector.extract_strided_slice %1 {offsets = [6, 0], sizes = [1, 128], strides = [1, 1]} : vector<9x128xf32> to vector<1x128xf32>
    %195 = vector.broadcast %194 : vector<1x128xf32> to vector<16x128xf32>
    %196 = arith.mulf %193, %195 : vector<16x128xf32>
    %c120_i32_77 = arith.constant 120 : i32
    %197 = tpu.dynamic_rotate %172 by %c120_i32_77 dim 1 : vector<16x128xf32>, i32 -> vector<16x128xf32>
    %198 = vector.extract_strided_slice %1 {offsets = [7, 0], sizes = [1, 128], strides = [1, 1]} : vector<9x128xf32> to vector<1x128xf32>
    %199 = vector.broadcast %198 : vector<1x128xf32> to vector<16x128xf32>
    %200 = arith.mulf %197, %199 : vector<16x128xf32>
    %c119_i32_78 = arith.constant 119 : i32
    %201 = tpu.dynamic_rotate %172 by %c119_i32_78 dim 1 : vector<16x128xf32>, i32 -> vector<16x128xf32>
    %202 = vector.extract_strided_slice %1 {offsets = [8, 0], sizes = [1, 128], strides = [1, 1]} : vector<9x128xf32> to vector<1x128xf32>
    %203 = vector.broadcast %202 : vector<1x128xf32> to vector<16x128xf32>
    %204 = arith.mulf %201, %203 : vector<16x128xf32>
    %205 = tpu.concatenate %176, %180, %184, %188, %172, %192, %196, %200, %204 in 0 : vector<16x128xf32>, vector<16x128xf32>, vector<16x128xf32>, vector<16x128xf32>, vector<16x128xf32>, vector<16x128xf32>, vector<16x128xf32>, vector<16x128xf32>, vector<16x128xf32> -> vector<144x128xf32>
    %206 = arith.truncf %205 : vector<144x128xf32> to vector<144x128xbf16>
    %c80 = arith.constant 80 : index
    %c0_79 = arith.constant 0 : index
    %207 = vector.load %arg9[%c80, %c0_79] : memref<240x288xbf16, #tpu.memory_space<vmem>>, vector<16x144xbf16>
    %cst_80 = arith.constant dense<0.000000e+00> : vector<16x128xf32>
    %208 = tpu.matmul %207, %206, %cst_80 {dimension_numbers = #tpu.dot_dimension_numbers<[1], [0], [0], [1], [0, 0, 1, 1], [], []>} : vector<16x144xbf16>, vector<144x128xbf16>, vector<16x128xf32> -> vector<16x128xf32>
    %c96 = arith.constant 96 : index
    %c0_81 = arith.constant 0 : index
    %209 = vector.load %arg9[%c96, %c0_81] : memref<240x288xbf16, #tpu.memory_space<vmem>>, vector<16x144xbf16>
    %cst_82 = arith.constant dense<0.000000e+00> : vector<16x128xf32>
    %210 = tpu.matmul %209, %122, %cst_82 {dimension_numbers = #tpu.dot_dimension_numbers<[1], [0], [0], [1], [0, 0, 1, 1], [], []>} : vector<16x144xbf16>, vector<144x128xbf16>, vector<16x128xf32> -> vector<16x128xf32>
    %211 = arith.addf %208, %210 : vector<16x128xf32>
    %c80_83 = arith.constant 80 : index
    %c0_84 = arith.constant 0 : index
    %212 = vector.load %arg10[%c80_83, %c0_84] : memref<240x1xf32, #tpu.memory_space<vmem>>, vector<16x1xf32>
    %213 = vector.broadcast %212 : vector<16x1xf32> to vector<16x128xf32>
    %214 = arith.addf %211, %213 : vector<16x128xf32>
    %cst_85 = arith.constant 0.000000e+00 : f32
    %215 = vector.broadcast %cst_85 : f32 to vector<16x128xf32>
    %216 = arith.maximumf %214, %215 : vector<16x128xf32>
    %217 = arith.truncf %216 : vector<16x128xf32> to vector<16x128xbf16>
    %c0_86 = arith.constant 0 : index
    %c0_87 = arith.constant 0 : index
    %218 = vector.load %arg8[%c0_86, %c0_87] : memref<128x512xbf16, #tpu.memory_space<vmem>>, vector<128x512xbf16>
    %cst_88 = arith.constant dense<0.000000e+00> : vector<16x512xf32>
    %219 = tpu.matmul %217, %218, %cst_88 {dimension_numbers = #tpu.dot_dimension_numbers<[1], [0], [0], [1], [0, 0, 1, 1], [], []>} : vector<16x128xbf16>, vector<128x512xbf16>, vector<16x512xf32> -> vector<16x512xf32>
    %c17_i32_89 = arith.constant 17 : i32
    %220 = tpu.dynamic_rotate %219 by %c17_i32_89 dim 1 : vector<16x512xf32>, i32 -> vector<16x512xf32>
    %221 = vector.extract_strided_slice %0 {offsets = [0, 0], sizes = [1, 512], strides = [1, 1]} : vector<9x512xf32> to vector<1x512xf32>
    %222 = vector.broadcast %221 : vector<1x512xf32> to vector<16x512xf32>
    %223 = arith.mulf %220, %222 : vector<16x512xf32>
    %c16_i32_90 = arith.constant 16 : i32
    %224 = tpu.dynamic_rotate %219 by %c16_i32_90 dim 1 : vector<16x512xf32>, i32 -> vector<16x512xf32>
    %225 = vector.extract_strided_slice %0 {offsets = [1, 0], sizes = [1, 512], strides = [1, 1]} : vector<9x512xf32> to vector<1x512xf32>
    %226 = vector.broadcast %225 : vector<1x512xf32> to vector<16x512xf32>
    %227 = arith.mulf %224, %226 : vector<16x512xf32>
    %c15_i32_91 = arith.constant 15 : i32
    %228 = tpu.dynamic_rotate %219 by %c15_i32_91 dim 1 : vector<16x512xf32>, i32 -> vector<16x512xf32>
    %229 = vector.extract_strided_slice %0 {offsets = [2, 0], sizes = [1, 512], strides = [1, 1]} : vector<9x512xf32> to vector<1x512xf32>
    %230 = vector.broadcast %229 : vector<1x512xf32> to vector<16x512xf32>
    %231 = arith.mulf %228, %230 : vector<16x512xf32>
    %c1_i32_92 = arith.constant 1 : i32
    %232 = tpu.dynamic_rotate %219 by %c1_i32_92 dim 1 : vector<16x512xf32>, i32 -> vector<16x512xf32>
    %233 = vector.extract_strided_slice %0 {offsets = [3, 0], sizes = [1, 512], strides = [1, 1]} : vector<9x512xf32> to vector<1x512xf32>
    %234 = vector.broadcast %233 : vector<1x512xf32> to vector<16x512xf32>
    %235 = arith.mulf %232, %234 : vector<16x512xf32>
    %c511_i32_93 = arith.constant 511 : i32
    %236 = tpu.dynamic_rotate %219 by %c511_i32_93 dim 1 : vector<16x512xf32>, i32 -> vector<16x512xf32>
    %237 = vector.extract_strided_slice %0 {offsets = [5, 0], sizes = [1, 512], strides = [1, 1]} : vector<9x512xf32> to vector<1x512xf32>
    %238 = vector.broadcast %237 : vector<1x512xf32> to vector<16x512xf32>
    %239 = arith.mulf %236, %238 : vector<16x512xf32>
    %c497_i32_94 = arith.constant 497 : i32
    %240 = tpu.dynamic_rotate %219 by %c497_i32_94 dim 1 : vector<16x512xf32>, i32 -> vector<16x512xf32>
    %241 = vector.extract_strided_slice %0 {offsets = [6, 0], sizes = [1, 512], strides = [1, 1]} : vector<9x512xf32> to vector<1x512xf32>
    %242 = vector.broadcast %241 : vector<1x512xf32> to vector<16x512xf32>
    %243 = arith.mulf %240, %242 : vector<16x512xf32>
    %c496_i32_95 = arith.constant 496 : i32
    %244 = tpu.dynamic_rotate %219 by %c496_i32_95 dim 1 : vector<16x512xf32>, i32 -> vector<16x512xf32>
    %245 = vector.extract_strided_slice %0 {offsets = [7, 0], sizes = [1, 512], strides = [1, 1]} : vector<9x512xf32> to vector<1x512xf32>
    %246 = vector.broadcast %245 : vector<1x512xf32> to vector<16x512xf32>
    %247 = arith.mulf %244, %246 : vector<16x512xf32>
    %c495_i32_96 = arith.constant 495 : i32
    %248 = tpu.dynamic_rotate %219 by %c495_i32_96 dim 1 : vector<16x512xf32>, i32 -> vector<16x512xf32>
    %249 = vector.extract_strided_slice %0 {offsets = [8, 0], sizes = [1, 512], strides = [1, 1]} : vector<9x512xf32> to vector<1x512xf32>
    %250 = vector.broadcast %249 : vector<1x512xf32> to vector<16x512xf32>
    %251 = arith.mulf %248, %250 : vector<16x512xf32>
    %252 = tpu.concatenate %223, %227, %231, %235, %219, %239, %243, %247, %251 in 0 : vector<16x512xf32>, vector<16x512xf32>, vector<16x512xf32>, vector<16x512xf32>, vector<16x512xf32>, vector<16x512xf32>, vector<16x512xf32>, vector<16x512xf32>, vector<16x512xf32> -> vector<144x512xf32>
    %253 = arith.truncf %252 : vector<144x512xf32> to vector<144x512xbf16>
    %c112 = arith.constant 112 : index
    %c0_97 = arith.constant 0 : index
    %254 = vector.load %arg9[%c112, %c0_97] : memref<240x288xbf16, #tpu.memory_space<vmem>>, vector<8x144xbf16>
    %cst_98 = arith.constant dense<0.000000e+00> : vector<8x512xf32>
    %255 = tpu.matmul %254, %253, %cst_98 {dimension_numbers = #tpu.dot_dimension_numbers<[1], [0], [0], [1], [0, 0, 1, 1], [], []>} : vector<8x144xbf16>, vector<144x512xbf16>, vector<8x512xf32> -> vector<8x512xf32>
    %c128 = arith.constant 128 : index
    %c0_99 = arith.constant 0 : index
    %256 = vector.load %arg9[%c128, %c0_99] : memref<240x288xbf16, #tpu.memory_space<vmem>>, vector<8x72xbf16>
    %cst_100 = arith.constant dense<0.000000e+00> : vector<8x512xf32>
    %257 = tpu.matmul %256, %78, %cst_100 {dimension_numbers = #tpu.dot_dimension_numbers<[1], [0], [0], [1], [0, 0, 1, 1], [], []>} : vector<8x72xbf16>, vector<72x512xbf16>, vector<8x512xf32> -> vector<8x512xf32>
    %258 = arith.addf %255, %257 : vector<8x512xf32>
    %c112_101 = arith.constant 112 : index
    %c0_102 = arith.constant 0 : index
    %259 = vector.load %arg10[%c112_101, %c0_102] : memref<240x1xf32, #tpu.memory_space<vmem>>, vector<8x1xf32>
    %260 = vector.broadcast %259 : vector<8x1xf32> to vector<8x512xf32>
    %261 = arith.addf %258, %260 : vector<8x512xf32>
    %cst_103 = arith.constant 0.000000e+00 : f32
    %262 = vector.broadcast %cst_103 : f32 to vector<8x512xf32>
    %263 = arith.maximumf %261, %262 : vector<8x512xf32>
    %c0_104 = arith.constant 0 : index
    %c0_105 = arith.constant 0 : index
    %c0_106 = arith.constant 0 : index
    %264 = vector.load %arg4[%c0_104, %c0_105, %c0_106] : memref<9x32x32xbf16, #tpu.memory_space<vmem>>, vector<1x32x32xbf16>
    %265 = vector.shape_cast %264 : vector<1x32x32xbf16> to vector<32x32xbf16>
    %cst_107 = arith.constant dense<0.000000e+00> : vector<16x32xf32>
    %266 = tpu.matmul %170, %265, %cst_107 {dimension_numbers = #tpu.dot_dimension_numbers<[1], [0], [0], [1], [0, 0, 1, 1], [], []>} : vector<16x32xbf16>, vector<32x32xbf16>, vector<16x32xf32> -> vector<16x32xf32>
    %c1_108 = arith.constant 1 : index
    %c0_109 = arith.constant 0 : index
    %c0_110 = arith.constant 0 : index
    %267 = vector.load %arg4[%c1_108, %c0_109, %c0_110] : memref<9x32x32xbf16, #tpu.memory_space<vmem>>, vector<1x32x32xbf16>
    %268 = vector.shape_cast %267 : vector<1x32x32xbf16> to vector<32x32xbf16>
    %cst_111 = arith.constant dense<0.000000e+00> : vector<16x32xf32>
    %269 = tpu.matmul %170, %268, %cst_111 {dimension_numbers = #tpu.dot_dimension_numbers<[1], [0], [0], [1], [0, 0, 1, 1], [], []>} : vector<16x32xbf16>, vector<32x32xbf16>, vector<16x32xf32> -> vector<16x32xf32>
    %c2_112 = arith.constant 2 : index
    %c0_113 = arith.constant 0 : index
    %c0_114 = arith.constant 0 : index
    %270 = vector.load %arg4[%c2_112, %c0_113, %c0_114] : memref<9x32x32xbf16, #tpu.memory_space<vmem>>, vector<1x32x32xbf16>
    %271 = vector.shape_cast %270 : vector<1x32x32xbf16> to vector<32x32xbf16>
    %cst_115 = arith.constant dense<0.000000e+00> : vector<16x32xf32>
    %272 = tpu.matmul %170, %271, %cst_115 {dimension_numbers = #tpu.dot_dimension_numbers<[1], [0], [0], [1], [0, 0, 1, 1], [], []>} : vector<16x32xbf16>, vector<32x32xbf16>, vector<16x32xf32> -> vector<16x32xf32>
    %c3_116 = arith.constant 3 : index
    %c0_117 = arith.constant 0 : index
    %c0_118 = arith.constant 0 : index
    %273 = vector.load %arg4[%c3_116, %c0_117, %c0_118] : memref<9x32x32xbf16, #tpu.memory_space<vmem>>, vector<1x32x32xbf16>
    %274 = vector.shape_cast %273 : vector<1x32x32xbf16> to vector<32x32xbf16>
    %cst_119 = arith.constant dense<0.000000e+00> : vector<16x32xf32>
    %275 = tpu.matmul %170, %274, %cst_119 {dimension_numbers = #tpu.dot_dimension_numbers<[1], [0], [0], [1], [0, 0, 1, 1], [], []>} : vector<16x32xbf16>, vector<32x32xbf16>, vector<16x32xf32> -> vector<16x32xf32>
    %c4_120 = arith.constant 4 : index
    %c0_121 = arith.constant 0 : index
    %c0_122 = arith.constant 0 : index
    %276 = vector.load %arg4[%c4_120, %c0_121, %c0_122] : memref<9x32x32xbf16, #tpu.memory_space<vmem>>, vector<1x32x32xbf16>
    %277 = vector.shape_cast %276 : vector<1x32x32xbf16> to vector<32x32xbf16>
    %cst_123 = arith.constant dense<0.000000e+00> : vector<16x32xf32>
    %278 = tpu.matmul %170, %277, %cst_123 {dimension_numbers = #tpu.dot_dimension_numbers<[1], [0], [0], [1], [0, 0, 1, 1], [], []>} : vector<16x32xbf16>, vector<32x32xbf16>, vector<16x32xf32> -> vector<16x32xf32>
    %c5_124 = arith.constant 5 : index
    %c0_125 = arith.constant 0 : index
    %c0_126 = arith.constant 0 : index
    %279 = vector.load %arg4[%c5_124, %c0_125, %c0_126] : memref<9x32x32xbf16, #tpu.memory_space<vmem>>, vector<1x32x32xbf16>
    %280 = vector.shape_cast %279 : vector<1x32x32xbf16> to vector<32x32xbf16>
    %cst_127 = arith.constant dense<0.000000e+00> : vector<16x32xf32>
    %281 = tpu.matmul %170, %280, %cst_127 {dimension_numbers = #tpu.dot_dimension_numbers<[1], [0], [0], [1], [0, 0, 1, 1], [], []>} : vector<16x32xbf16>, vector<32x32xbf16>, vector<16x32xf32> -> vector<16x32xf32>
    %c6_128 = arith.constant 6 : index
    %c0_129 = arith.constant 0 : index
    %c0_130 = arith.constant 0 : index
    %282 = vector.load %arg4[%c6_128, %c0_129, %c0_130] : memref<9x32x32xbf16, #tpu.memory_space<vmem>>, vector<1x32x32xbf16>
    %283 = vector.shape_cast %282 : vector<1x32x32xbf16> to vector<32x32xbf16>
    %cst_131 = arith.constant dense<0.000000e+00> : vector<16x32xf32>
    %284 = tpu.matmul %170, %283, %cst_131 {dimension_numbers = #tpu.dot_dimension_numbers<[1], [0], [0], [1], [0, 0, 1, 1], [], []>} : vector<16x32xbf16>, vector<32x32xbf16>, vector<16x32xf32> -> vector<16x32xf32>
    %c7_132 = arith.constant 7 : index
    %c0_133 = arith.constant 0 : index
    %c0_134 = arith.constant 0 : index
    %285 = vector.load %arg4[%c7_132, %c0_133, %c0_134] : memref<9x32x32xbf16, #tpu.memory_space<vmem>>, vector<1x32x32xbf16>
    %286 = vector.shape_cast %285 : vector<1x32x32xbf16> to vector<32x32xbf16>
    %cst_135 = arith.constant dense<0.000000e+00> : vector<16x32xf32>
    %287 = tpu.matmul %170, %286, %cst_135 {dimension_numbers = #tpu.dot_dimension_numbers<[1], [0], [0], [1], [0, 0, 1, 1], [], []>} : vector<16x32xbf16>, vector<32x32xbf16>, vector<16x32xf32> -> vector<16x32xf32>
    %c8_136 = arith.constant 8 : index
    %c0_137 = arith.constant 0 : index
    %c0_138 = arith.constant 0 : index
    %288 = vector.load %arg4[%c8_136, %c0_137, %c0_138] : memref<9x32x32xbf16, #tpu.memory_space<vmem>>, vector<1x32x32xbf16>
    %289 = vector.shape_cast %288 : vector<1x32x32xbf16> to vector<32x32xbf16>
    %cst_139 = arith.constant dense<0.000000e+00> : vector<16x32xf32>
    %290 = tpu.matmul %170, %289, %cst_139 {dimension_numbers = #tpu.dot_dimension_numbers<[1], [0], [0], [1], [0, 0, 1, 1], [], []>} : vector<16x32xbf16>, vector<32x32xbf16>, vector<16x32xf32> -> vector<16x32xf32>
    %291 = tpu.concatenate %266, %269, %272, %275, %278, %281, %284, %287, %290 in 0 : vector<16x32xf32>, vector<16x32xf32>, vector<16x32xf32>, vector<16x32xf32>, vector<16x32xf32>, vector<16x32xf32>, vector<16x32xf32>, vector<16x32xf32>, vector<16x32xf32> -> vector<144x32xf32>
    %292 = arith.truncf %291 : vector<144x32xf32> to vector<144x32xbf16>
    %c144 = arith.constant 144 : index
    %c0_140 = arith.constant 0 : index
    %293 = vector.load %arg9[%c144, %c0_140] : memref<240x288xbf16, #tpu.memory_space<vmem>>, vector<16x144xbf16>
    %cst_141 = arith.constant dense<0.000000e+00> : vector<16x32xf32>
    %294 = tpu.matmul %293, %292, %cst_141 {dimension_numbers = #tpu.dot_dimension_numbers<[1], [0], [0], [1], [0, 0, 1, 1], [], []>} : vector<16x144xbf16>, vector<144x32xbf16>, vector<16x32xf32> -> vector<16x32xf32>
    %c144_142 = arith.constant 144 : index
    %c0_143 = arith.constant 0 : index
    %295 = vector.load %arg10[%c144_142, %c0_143] : memref<240x1xf32, #tpu.memory_space<vmem>>, vector<16x1xf32>
    %296 = vector.broadcast %295 : vector<16x1xf32> to vector<16x32xf32>
    %297 = arith.addf %294, %296 : vector<16x32xf32>
    %cst_144 = arith.constant 0.000000e+00 : f32
    %298 = vector.broadcast %cst_144 : f32 to vector<16x32xf32>
    %299 = arith.maximumf %297, %298 : vector<16x32xf32>
    %300 = arith.truncf %299 : vector<16x32xf32> to vector<16x32xbf16>
    %c0_145 = arith.constant 0 : index
    %c0_146 = arith.constant 0 : index
    %301 = vector.load %arg7[%c0_145, %c0_146] : memref<32x128xbf16, #tpu.memory_space<vmem>>, vector<32x128xbf16>
    %cst_147 = arith.constant dense<0.000000e+00> : vector<16x128xf32>
    %302 = tpu.matmul %300, %301, %cst_147 {dimension_numbers = #tpu.dot_dimension_numbers<[1], [0], [0], [1], [0, 0, 1, 1], [], []>} : vector<16x32xbf16>, vector<32x128xbf16>, vector<16x128xf32> -> vector<16x128xf32>
    %c9_i32_148 = arith.constant 9 : i32
    %303 = tpu.dynamic_rotate %302 by %c9_i32_148 dim 1 : vector<16x128xf32>, i32 -> vector<16x128xf32>
    %304 = vector.extract_strided_slice %1 {offsets = [0, 0], sizes = [1, 128], strides = [1, 1]} : vector<9x128xf32> to vector<1x128xf32>
    %305 = vector.broadcast %304 : vector<1x128xf32> to vector<16x128xf32>
    %306 = arith.mulf %303, %305 : vector<16x128xf32>
    %c8_i32_149 = arith.constant 8 : i32
    %307 = tpu.dynamic_rotate %302 by %c8_i32_149 dim 1 : vector<16x128xf32>, i32 -> vector<16x128xf32>
    %308 = vector.extract_strided_slice %1 {offsets = [1, 0], sizes = [1, 128], strides = [1, 1]} : vector<9x128xf32> to vector<1x128xf32>
    %309 = vector.broadcast %308 : vector<1x128xf32> to vector<16x128xf32>
    %310 = arith.mulf %307, %309 : vector<16x128xf32>
    %c7_i32_150 = arith.constant 7 : i32
    %311 = tpu.dynamic_rotate %302 by %c7_i32_150 dim 1 : vector<16x128xf32>, i32 -> vector<16x128xf32>
    %312 = vector.extract_strided_slice %1 {offsets = [2, 0], sizes = [1, 128], strides = [1, 1]} : vector<9x128xf32> to vector<1x128xf32>
    %313 = vector.broadcast %312 : vector<1x128xf32> to vector<16x128xf32>
    %314 = arith.mulf %311, %313 : vector<16x128xf32>
    %c1_i32_151 = arith.constant 1 : i32
    %315 = tpu.dynamic_rotate %302 by %c1_i32_151 dim 1 : vector<16x128xf32>, i32 -> vector<16x128xf32>
    %316 = vector.extract_strided_slice %1 {offsets = [3, 0], sizes = [1, 128], strides = [1, 1]} : vector<9x128xf32> to vector<1x128xf32>
    %317 = vector.broadcast %316 : vector<1x128xf32> to vector<16x128xf32>
    %318 = arith.mulf %315, %317 : vector<16x128xf32>
    %c127_i32_152 = arith.constant 127 : i32
    %319 = tpu.dynamic_rotate %302 by %c127_i32_152 dim 1 : vector<16x128xf32>, i32 -> vector<16x128xf32>
    %320 = vector.extract_strided_slice %1 {offsets = [5, 0], sizes = [1, 128], strides = [1, 1]} : vector<9x128xf32> to vector<1x128xf32>
    %321 = vector.broadcast %320 : vector<1x128xf32> to vector<16x128xf32>
    %322 = arith.mulf %319, %321 : vector<16x128xf32>
    %c121_i32_153 = arith.constant 121 : i32
    %323 = tpu.dynamic_rotate %302 by %c121_i32_153 dim 1 : vector<16x128xf32>, i32 -> vector<16x128xf32>
    %324 = vector.extract_strided_slice %1 {offsets = [6, 0], sizes = [1, 128], strides = [1, 1]} : vector<9x128xf32> to vector<1x128xf32>
    %325 = vector.broadcast %324 : vector<1x128xf32> to vector<16x128xf32>
    %326 = arith.mulf %323, %325 : vector<16x128xf32>
    %c120_i32_154 = arith.constant 120 : i32
    %327 = tpu.dynamic_rotate %302 by %c120_i32_154 dim 1 : vector<16x128xf32>, i32 -> vector<16x128xf32>
    %328 = vector.extract_strided_slice %1 {offsets = [7, 0], sizes = [1, 128], strides = [1, 1]} : vector<9x128xf32> to vector<1x128xf32>
    %329 = vector.broadcast %328 : vector<1x128xf32> to vector<16x128xf32>
    %330 = arith.mulf %327, %329 : vector<16x128xf32>
    %c119_i32_155 = arith.constant 119 : i32
    %331 = tpu.dynamic_rotate %302 by %c119_i32_155 dim 1 : vector<16x128xf32>, i32 -> vector<16x128xf32>
    %332 = vector.extract_strided_slice %1 {offsets = [8, 0], sizes = [1, 128], strides = [1, 1]} : vector<9x128xf32> to vector<1x128xf32>
    %333 = vector.broadcast %332 : vector<1x128xf32> to vector<16x128xf32>
    %334 = arith.mulf %331, %333 : vector<16x128xf32>
    %335 = tpu.concatenate %306, %310, %314, %318, %302, %322, %326, %330, %334 in 0 : vector<16x128xf32>, vector<16x128xf32>, vector<16x128xf32>, vector<16x128xf32>, vector<16x128xf32>, vector<16x128xf32>, vector<16x128xf32>, vector<16x128xf32>, vector<16x128xf32> -> vector<144x128xf32>
    %336 = arith.truncf %335 : vector<144x128xf32> to vector<144x128xbf16>
    %c160 = arith.constant 160 : index
    %c0_156 = arith.constant 0 : index
    %337 = vector.load %arg9[%c160, %c0_156] : memref<240x288xbf16, #tpu.memory_space<vmem>>, vector<8x144xbf16>
    %cst_157 = arith.constant dense<0.000000e+00> : vector<8x128xf32>
    %338 = tpu.matmul %337, %336, %cst_157 {dimension_numbers = #tpu.dot_dimension_numbers<[1], [0], [0], [1], [0, 0, 1, 1], [], []>} : vector<8x144xbf16>, vector<144x128xbf16>, vector<8x128xf32> -> vector<8x128xf32>
    %c9_i32_158 = arith.constant 9 : i32
    %339 = tpu.dynamic_rotate %216 by %c9_i32_158 dim 1 : vector<16x128xf32>, i32 -> vector<16x128xf32>
    %340 = vector.extract_strided_slice %1 {offsets = [0, 0], sizes = [1, 128], strides = [1, 1]} : vector<9x128xf32> to vector<1x128xf32>
    %341 = vector.broadcast %340 : vector<1x128xf32> to vector<16x128xf32>
    %342 = arith.mulf %339, %341 : vector<16x128xf32>
    %c8_i32_159 = arith.constant 8 : i32
    %343 = tpu.dynamic_rotate %216 by %c8_i32_159 dim 1 : vector<16x128xf32>, i32 -> vector<16x128xf32>
    %344 = vector.extract_strided_slice %1 {offsets = [1, 0], sizes = [1, 128], strides = [1, 1]} : vector<9x128xf32> to vector<1x128xf32>
    %345 = vector.broadcast %344 : vector<1x128xf32> to vector<16x128xf32>
    %346 = arith.mulf %343, %345 : vector<16x128xf32>
    %c7_i32_160 = arith.constant 7 : i32
    %347 = tpu.dynamic_rotate %216 by %c7_i32_160 dim 1 : vector<16x128xf32>, i32 -> vector<16x128xf32>
    %348 = vector.extract_strided_slice %1 {offsets = [2, 0], sizes = [1, 128], strides = [1, 1]} : vector<9x128xf32> to vector<1x128xf32>
    %349 = vector.broadcast %348 : vector<1x128xf32> to vector<16x128xf32>
    %350 = arith.mulf %347, %349 : vector<16x128xf32>
    %c1_i32_161 = arith.constant 1 : i32
    %351 = tpu.dynamic_rotate %216 by %c1_i32_161 dim 1 : vector<16x128xf32>, i32 -> vector<16x128xf32>
    %352 = vector.extract_strided_slice %1 {offsets = [3, 0], sizes = [1, 128], strides = [1, 1]} : vector<9x128xf32> to vector<1x128xf32>
    %353 = vector.broadcast %352 : vector<1x128xf32> to vector<16x128xf32>
    %354 = arith.mulf %351, %353 : vector<16x128xf32>
    %c127_i32_162 = arith.constant 127 : i32
    %355 = tpu.dynamic_rotate %216 by %c127_i32_162 dim 1 : vector<16x128xf32>, i32 -> vector<16x128xf32>
    %356 = vector.extract_strided_slice %1 {offsets = [5, 0], sizes = [1, 128], strides = [1, 1]} : vector<9x128xf32> to vector<1x128xf32>
    %357 = vector.broadcast %356 : vector<1x128xf32> to vector<16x128xf32>
    %358 = arith.mulf %355, %357 : vector<16x128xf32>
    %c121_i32_163 = arith.constant 121 : i32
    %359 = tpu.dynamic_rotate %216 by %c121_i32_163 dim 1 : vector<16x128xf32>, i32 -> vector<16x128xf32>
    %360 = vector.extract_strided_slice %1 {offsets = [6, 0], sizes = [1, 128], strides = [1, 1]} : vector<9x128xf32> to vector<1x128xf32>
    %361 = vector.broadcast %360 : vector<1x128xf32> to vector<16x128xf32>
    %362 = arith.mulf %359, %361 : vector<16x128xf32>
    %c120_i32_164 = arith.constant 120 : i32
    %363 = tpu.dynamic_rotate %216 by %c120_i32_164 dim 1 : vector<16x128xf32>, i32 -> vector<16x128xf32>
    %364 = vector.extract_strided_slice %1 {offsets = [7, 0], sizes = [1, 128], strides = [1, 1]} : vector<9x128xf32> to vector<1x128xf32>
    %365 = vector.broadcast %364 : vector<1x128xf32> to vector<16x128xf32>
    %366 = arith.mulf %363, %365 : vector<16x128xf32>
    %c119_i32_165 = arith.constant 119 : i32
    %367 = tpu.dynamic_rotate %216 by %c119_i32_165 dim 1 : vector<16x128xf32>, i32 -> vector<16x128xf32>
    %368 = vector.extract_strided_slice %1 {offsets = [8, 0], sizes = [1, 128], strides = [1, 1]} : vector<9x128xf32> to vector<1x128xf32>
    %369 = vector.broadcast %368 : vector<1x128xf32> to vector<16x128xf32>
    %370 = arith.mulf %367, %369 : vector<16x128xf32>
    %371 = tpu.concatenate %342, %346, %350, %354, %216, %358, %362, %366, %370 in 0 : vector<16x128xf32>, vector<16x128xf32>, vector<16x128xf32>, vector<16x128xf32>, vector<16x128xf32>, vector<16x128xf32>, vector<16x128xf32>, vector<16x128xf32>, vector<16x128xf32> -> vector<144x128xf32>
    %372 = arith.truncf %371 : vector<144x128xf32> to vector<144x128xbf16>
    %c176 = arith.constant 176 : index
    %c0_166 = arith.constant 0 : index
    %373 = vector.load %arg9[%c176, %c0_166] : memref<240x288xbf16, #tpu.memory_space<vmem>>, vector<8x144xbf16>
    %cst_167 = arith.constant dense<0.000000e+00> : vector<8x128xf32>
    %374 = tpu.matmul %373, %372, %cst_167 {dimension_numbers = #tpu.dot_dimension_numbers<[1], [0], [0], [1], [0, 0, 1, 1], [], []>} : vector<8x144xbf16>, vector<144x128xbf16>, vector<8x128xf32> -> vector<8x128xf32>
    %375 = arith.addf %338, %374 : vector<8x128xf32>
    %c160_168 = arith.constant 160 : index
    %c0_169 = arith.constant 0 : index
    %376 = vector.load %arg10[%c160_168, %c0_169] : memref<240x1xf32, #tpu.memory_space<vmem>>, vector<8x1xf32>
    %377 = vector.broadcast %376 : vector<8x1xf32> to vector<8x128xf32>
    %378 = arith.addf %375, %377 : vector<8x128xf32>
    %cst_170 = arith.constant 0.000000e+00 : f32
    %379 = vector.broadcast %cst_170 : f32 to vector<8x128xf32>
    %380 = arith.maximumf %378, %379 : vector<8x128xf32>
    %381 = arith.truncf %380 : vector<8x128xf32> to vector<8x128xbf16>
    %c0_171 = arith.constant 0 : index
    %c0_172 = arith.constant 0 : index
    %382 = vector.load %arg8[%c0_171, %c0_172] : memref<128x512xbf16, #tpu.memory_space<vmem>>, vector<128x512xbf16>
    %cst_173 = arith.constant dense<0.000000e+00> : vector<8x512xf32>
    %383 = tpu.matmul %381, %382, %cst_173 {dimension_numbers = #tpu.dot_dimension_numbers<[1], [0], [0], [1], [0, 0, 1, 1], [], []>} : vector<8x128xbf16>, vector<128x512xbf16>, vector<8x512xf32> -> vector<8x512xf32>
    %c17_i32_174 = arith.constant 17 : i32
    %384 = tpu.dynamic_rotate %383 by %c17_i32_174 dim 1 : vector<8x512xf32>, i32 -> vector<8x512xf32>
    %385 = vector.extract_strided_slice %0 {offsets = [0, 0], sizes = [1, 512], strides = [1, 1]} : vector<9x512xf32> to vector<1x512xf32>
    %386 = vector.broadcast %385 : vector<1x512xf32> to vector<8x512xf32>
    %387 = arith.mulf %384, %386 : vector<8x512xf32>
    %c16_i32_175 = arith.constant 16 : i32
    %388 = tpu.dynamic_rotate %383 by %c16_i32_175 dim 1 : vector<8x512xf32>, i32 -> vector<8x512xf32>
    %389 = vector.extract_strided_slice %0 {offsets = [1, 0], sizes = [1, 512], strides = [1, 1]} : vector<9x512xf32> to vector<1x512xf32>
    %390 = vector.broadcast %389 : vector<1x512xf32> to vector<8x512xf32>
    %391 = arith.mulf %388, %390 : vector<8x512xf32>
    %c15_i32_176 = arith.constant 15 : i32
    %392 = tpu.dynamic_rotate %383 by %c15_i32_176 dim 1 : vector<8x512xf32>, i32 -> vector<8x512xf32>
    %393 = vector.extract_strided_slice %0 {offsets = [2, 0], sizes = [1, 512], strides = [1, 1]} : vector<9x512xf32> to vector<1x512xf32>
    %394 = vector.broadcast %393 : vector<1x512xf32> to vector<8x512xf32>
    %395 = arith.mulf %392, %394 : vector<8x512xf32>
    %c1_i32_177 = arith.constant 1 : i32
    %396 = tpu.dynamic_rotate %383 by %c1_i32_177 dim 1 : vector<8x512xf32>, i32 -> vector<8x512xf32>
    %397 = vector.extract_strided_slice %0 {offsets = [3, 0], sizes = [1, 512], strides = [1, 1]} : vector<9x512xf32> to vector<1x512xf32>
    %398 = vector.broadcast %397 : vector<1x512xf32> to vector<8x512xf32>
    %399 = arith.mulf %396, %398 : vector<8x512xf32>
    %c511_i32_178 = arith.constant 511 : i32
    %400 = tpu.dynamic_rotate %383 by %c511_i32_178 dim 1 : vector<8x512xf32>, i32 -> vector<8x512xf32>
    %401 = vector.extract_strided_slice %0 {offsets = [5, 0], sizes = [1, 512], strides = [1, 1]} : vector<9x512xf32> to vector<1x512xf32>
    %402 = vector.broadcast %401 : vector<1x512xf32> to vector<8x512xf32>
    %403 = arith.mulf %400, %402 : vector<8x512xf32>
    %c497_i32_179 = arith.constant 497 : i32
    %404 = tpu.dynamic_rotate %383 by %c497_i32_179 dim 1 : vector<8x512xf32>, i32 -> vector<8x512xf32>
    %405 = vector.extract_strided_slice %0 {offsets = [6, 0], sizes = [1, 512], strides = [1, 1]} : vector<9x512xf32> to vector<1x512xf32>
    %406 = vector.broadcast %405 : vector<1x512xf32> to vector<8x512xf32>
    %407 = arith.mulf %404, %406 : vector<8x512xf32>
    %c496_i32_180 = arith.constant 496 : i32
    %408 = tpu.dynamic_rotate %383 by %c496_i32_180 dim 1 : vector<8x512xf32>, i32 -> vector<8x512xf32>
    %409 = vector.extract_strided_slice %0 {offsets = [7, 0], sizes = [1, 512], strides = [1, 1]} : vector<9x512xf32> to vector<1x512xf32>
    %410 = vector.broadcast %409 : vector<1x512xf32> to vector<8x512xf32>
    %411 = arith.mulf %408, %410 : vector<8x512xf32>
    %c495_i32_181 = arith.constant 495 : i32
    %412 = tpu.dynamic_rotate %383 by %c495_i32_181 dim 1 : vector<8x512xf32>, i32 -> vector<8x512xf32>
    %413 = vector.extract_strided_slice %0 {offsets = [8, 0], sizes = [1, 512], strides = [1, 1]} : vector<9x512xf32> to vector<1x512xf32>
    %414 = vector.broadcast %413 : vector<1x512xf32> to vector<8x512xf32>
    %415 = arith.mulf %412, %414 : vector<8x512xf32>
    %416 = tpu.concatenate %387, %391, %395, %399, %383, %403, %407, %411, %415 in 0 : vector<8x512xf32>, vector<8x512xf32>, vector<8x512xf32>, vector<8x512xf32>, vector<8x512xf32>, vector<8x512xf32>, vector<8x512xf32>, vector<8x512xf32>, vector<8x512xf32> -> vector<72x512xf32>
    %417 = arith.truncf %416 : vector<72x512xf32> to vector<72x512xbf16>
    %c192 = arith.constant 192 : index
    %c0_182 = arith.constant 0 : index
    %418 = vector.load %arg9[%c192, %c0_182] : memref<240x288xbf16, #tpu.memory_space<vmem>>, vector<8x72xbf16>
    %cst_183 = arith.constant dense<0.000000e+00> : vector<8x512xf32>
    %419 = tpu.matmul %418, %417, %cst_183 {dimension_numbers = #tpu.dot_dimension_numbers<[1], [0], [0], [1], [0, 0, 1, 1], [], []>} : vector<8x72xbf16>, vector<72x512xbf16>, vector<8x512xf32> -> vector<8x512xf32>
    %c17_i32_184 = arith.constant 17 : i32
    %420 = tpu.dynamic_rotate %263 by %c17_i32_184 dim 1 : vector<8x512xf32>, i32 -> vector<8x512xf32>
    %421 = vector.extract_strided_slice %0 {offsets = [0, 0], sizes = [1, 512], strides = [1, 1]} : vector<9x512xf32> to vector<1x512xf32>
    %422 = vector.broadcast %421 : vector<1x512xf32> to vector<8x512xf32>
    %423 = arith.mulf %420, %422 : vector<8x512xf32>
    %c16_i32_185 = arith.constant 16 : i32
    %424 = tpu.dynamic_rotate %263 by %c16_i32_185 dim 1 : vector<8x512xf32>, i32 -> vector<8x512xf32>
    %425 = vector.extract_strided_slice %0 {offsets = [1, 0], sizes = [1, 512], strides = [1, 1]} : vector<9x512xf32> to vector<1x512xf32>
    %426 = vector.broadcast %425 : vector<1x512xf32> to vector<8x512xf32>
    %427 = arith.mulf %424, %426 : vector<8x512xf32>
    %c15_i32_186 = arith.constant 15 : i32
    %428 = tpu.dynamic_rotate %263 by %c15_i32_186 dim 1 : vector<8x512xf32>, i32 -> vector<8x512xf32>
    %429 = vector.extract_strided_slice %0 {offsets = [2, 0], sizes = [1, 512], strides = [1, 1]} : vector<9x512xf32> to vector<1x512xf32>
    %430 = vector.broadcast %429 : vector<1x512xf32> to vector<8x512xf32>
    %431 = arith.mulf %428, %430 : vector<8x512xf32>
    %c1_i32_187 = arith.constant 1 : i32
    %432 = tpu.dynamic_rotate %263 by %c1_i32_187 dim 1 : vector<8x512xf32>, i32 -> vector<8x512xf32>
    %433 = vector.extract_strided_slice %0 {offsets = [3, 0], sizes = [1, 512], strides = [1, 1]} : vector<9x512xf32> to vector<1x512xf32>
    %434 = vector.broadcast %433 : vector<1x512xf32> to vector<8x512xf32>
    %435 = arith.mulf %432, %434 : vector<8x512xf32>
    %c511_i32_188 = arith.constant 511 : i32
    %436 = tpu.dynamic_rotate %263 by %c511_i32_188 dim 1 : vector<8x512xf32>, i32 -> vector<8x512xf32>
    %437 = vector.extract_strided_slice %0 {offsets = [5, 0], sizes = [1, 512], strides = [1, 1]} : vector<9x512xf32> to vector<1x512xf32>
    %438 = vector.broadcast %437 : vector<1x512xf32> to vector<8x512xf32>
    %439 = arith.mulf %436, %438 : vector<8x512xf32>
    %c497_i32_189 = arith.constant 497 : i32
    %440 = tpu.dynamic_rotate %263 by %c497_i32_189 dim 1 : vector<8x512xf32>, i32 -> vector<8x512xf32>
    %441 = vector.extract_strided_slice %0 {offsets = [6, 0], sizes = [1, 512], strides = [1, 1]} : vector<9x512xf32> to vector<1x512xf32>
    %442 = vector.broadcast %441 : vector<1x512xf32> to vector<8x512xf32>
    %443 = arith.mulf %440, %442 : vector<8x512xf32>
    %c496_i32_190 = arith.constant 496 : i32
    %444 = tpu.dynamic_rotate %263 by %c496_i32_190 dim 1 : vector<8x512xf32>, i32 -> vector<8x512xf32>
    %445 = vector.extract_strided_slice %0 {offsets = [7, 0], sizes = [1, 512], strides = [1, 1]} : vector<9x512xf32> to vector<1x512xf32>
    %446 = vector.broadcast %445 : vector<1x512xf32> to vector<8x512xf32>
    %447 = arith.mulf %444, %446 : vector<8x512xf32>
    %c495_i32_191 = arith.constant 495 : i32
    %448 = tpu.dynamic_rotate %263 by %c495_i32_191 dim 1 : vector<8x512xf32>, i32 -> vector<8x512xf32>
    %449 = vector.extract_strided_slice %0 {offsets = [8, 0], sizes = [1, 512], strides = [1, 1]} : vector<9x512xf32> to vector<1x512xf32>
    %450 = vector.broadcast %449 : vector<1x512xf32> to vector<8x512xf32>
    %451 = arith.mulf %448, %450 : vector<8x512xf32>
    %452 = tpu.concatenate %423, %427, %431, %435, %263, %439, %443, %447, %451 in 0 : vector<8x512xf32>, vector<8x512xf32>, vector<8x512xf32>, vector<8x512xf32>, vector<8x512xf32>, vector<8x512xf32>, vector<8x512xf32>, vector<8x512xf32>, vector<8x512xf32> -> vector<72x512xf32>
    %453 = arith.truncf %452 : vector<72x512xf32> to vector<72x512xbf16>
    %c208 = arith.constant 208 : index
    %c0_192 = arith.constant 0 : index
    %454 = vector.load %arg9[%c208, %c0_192] : memref<240x288xbf16, #tpu.memory_space<vmem>>, vector<8x72xbf16>
    %cst_193 = arith.constant dense<0.000000e+00> : vector<8x512xf32>
    %455 = tpu.matmul %454, %453, %cst_193 {dimension_numbers = #tpu.dot_dimension_numbers<[1], [0], [0], [1], [0, 0, 1, 1], [], []>} : vector<8x72xbf16>, vector<72x512xbf16>, vector<8x512xf32> -> vector<8x512xf32>
    %456 = arith.addf %419, %455 : vector<8x512xf32>
    %c192_194 = arith.constant 192 : index
    %c0_195 = arith.constant 0 : index
    %457 = vector.load %arg10[%c192_194, %c0_195] : memref<240x1xf32, #tpu.memory_space<vmem>>, vector<8x1xf32>
    %458 = vector.broadcast %457 : vector<8x1xf32> to vector<8x512xf32>
    %459 = arith.addf %456, %458 : vector<8x512xf32>
    %cst_196 = arith.constant 0.000000e+00 : f32
    %460 = vector.broadcast %cst_196 : f32 to vector<8x512xf32>
    %461 = arith.maximumf %459, %460 : vector<8x512xf32>
    %462 = tpu.concatenate %263, %461 in 0 : vector<8x512xf32>, vector<8x512xf32> -> vector<16x512xf32>
    %463 = arith.truncf %462 : vector<16x512xf32> to vector<16x512xbf16>
    %c224 = arith.constant 224 : index
    %c0_197 = arith.constant 0 : index
    %464 = vector.load %arg9[%c224, %c0_197] : memref<240x288xbf16, #tpu.memory_space<vmem>>, vector<2x16xbf16>
    %cst_198 = arith.constant dense<0.000000e+00> : vector<2x512xf32>
    %465 = tpu.matmul %464, %463, %cst_198 {dimension_numbers = #tpu.dot_dimension_numbers<[1], [0], [0], [1], [0, 0, 1, 1], [], []>} : vector<2x16xbf16>, vector<16x512xbf16>, vector<2x512xf32> -> vector<2x512xf32>
    %c224_199 = arith.constant 224 : index
    %c0_200 = arith.constant 0 : index
    %466 = vector.load %arg10[%c224_199, %c0_200] : memref<240x1xf32, #tpu.memory_space<vmem>>, vector<2x1xf32>
    %467 = vector.broadcast %466 : vector<2x1xf32> to vector<2x512xf32>
    %468 = arith.addf %465, %467 : vector<2x512xf32>
    %469 = arith.negf %468 : vector<2x512xf32>
    %470 = math.exp %469 : vector<2x512xf32>
    %cst_201 = arith.constant 1.000000e+00 : f32
    %471 = vector.broadcast %cst_201 : f32 to vector<2x512xf32>
    %472 = arith.addf %471, %470 : vector<2x512xf32>
    %473 = arith.divf %471, %472 : vector<2x512xf32>
    %c0_202 = arith.constant 0 : index
    %c0_203 = arith.constant 0 : index
    %474 = vector.load %arg11[%c0_202, %c0_203] : memref<2x512xf32, #tpu.memory_space<vmem>>, vector<2x512xf32>
    tpu.vector_store %arg11[%c0_202, %c0_203], %473 {strides = array<i32>} : memref<2x512xf32, #tpu.memory_space<vmem>>, vector<2x512xf32>,
    return
  }
  func.func @transform_0(%arg0: i32) -> (i32, i32) {
    %c0_i32 = arith.constant 0 : i32
    %c0_i32_0 = arith.constant 0 : i32
    return %c0_i32, %arg0 : i32, i32
  }
  func.func @transform_1(%arg0: i32) -> (i32, i32) {
    %c0_i32 = arith.constant 0 : i32
    %c0_i32_0 = arith.constant 0 : i32
    %c0_i32_1 = arith.constant 0 : i32
    return %c0_i32, %c0_i32_0 : i32, i32
  }
  func.func @transform_2(%arg0: i32) -> (i32, i32) {
    %c0_i32 = arith.constant 0 : i32
    %c0_i32_0 = arith.constant 0 : i32
    %c0_i32_1 = arith.constant 0 : i32
    return %c0_i32, %c0_i32_0 : i32, i32
  }
  func.func @transform_3(%arg0: i32) -> (i32, i32, i32) {
    %c0_i32 = arith.constant 0 : i32
    %c0_i32_0 = arith.constant 0 : i32
    %c0_i32_1 = arith.constant 0 : i32
    %c0_i32_2 = arith.constant 0 : i32
    return %c0_i32, %c0_i32_0, %c0_i32_1 : i32, i32, i32
  }
  func.func @transform_4(%arg0: i32) -> (i32, i32) {
    %c0_i32 = arith.constant 0 : i32
    %c0_i32_0 = arith.constant 0 : i32
    %c0_i32_1 = arith.constant 0 : i32
    return %c0_i32, %c0_i32_0 : i32, i32
  }
  func.func @transform_5(%arg0: i32) -> (i32, i32) {
    %c0_i32 = arith.constant 0 : i32
    %c0_i32_0 = arith.constant 0 : i32
    %c0_i32_1 = arith.constant 0 : i32
    return %c0_i32, %c0_i32_0 : i32, i32
  }
  func.func @transform_6(%arg0: i32) -> (i32, i32) {
    %c0_i32 = arith.constant 0 : i32
    %c0_i32_0 = arith.constant 0 : i32
    %c0_i32_1 = arith.constant 0 : i32
    return %c0_i32, %c0_i32_0 : i32, i32
  }
  func.func @transform_7(%arg0: i32) -> (i32, i32) {
    %c0_i32 = arith.constant 0 : i32
    %c0_i32_0 = arith.constant 0 : i32
    %c0_i32_1 = arith.constant 0 : i32
    return %c0_i32, %c0_i32_0 : i32, i32
  }
  func.func @transform_8(%arg0: i32) -> (i32, i32) {
    %c0_i32 = arith.constant 0 : i32
    %c0_i32_0 = arith.constant 0 : i32
    %c0_i32_1 = arith.constant 0 : i32
    return %c0_i32, %c0_i32_0 : i32, i32
  }
  func.func @transform_9(%arg0: i32) -> (i32, i32) {
    %c0_i32 = arith.constant 0 : i32
    %c0_i32_0 = arith.constant 0 : i32
    %c0_i32_1 = arith.constant 0 : i32
    return %c0_i32, %c0_i32_0 : i32, i32
  }
  func.func @transform_10(%arg0: i32) -> (i32, i32) {
    %c0_i32 = arith.constant 0 : i32
    %c0_i32_0 = arith.constant 0 : i32
    return %c0_i32, %arg0 : i32, i32
  }
}

</mosaic_0001>

<llo_original>
// kernel: squeeze.2
$region0: #{squeeze.2}
  %s0 = inlined_call_operand.vmem [shape: f32[512], index: 0, kind: input, shape index: {}]
  %s1 = inlined_call_operand.hbm [shape: f32[2,1,16,16], index: 1, kind: output, shape index: {}]
  $region1: #{squeeze.2} parent=0
    #allocation0 [shape = 'u8[16384]{0}', space=vmem, size = 0x4000, scoped, tag = 'operand span for operand 1']
    #allocation1 [shape = 's32[1]{0}', space=sflag, size = 0x4, scoped, tag = 'scoped memory for squeeze.2']
    #allocation2 [shape = 'u8[4096]{0}', space=vmem, size = 0x1000, scoped, tag = 'scoped mem for input reshape']
    %2 = vsyncpa [#allocation1], 0
    %s4 = sshll.u32 1, 4
    %s5 = ssub.s32 %s4, 1
    %v6 = vld [vmem:[%s0] sm:%s5]
    %7 = vst [vmem:[#allocation2] sm:%s5] %v6
    %v8 = vld [vmem:[#allocation2] sm:$0xf]
    %vm9 = vcmask 130048
    %10 = vst.msk [vmem:[#allocation0] ss:$8 sm:$0xf] %vm9, %v8
    %v11 = vld [vmem:[#allocation2] sm:$0xf]
    %12 = vrot.lane.b32.xlu0 %v11, 112
    %v13 = vpop.permute.xlu0 %12
    %vm14 = vcmask 130048
    %s15 = scalar_lea.vmem [#allocation0], 1
    %16 = vst.msk [vmem:[%s15] ss:$8 sm:$0xf] %vm14, %v13
    %v17 = vld [vmem:[#allocation2] sm:$0xf]
    %18 = vrot.lane.b32.xlu0 %v17, 96
    %v19 = vpop.permute.xlu0 %18
    %vm20 = vcmask 130048
    %s21 = scalar_lea.vmem [#allocation0], 2
    %22 = vst.msk [vmem:[%s21] ss:$8 sm:$0xf] %vm20, %v19
    %v23 = vld [vmem:[#allocation2] sm:$0xf]
    %24 = vrot.lane.b32.xlu0 %v23, 80
    %v25 = vpop.permute.xlu0 %24
    %vm26 = vcmask 130048
    %s27 = scalar_lea.vmem [#allocation0], 3
    %28 = vst.msk [vmem:[%s27] ss:$8 sm:$0xf] %vm26, %v25
    %v29 = vld [vmem:[#allocation2] sm:$0xf]
    %30 = vrot.lane.b32.xlu0 %v29, 64
    %v31 = vpop.permute.xlu0 %30
    %vm32 = vcmask 130048
    %s33 = scalar_lea.vmem [#allocation0], 4
    %34 = vst.msk [vmem:[%s33] ss:$8 sm:$0xf] %vm32, %v31
    %v35 = vld [vmem:[#allocation2] sm:$0xf]
    %36 = vrot.lane.b32.xlu0 %v35, 48
    %v37 = vpop.permute.xlu0 %36
    %vm38 = vcmask 130048
    %s39 = scalar_lea.vmem [#allocation0], 5
    %40 = vst.msk [vmem:[%s39] ss:$8 sm:$0xf] %vm38, %v37
    %v41 = vld [vmem:[#allocation2] sm:$0xf]
    %42 = vrot.lane.b32.xlu0 %v41, 32
    %v43 = vpop.permute.xlu0 %42
    %vm44 = vcmask 130048
    %s45 = scalar_lea.vmem [#allocation0], 6
    %46 = vst.msk [vmem:[%s45] ss:$8 sm:$0xf] %vm44, %v43
    %v47 = vld [vmem:[#allocation2] sm:$0xf]
    %48 = vrot.lane.b32.xlu0 %v47, 16
    %v49 = vpop.permute.xlu0 %48
    %vm50 = vcmask 130048
    %s51 = scalar_lea.vmem [#allocation0], 7
    %52 = vst.msk [vmem:[%s51] ss:$8 sm:$0xf] %vm50, %v49
    %s54 = ssub.s32 512, 512
    %55 = vsyncadd [#allocation1], %s54
    %s57 = sshll.u32 [#allocation0], 4
    %s58 = int_to_ptr.vmem [resolvable:$true] %s57
    %60 = dma.vmem_to_hbm [thread:$0]  %s58, 512, %s1, [#allocation1]
    %61 = dma.done [#allocation1], 512
    %62 = vsyncpa [#allocation1], 1

// kernel: model_forward.1
$region0: #{model_forward.1}
  #allocation0 [shape = 'u32[]', space=smem, size = 0x4, offset = 0x4, fixed_abs, tag = 'smem constant byte address 0x4 - core index']
  #allocation1 [shape = 'u32[144,128]{1,0:T(1,128)}', space=vmem, size = 0x12000, scoped, tag = 'internal scratch']
  %s0 = inlined_call_operand.vmem [shape: bf16[8,512], index: 0, kind: input, shape index: {}]
  %s1 = inlined_call_operand.vmem [shape: f32[9,512], index: 1, kind: input, shape index: {}]
  %s2 = inlined_call_operand.vmem [shape: f32[9,128], index: 2, kind: input, shape index: {}]
  %s3 = inlined_call_operand.vmem [shape: bf16[9,32,32], index: 3, kind: input, shape index: {}]
  %s4 = inlined_call_operand.vmem [shape: bf16[512,128], index: 4, kind: input, shape index: {}]
  %s5 = inlined_call_operand.vmem [shape: bf16[128,32], index: 5, kind: input, shape index: {}]
  %s6 = inlined_call_operand.vmem [shape: bf16[32,128], index: 6, kind: input, shape index: {}]
  %s7 = inlined_call_operand.vmem [shape: bf16[128,512], index: 7, kind: input, shape index: {}]
  %s8 = inlined_call_operand.vmem [shape: bf16[240,288], index: 8, kind: input, shape index: {}]
  %s9 = inlined_call_operand.vmem [shape: f32[240,1], index: 9, kind: input, shape index: {}]
  %s10 = inlined_call_operand.vmem [shape: f32[2,512], index: 10, kind: output, shape index: {}]
  %s11 = sld [smem:[#allocation0]]
  $region50: #{model_forward.1} parent=0
    _
  %s13 = ssub.s32 1, %s11
  %s14 = scalar_select 0, %s13, %s11
  // Predicated region
  $region2: #{model_forward.1} parent=0 // pred_check
    _
  $region3: #{model_forward.1} parent=0 // pred_check_branch
    %16 = sbr.rel (0) target = $region5
  $region4: #{model_forward.1} parent=0 // pred_region
    _
  $region5: #{model_forward.1} parent=0 // pred_fallthru
    _
  // Predicated region
  $region6: #{model_forward.1} parent=0 // pred_check
    _
  $region7: #{model_forward.1} parent=0 // pred_check_branch
    %18 = sbr.rel (0) target = $region9
  $region8: #{model_forward.1} parent=0 // pred_region
    _
  $region9: #{model_forward.1} parent=0 // pred_fallthru
    _
  // Predicated region
  $region10: #{model_forward.1} parent=0 // pred_check
    _
  $region11: #{model_forward.1} parent=0 // pred_check_branch
    %20 = sbr.rel (0) target = $region13
  $region12: #{model_forward.1} parent=0 // pred_region
    _
  $region13: #{model_forward.1} parent=0 // pred_fallthru
    _
  // Predicated region
  $region14: #{model_forward.1} parent=0 // pred_check
    _
  $region15: #{model_forward.1} parent=0 // pred_check_branch
    %22 = sbr.rel (0) target = $region17
  $region16: #{model_forward.1} parent=0 // pred_region
    _
  $region17: #{model_forward.1} parent=0 // pred_fallthru
    _
  // Predicated region
  $region18: #{model_forward.1} parent=0 // pred_check
    _
  $region19: #{model_forward.1} parent=0 // pred_check_branch
    %24 = sbr.rel (0) target = $region21
  $region20: #{model_forward.1} parent=0 // pred_region
    _
  $region21: #{model_forward.1} parent=0 // pred_fallthru
    _
  // Predicated region
  $region22: #{model_forward.1} parent=0 // pred_check
    _
  $region23: #{model_forward.1} parent=0 // pred_check_branch
    %26 = sbr.rel (0) target = $region25
  $region24: #{model_forward.1} parent=0 // pred_region
    _
  $region25: #{model_forward.1} parent=0 // pred_fallthru
    _
  // Predicated region
  $region26: #{model_forward.1} parent=0 // pred_check
    _
  $region27: #{model_forward.1} parent=0 // pred_check_branch
    %28 = sbr.rel (0) target = $region29
  $region28: #{model_forward.1} parent=0 // pred_region
    _
  $region29: #{model_forward.1} parent=0 // pred_fallthru
    _
  // Predicated region
  $region30: #{model_forward.1} parent=0 // pred_check
    _
  $region31: #{model_forward.1} parent=0 // pred_check_branch
    %30 = sbr.rel (0) target = $region33
  $region32: #{model_forward.1} parent=0 // pred_region
    _
  $region33: #{model_forward.1} parent=0 // pred_fallthru
    _
  // Predicated region
  $region34: #{model_forward.1} parent=0 // pred_check
    _
  $region35: #{model_forward.1} parent=0 // pred_check_branch
    %32 = sbr.rel (0) target = $region37
  $region36: #{model_forward.1} parent=0 // pred_region
    _
  $region37: #{model_forward.1} parent=0 // pred_fallthru
    _
  // Predicated region
  $region38: #{model_forward.1} parent=0 // pred_check
    _
  $region39: #{model_forward.1} parent=0 // pred_check_branch
    %34 = sbr.rel (0) target = $region41
  $region40: #{model_forward.1} parent=0 // pred_region
    _
  $region41: #{model_forward.1} parent=0 // pred_fallthru
    _
  %v36 = vld [vmem:[%s1] sm:$0xff]
  %v37 = vld [vmem:[%s1 + $0x8] sm:$0xff]
  %v38 = vld [vmem:[%s1 + $0x10] sm:$0xff]
  %v39 = vld [vmem:[%s1 + $0x18] sm:$0xff]
  %v40 = vld [vmem:[%s1 + $0x20] sm:$0x1]
  %v41 = vld [vmem:[%s1 + $0x28] sm:$0x1]
  %v42 = vld [vmem:[%s1 + $0x30] sm:$0x1]
  %v43 = vld [vmem:[%s1 + $0x38] sm:$0x1]
  %v44 = vld [vmem:[%s2] sm:$0xff]
  %v45 = vld [vmem:[%s2 + $0x8] sm:$0x1]
  %v46 = vld [vmem:[%s0] sm:$0xff]
  %v47 = vld [vmem:[%s0 + $0x8] sm:$0xff]
  %v48 = vunpack.c.l.bf16 %v46
  %v49 = vunpack.c.h.bf16 %v46
  %v50 = vunpack.c.l.bf16 %v47
  %v51 = vunpack.c.h.bf16 %v47
  %52 = vrot.lane.b32.xlu0 %v48, 17
  %v53 = vpop.permute.xlu0 %52
  %54 = vrot.lane.b32.xlu0 %v49, 17
  %v55 = vpop.permute.xlu0 %54
  %56 = vrot.lane.b32.xlu0 %v50, 17
  %v57 = vpop.permute.xlu0 %56
  %58 = vrot.lane.b32.xlu0 %v51, 17
  %v59 = vpop.permute.xlu0 %58
  %v60 = vlaneseq
  %v61 = vand.u32 %v60, 127
  %vm62 = vcmp.lt.s32.totalorder %v61, 17
  %v63 = vsel %vm62, %v57, %v59
  %v64 = vsel %vm62, %v55, %v57
  %v65 = vsel %vm62, %v53, %v55
  %v66 = vsel %vm62, %v59, %v53
  %v67 = vlaneseq
  %v68 = vshrl.u32 %v67, 7
  %v69 = vsub.s32 0, %v68
  %v70 = vrot.slane %v36, %v69
  %v71 = vlaneseq
  %v72 = vshrl.u32 %v71, 7
  %v73 = vsub.s32 0, %v72
  %v74 = vrot.slane %v37, %v73
  %v75 = vlaneseq
  %v76 = vshrl.u32 %v75, 7
  %v77 = vsub.s32 0, %v76
  %v78 = vrot.slane %v38, %v77
  %v79 = vlaneseq
  %v80 = vshrl.u32 %v79, 7
  %v81 = vsub.s32 0, %v80
  %v82 = vrot.slane %v39, %v81
  %v83 = vmul.f32 %v66, %v70
  %v84 = vmul.f32 %v65, %v74
  %v85 = vmul.f32 %v64, %v78
  %v86 = vmul.f32 %v63, %v82
  %87 = vrot.lane.b32.xlu0 %v48, 16
  %v88 = vpop.permute.xlu0 %87
  %89 = vrot.lane.b32.xlu0 %v49, 16
  %v90 = vpop.permute.xlu0 %89
  %91 = vrot.lane.b32.xlu0 %v50, 16
  %v92 = vpop.permute.xlu0 %91
  %93 = vrot.lane.b32.xlu0 %v51, 16
  %v94 = vpop.permute.xlu0 %93
  %vm95 = vcmp.lt.s32.totalorder %v61, 16
  %v96 = vsel %vm95, %v92, %v94
  %v97 = vsel %vm95, %v90, %v92
  %v98 = vsel %vm95, %v88, %v90
  %v99 = vsel %vm95, %v94, %v88
  %v100 = vlaneseq
  %v101 = vshrl.u32 %v100, 7
  %v102 = vsub.s32 1, %v101
  %v103 = vrot.slane %v36, %v102
  %v104 = vlaneseq
  %v105 = vshrl.u32 %v104, 7
  %v106 = vsub.s32 1, %v105
  %v107 = vrot.slane %v37, %v106
  %v108 = vlaneseq
  %v109 = vshrl.u32 %v108, 7
  %v110 = vsub.s32 1, %v109
  %v111 = vrot.slane %v38, %v110
  %v112 = vlaneseq
  %v113 = vshrl.u32 %v112, 7
  %v114 = vsub.s32 1, %v113
  %v115 = vrot.slane %v39, %v114
  %v116 = vmul.f32 %v99, %v103
  %v117 = vmul.f32 %v98, %v107
  %v118 = vmul.f32 %v97, %v111
  %v119 = vmul.f32 %v96, %v115
  %120 = vrot.lane.b32.xlu0 %v48, 15
  %v121 = vpop.permute.xlu0 %120
  %122 = vrot.lane.b32.xlu0 %v49, 15
  %v123 = vpop.permute.xlu0 %122
  %124 = vrot.lane.b32.xlu0 %v50, 15
  %v125 = vpop.permute.xlu0 %124
  %126 = vrot.lane.b32.xlu0 %v51, 15
  %v127 = vpop.permute.xlu0 %126
  %vm128 = vcmp.lt.s32.totalorder %v61, 15
  %v129 = vsel %vm128, %v125, %v127
  %v130 = vsel %vm128, %v123, %v125
  %v131 = vsel %vm128, %v121, %v123
  %v132 = vsel %vm128, %v127, %v121
  %v133 = vlaneseq
  %v134 = vshrl.u32 %v133, 7
  %v135 = vsub.s32 2, %v134
  %v136 = vrot.slane %v36, %v135
  %v137 = vlaneseq
  %v138 = vshrl.u32 %v137, 7
  %v139 = vsub.s32 2, %v138
  %v140 = vrot.slane %v37, %v139
  %v141 = vlaneseq
  %v142 = vshrl.u32 %v141, 7
  %v143 = vsub.s32 2, %v142
  %v144 = vrot.slane %v38, %v143
  %v145 = vlaneseq
  %v146 = vshrl.u32 %v145, 7
  %v147 = vsub.s32 2, %v146
  %v148 = vrot.slane %v39, %v147
  %v149 = vmul.f32 %v132, %v136
  %v150 = vmul.f32 %v131, %v140
  %v151 = vmul.f32 %v130, %v144
  %v152 = vmul.f32 %v129, %v148
  %153 = vrot.lane.b32.xlu0 %v48, 1
  %v154 = vpop.permute.xlu0 %153
  %155 = vrot.lane.b32.xlu0 %v49, 1
  %v156 = vpop.permute.xlu0 %155
  %157 = vrot.lane.b32.xlu0 %v50, 1
  %v158 = vpop.permute.xlu0 %157
  %159 = vrot.lane.b32.xlu0 %v51, 1
  %v160 = vpop.permute.xlu0 %159
  %vm161 = vcmp.lt.s32.totalorder %v61, 1
  %v162 = vsel %vm161, %v158, %v160
  %v163 = vsel %vm161, %v156, %v158
  %v164 = vsel %vm161, %v154, %v156
  %v165 = vsel %vm161, %v160, %v154
  %v166 = vlaneseq
  %v167 = vshrl.u32 %v166, 7
  %v168 = vsub.s32 3, %v167
  %v169 = vrot.slane %v36, %v168
  %v170 = vlaneseq
  %v171 = vshrl.u32 %v170, 7
  %v172 = vsub.s32 3, %v171
  %v173 = vrot.slane %v37, %v172
  %v174 = vlaneseq
  %v175 = vshrl.u32 %v174, 7
  %v176 = vsub.s32 3, %v175
  %v177 = vrot.slane %v38, %v176
  %v178 = vlaneseq
  %v179 = vshrl.u32 %v178, 7
  %v180 = vsub.s32 3, %v179
  %v181 = vrot.slane %v39, %v180
  %v182 = vmul.f32 %v165, %v169
  %v183 = vmul.f32 %v164, %v173
  %v184 = vmul.f32 %v163, %v177
  %v185 = vmul.f32 %v162, %v181
  %186 = vrot.lane.b32.xlu0 %v48, 127
  %v187 = vpop.permute.xlu0 %186
  %188 = vrot.lane.b32.xlu0 %v49, 127
  %v189 = vpop.permute.xlu0 %188
  %190 = vrot.lane.b32.xlu0 %v50, 127
  %v191 = vpop.permute.xlu0 %190
  %192 = vrot.lane.b32.xlu0 %v51, 127
  %v193 = vpop.permute.xlu0 %192
  %vm194 = vcmp.lt.s32.totalorder %v61, 127
  %v195 = vsel %vm194, %v191, %v193
  %v196 = vsel %vm194, %v189, %v191
  %v197 = vsel %vm194, %v187, %v189
  %v198 = vsel %vm194, %v193, %v187
  %v199 = vlaneseq
  %v200 = vshrl.u32 %v199, 7
  %v201 = vsub.s32 5, %v200
  %v202 = vrot.slane %v36, %v201
  %v203 = vlaneseq
  %v204 = vshrl.u32 %v203, 7
  %v205 = vsub.s32 5, %v204
  %v206 = vrot.slane %v37, %v205
  %v207 = vlaneseq
  %v208 = vshrl.u32 %v207, 7
  %v209 = vsub.s32 5, %v208
  %v210 = vrot.slane %v38, %v209
  %v211 = vlaneseq
  %v212 = vshrl.u32 %v211, 7
  %v213 = vsub.s32 5, %v212
  %v214 = vrot.slane %v39, %v213
  %v215 = vmul.f32 %v197, %v202
  %v216 = vmul.f32 %v196, %v206
  %v217 = vmul.f32 %v195, %v210
  %v218 = vmul.f32 %v198, %v214
  %219 = vrot.lane.b32.xlu0 %v48, 113
  %v220 = vpop.permute.xlu0 %219
  %221 = vrot.lane.b32.xlu0 %v49, 113
  %v222 = vpop.permute.xlu0 %221
  %223 = vrot.lane.b32.xlu0 %v50, 113
  %v224 = vpop.permute.xlu0 %223
  %225 = vrot.lane.b32.xlu0 %v51, 113
  %v226 = vpop.permute.xlu0 %225
  %vm227 = vcmp.lt.s32.totalorder %v61, 113
  %v228 = vsel %vm227, %v224, %v226
  %v229 = vsel %vm227, %v222, %v224
  %v230 = vsel %vm227, %v220, %v222
  %v231 = vsel %vm227, %v226, %v220
  %v232 = vlaneseq
  %v233 = vshrl.u32 %v232, 7
  %v234 = vsub.s32 6, %v233
  %v235 = vrot.slane %v36, %v234
  %v236 = vlaneseq
  %v237 = vshrl.u32 %v236, 7
  %v238 = vsub.s32 6, %v237
  %v239 = vrot.slane %v37, %v238
  %v240 = vlaneseq
  %v241 = vshrl.u32 %v240, 7
  %v242 = vsub.s32 6, %v241
  %v243 = vrot.slane %v38, %v242
  %v244 = vlaneseq
  %v245 = vshrl.u32 %v244, 7
  %v246 = vsub.s32 6, %v245
  %v247 = vrot.slane %v39, %v246
  %v248 = vmul.f32 %v230, %v235
  %v249 = vmul.f32 %v229, %v239
  %v250 = vmul.f32 %v228, %v243
  %v251 = vmul.f32 %v231, %v247
  %252 = vrot.lane.b32.xlu0 %v48, 112
  %v253 = vpop.permute.xlu0 %252
  %254 = vrot.lane.b32.xlu0 %v49, 112
  %v255 = vpop.permute.xlu0 %254
  %256 = vrot.lane.b32.xlu0 %v50, 112
  %v257 = vpop.permute.xlu0 %256
  %258 = vrot.lane.b32.xlu0 %v51, 112
  %v259 = vpop.permute.xlu0 %258
  %vm260 = vcmp.lt.s32.totalorder %v61, 112
  %v261 = vsel %vm260, %v257, %v259
  %v262 = vsel %vm260, %v255, %v257
  %v263 = vsel %vm260, %v253, %v255
  %v264 = vsel %vm260, %v259, %v253
  %v265 = vlaneseq
  %v266 = vshrl.u32 %v265, 7
  %v267 = vsub.s32 7, %v266
  %v268 = vrot.slane %v36, %v267
  %v269 = vlaneseq
  %v270 = vshrl.u32 %v269, 7
  %v271 = vsub.s32 7, %v270
  %v272 = vrot.slane %v37, %v271
  %v273 = vlaneseq
  %v274 = vshrl.u32 %v273, 7
  %v275 = vsub.s32 7, %v274
  %v276 = vrot.slane %v38, %v275
  %v277 = vlaneseq
  %v278 = vshrl.u32 %v277, 7
  %v279 = vsub.s32 7, %v278
  %v280 = vrot.slane %v39, %v279
  %v281 = vmul.f32 %v263, %v268
  %v282 = vmul.f32 %v262, %v272
  %v283 = vmul.f32 %v261, %v276
  %v284 = vmul.f32 %v264, %v280
  %285 = vrot.lane.b32.xlu0 %v48, 111
  %v286 = vpop.permute.xlu0 %285
  %287 = vrot.lane.b32.xlu0 %v49, 111
  %v288 = vpop.permute.xlu0 %287
  %289 = vrot.lane.b32.xlu0 %v50, 111
  %v290 = vpop.permute.xlu0 %289
  %291 = vrot.lane.b32.xlu0 %v51, 111
  %v292 = vpop.permute.xlu0 %291
  %vm293 = vcmp.lt.s32.totalorder %v61, 111
  %v294 = vsel %vm293, %v290, %v292
  %v295 = vsel %vm293, %v288, %v290
  %v296 = vsel %vm293, %v286, %v288
  %v297 = vsel %vm293, %v292, %v286
  %v298 = vlaneseq
  %v299 = vshrl.u32 %v298, 7
  %v300 = vsub.s32 0, %v299
  %v301 = vrot.slane %v40, %v300
  %v302 = vlaneseq
  %v303 = vshrl.u32 %v302, 7
  %v304 = vsub.s32 0, %v303
  %v305 = vrot.slane %v41, %v304
  %v306 = vlaneseq
  %v307 = vshrl.u32 %v306, 7
  %v308 = vsub.s32 0, %v307
  %v309 = vrot.slane %v42, %v308
  %v310 = vlaneseq
  %v311 = vshrl.u32 %v310, 7
  %v312 = vsub.s32 0, %v311
  %v313 = vrot.slane %v43, %v312
  %v314 = vmul.f32 %v296, %v301
  %v315 = vmul.f32 %v295, %v305
  %v316 = vmul.f32 %v294, %v309
  %v317 = vmul.f32 %v297, %v313
  %v318 = vpack.c.bf16 %v116, %v83
  %v319 = vpack.c.bf16 %v117, %v84
  %v320 = vpack.c.bf16 %v118, %v85
  %v321 = vpack.c.bf16 %v119, %v86
  %v322 = vpack.c.bf16 %v182, %v149
  %v323 = vpack.c.bf16 %v183, %v150
  %v324 = vpack.c.bf16 %v184, %v151
  %v325 = vpack.c.bf16 %v185, %v152
  %v326 = vpack.c.bf16 %v215, %v48
  %v327 = vpack.c.bf16 %v216, %v49
  %v328 = vpack.c.bf16 %v217, %v50
  %v329 = vpack.c.bf16 %v218, %v51
  %v330 = vpack.c.bf16 %v281, %v248
  %v331 = vpack.c.bf16 %v282, %v249
  %v332 = vpack.c.bf16 %v283, %v250
  %v333 = vpack.c.bf16 %v284, %v251
  %v334 = vpack.c.bf16 %v314, %v314
  %v335 = vpack.c.bf16 %v315, %v315
  %v336 = vpack.c.bf16 %v316, %v316
  %v337 = vpack.c.bf16 %v317, %v317
  %v338 = vld [vmem:[%s8] sm:$0xf]
  %v339 = vld [vmem:[%s9] sm:$0xff]
  %341 = vset.pattern.permute.xlu0 0
  %342 = vperm.xlu0 %341, %v339
  %v343 = vpop.permute.xlu0 %342
  %vm345 = vcmask 588800
  %v347 = vsel %vm345, %v338, 0
  %vm349 = vcmask 1043456
  %v351 = vsel %vm349, %v334, 0
  %v354 = vsel %vm349, %v335, 0
  %v357 = vsel %vm349, %v336, 0
  %v360 = vsel %vm349, %v337, 0
  %362 = vmatprep.subr.bf16.mxu0 0
  %363 = vmatpush1.bf16.msra.mxu0 0
  %364 = vmatprep.subr.bf16.mxu0 0
  %365 = vmatpush1.bf16.msra.mxu0 0
  %366 = vmatprep.subr.bf16.mxu0 0
  %367 = vmatpush1.bf16.msra.mxu0 0
  %368 = vmatprep.subr.bf16.mxu0 %v354
  %369 = vmatpush1.bf16.msra.mxu0 %v351
  %370 = vmatprep.subr.bf16.mxu0 %v331
  %371 = vmatpush1.bf16.msra.mxu0 %v330
  %372 = vmatprep.subr.bf16.mxu0 %v327
  %373 = vmatpush1.bf16.msra.mxu0 %v326
  %374 = vmatprep.subr.bf16.mxu0 %v323
  %375 = vmatpush1.bf16.msra.mxu0 %v322
  %376 = vmatprep.subr.bf16.mxu0 %v319
  %377 = vmatpush1.bf16.msra.mxu0 %v318
  %378 = vmatprep.subr.bf16.mxu0 0
  %379 = vmatpush2.bf16.msra.mxu0 0
  %380 = vmatprep.subr.bf16.mxu0 0
  %381 = vmatpush2.bf16.msra.mxu0 0
  %382 = vmatprep.subr.bf16.mxu0 0
  %383 = vmatpush2.bf16.msra.mxu0 0
  %384 = vmatprep.subr.bf16.mxu0 0
  %385 = vmatpush2.bf16.msra.mxu0 0
  %386 = vmatprep.subr.bf16.mxu0 0
  %387 = vmatpush2.bf16.msra.mxu0 0
  %388 = vmatprep.subr.bf16.mxu0 0
  %389 = vmatpush2.bf16.msra.mxu0 0
  %390 = vmatprep.subr.bf16.mxu0 0
  %391 = vmatpush2.bf16.msra.mxu0 0
  %392 = vmatprep.subr.bf16.mxu0 0
  %393 = vmatpush2.bf16.msra.mxu0 0
  %394 = vmatprep.mubr.bf16.mxu0 0
  %395 = vmatmul.mubr.bf16.gmra.mxu0 %v347
  %v396 = vpop.f32.mrf.mxu0
  %v397 = vadd.f32 %v343, %v396
  %v398 = vpop.f32.mrf.mxu0
  %v399 = vadd.f32 %v343, %v398
  %v400 = vpop.f32.mrf.mxu0
  %v401 = vpop.f32.mrf.mxu0
  %402 = vdwg.mxu0
  %403 = vmatprep.subr.bf16.mxu0 0
  %404 = vmatpush1.bf16.msra.mxu0 0
  %405 = vmatprep.subr.bf16.mxu0 0
  %406 = vmatpush1.bf16.msra.mxu0 0
  %407 = vmatprep.subr.bf16.mxu0 0
  %408 = vmatpush1.bf16.msra.mxu0 0
  %409 = vmatprep.subr.bf16.mxu0 %v360
  %410 = vmatpush1.bf16.msra.mxu0 %v357
  %411 = vmatprep.subr.bf16.mxu0 %v333
  %412 = vmatpush1.bf16.msra.mxu0 %v332
  %413 = vmatprep.subr.bf16.mxu0 %v329
  %414 = vmatpush1.bf16.msra.mxu0 %v328
  %415 = vmatprep.subr.bf16.mxu0 %v325
  %416 = vmatpush1.bf16.msra.mxu0 %v324
  %417 = vmatprep.subr.bf16.mxu0 %v321
  %418 = vmatpush1.bf16.msra.mxu0 %v320
  %419 = vmatprep.subr.bf16.mxu0 0
  %420 = vmatpush2.bf16.msra.mxu0 0
  %421 = vmatprep.subr.bf16.mxu0 0
  %422 = vmatpush2.bf16.msra.mxu0 0
  %423 = vmatprep.subr.bf16.mxu0 0
  %424 = vmatpush2.bf16.msra.mxu0 0
  %425 = vmatprep.subr.bf16.mxu0 0
  %426 = vmatpush2.bf16.msra.mxu0 0
  %427 = vmatprep.subr.bf16.mxu0 0
  %428 = vmatpush2.bf16.msra.mxu0 0
  %429 = vmatprep.subr.bf16.mxu0 0
  %430 = vmatpush2.bf16.msra.mxu0 0
  %431 = vmatprep.subr.bf16.mxu0 0
  %432 = vmatpush2.bf16.msra.mxu0 0
  %433 = vmatprep.subr.bf16.mxu0 0
  %434 = vmatpush2.bf16.msra.mxu0 0
  %435 = vmatprep.mubr.bf16.mxu0 0
  %436 = vmatmul.mubr.bf16.gmra.mxu0 %v347
  %v437 = vpop.f32.mrf.mxu0
  %v438 = vadd.f32 %v343, %v437
  %v439 = vpop.f32.mrf.mxu0
  %v440 = vadd.f32 %v343, %v439
  %v441 = vpop.f32.mrf.mxu0
  %v442 = vpop.f32.mrf.mxu0
  %443 = vdwg.mxu0
  %v444 = vmax.f32 %v397, 0.0
  %v445 = vmax.f32 %v399, 0.0
  %v446 = vmax.f32 %v438, 0.0
  %v447 = vmax.f32 %v440, 0.0
  %448 = vrot.lane.b32.xlu0 %v444, 17
  %v449 = vpop.permute.xlu0 %448
  %450 = vrot.lane.b32.xlu0 %v445, 17
  %v451 = vpop.permute.xlu0 %450
  %452 = vrot.lane.b32.xlu0 %v446, 17
  %v453 = vpop.permute.xlu0 %452
  %454 = vrot.lane.b32.xlu0 %v447, 17
  %v455 = vpop.permute.xlu0 %454
  %v456 = vsel %vm62, %v453, %v455
  %v457 = vsel %vm62, %v451, %v453
  %v458 = vsel %vm62, %v449, %v451
  %v459 = vsel %vm62, %v455, %v449
  %v460 = vmul.f32 %v459, %v70
  %v461 = vmul.f32 %v458, %v74
  %v462 = vmul.f32 %v457, %v78
  %v463 = vmul.f32 %v456, %v82
  %464 = vrot.lane.b32.xlu0 %v444, 16
  %v465 = vpop.permute.xlu0 %464
  %466 = vrot.lane.b32.xlu0 %v445, 16
  %v467 = vpop.permute.xlu0 %466
  %468 = vrot.lane.b32.xlu0 %v446, 16
  %v469 = vpop.permute.xlu0 %468
  %470 = vrot.lane.b32.xlu0 %v447, 16
  %v471 = vpop.permute.xlu0 %470
  %v472 = vsel %vm95, %v469, %v471
  %v473 = vsel %vm95, %v467, %v469
  %v474 = vsel %vm95, %v465, %v467
  %v475 = vsel %vm95, %v471, %v465
  %v476 = vmul.f32 %v475, %v103
  %v477 = vmul.f32 %v474, %v107
  %v478 = vmul.f32 %v473, %v111
  %v479 = vmul.f32 %v472, %v115
  %480 = vrot.lane.b32.xlu0 %v444, 15
  %v481 = vpop.permute.xlu0 %480
  %482 = vrot.lane.b32.xlu0 %v445, 15
  %v483 = vpop.permute.xlu0 %482
  %484 = vrot.lane.b32.xlu0 %v446, 15
  %v485 = vpop.permute.xlu0 %484
  %486 = vrot.lane.b32.xlu0 %v447, 15
  %v487 = vpop.permute.xlu0 %486
  %v488 = vsel %vm128, %v485, %v487
  %v489 = vsel %vm128, %v483, %v485
  %v490 = vsel %vm128, %v481, %v483
  %v491 = vsel %vm128, %v487, %v481
  %v492 = vmul.f32 %v491, %v136
  %v493 = vmul.f32 %v490, %v140
  %v494 = vmul.f32 %v489, %v144
  %v495 = vmul.f32 %v488, %v148
  %496 = vrot.lane.b32.xlu0 %v444, 1
  %v497 = vpop.permute.xlu0 %496
  %498 = vrot.lane.b32.xlu0 %v445, 1
  %v499 = vpop.permute.xlu0 %498
  %500 = vrot.lane.b32.xlu0 %v446, 1
  %v501 = vpop.permute.xlu0 %500
  %502 = vrot.lane.b32.xlu0 %v447, 1
  %v503 = vpop.permute.xlu0 %502
  %v504 = vsel %vm161, %v501, %v503
  %v505 = vsel %vm161, %v499, %v501
  %v506 = vsel %vm161, %v497, %v499
  %v507 = vsel %vm161, %v503, %v497
  %v508 = vmul.f32 %v507, %v169
  %v509 = vmul.f32 %v506, %v173
  %v510 = vmul.f32 %v505, %v177
  %v511 = vmul.f32 %v504, %v181
  %512 = vrot.lane.b32.xlu0 %v444, 127
  %v513 = vpop.permute.xlu0 %512
  %514 = vrot.lane.b32.xlu0 %v445, 127
  %v515 = vpop.permute.xlu0 %514
  %516 = vrot.lane.b32.xlu0 %v446, 127
  %v517 = vpop.permute.xlu0 %516
  %518 = vrot.lane.b32.xlu0 %v447, 127
  %v519 = vpop.permute.xlu0 %518
  %v520 = vsel %vm194, %v517, %v519
  %v521 = vsel %vm194, %v515, %v517
  %v522 = vsel %vm194, %v513, %v515
  %v523 = vsel %vm194, %v519, %v513
  %v524 = vmul.f32 %v522, %v202
  %v525 = vmul.f32 %v521, %v206
  %v526 = vmul.f32 %v520, %v210
  %v527 = vmul.f32 %v523, %v214
  %528 = vrot.lane.b32.xlu0 %v444, 113
  %v529 = vpop.permute.xlu0 %528
  %530 = vrot.lane.b32.xlu0 %v445, 113
  %v531 = vpop.permute.xlu0 %530
  %532 = vrot.lane.b32.xlu0 %v446, 113
  %v533 = vpop.permute.xlu0 %532
  %534 = vrot.lane.b32.xlu0 %v447, 113
  %v535 = vpop.permute.xlu0 %534
  %v536 = vsel %vm227, %v533, %v535
  %v537 = vsel %vm227, %v531, %v533
  %v538 = vsel %vm227, %v529, %v531
  %v539 = vsel %vm227, %v535, %v529
  %v540 = vmul.f32 %v538, %v235
  %v541 = vmul.f32 %v537, %v239
  %v542 = vmul.f32 %v536, %v243
  %v543 = vmul.f32 %v539, %v247
  %544 = vrot.lane.b32.xlu0 %v444, 112
  %v545 = vpop.permute.xlu0 %544
  %546 = vrot.lane.b32.xlu0 %v445, 112
  %v547 = vpop.permute.xlu0 %546
  %548 = vrot.lane.b32.xlu0 %v446, 112
  %v549 = vpop.permute.xlu0 %548
  %550 = vrot.lane.b32.xlu0 %v447, 112
  %v551 = vpop.permute.xlu0 %550
  %v552 = vsel %vm260, %v549, %v551
  %v553 = vsel %vm260, %v547, %v549
  %v554 = vsel %vm260, %v545, %v547
  %v555 = vsel %vm260, %v551, %v545
  %v556 = vmul.f32 %v554, %v268
  %v557 = vmul.f32 %v553, %v272
  %v558 = vmul.f32 %v552, %v276
  %v559 = vmul.f32 %v555, %v280
  %560 = vrot.lane.b32.xlu0 %v444, 111
  %v561 = vpop.permute.xlu0 %560
  %562 = vrot.lane.b32.xlu0 %v445, 111
  %v563 = vpop.permute.xlu0 %562
  %564 = vrot.lane.b32.xlu0 %v446, 111
  %v565 = vpop.permute.xlu0 %564
  %566 = vrot.lane.b32.xlu0 %v447, 111
  %v567 = vpop.permute.xlu0 %566
  %v568 = vsel %vm293, %v565, %v567
  %v569 = vsel %vm293, %v563, %v565
  %v570 = vsel %vm293, %v561, %v563
  %v571 = vsel %vm293, %v567, %v561
  %v572 = vmul.f32 %v570, %v301
  %v573 = vmul.f32 %v569, %v305
  %v574 = vmul.f32 %v568, %v309
  %v575 = vmul.f32 %v571, %v313
  %v576 = vpack.c.bf16 %v476, %v460
  %v577 = vpack.c.bf16 %v477, %v461
  %v578 = vpack.c.bf16 %v478, %v462
  %v579 = vpack.c.bf16 %v479, %v463
  %v580 = vpack.c.bf16 %v508, %v492
  %v581 = vpack.c.bf16 %v509, %v493
  %v582 = vpack.c.bf16 %v510, %v494
  %v583 = vpack.c.bf16 %v511, %v495
  %v584 = vpack.c.bf16 %v524, %v444
  %v585 = vpack.c.bf16 %v525, %v445
  %v586 = vpack.c.bf16 %v526, %v446
  %v587 = vpack.c.bf16 %v527, %v447
  %v588 = vpack.c.bf16 %v556, %v540
  %v589 = vpack.c.bf16 %v557, %v541
  %v590 = vpack.c.bf16 %v558, %v542
  %v591 = vpack.c.bf16 %v559, %v543
  %v592 = vpack.c.bf16 %v572, %v572
  %v593 = vpack.c.bf16 %v573, %v573
  %v594 = vpack.c.bf16 %v574, %v574
  %v595 = vpack.c.bf16 %v575, %v575
  %v596 = vld [vmem:[%s8 + $0x18] sm:$0xf]
  %v597 = vld [vmem:[%s8 + $0x24] sm:$0xf]
  %v600 = vunpack.c.l.b16 %v596
  %v601 = vunpack.c.l.b16 %v597
  %v602 = vpack.c.b16 %v601, %v600
  %v604 = vsel %vm345, %v602, 0
  %v607 = vsel %vm349, %v592, 0
  %v610 = vsel %vm349, %v593, 0
  %v613 = vsel %vm349, %v594, 0
  %v616 = vsel %vm349, %v595, 0
  %618 = vmatprep.subr.bf16.mxu0 0
  %619 = vmatpush1.bf16.msra.mxu0 0
  %620 = vmatprep.subr.bf16.mxu0 0
  %621 = vmatpush1.bf16.msra.mxu0 0
  %622 = vmatprep.subr.bf16.mxu0 0
  %623 = vmatpush1.bf16.msra.mxu0 0
  %624 = vmatprep.subr.bf16.mxu0 %v610
  %625 = vmatpush1.bf16.msra.mxu0 %v607
  %626 = vmatprep.subr.bf16.mxu0 %v589
  %627 = vmatpush1.bf16.msra.mxu0 %v588
  %628 = vmatprep.subr.bf16.mxu0 %v585
  %629 = vmatpush1.bf16.msra.mxu0 %v584
  %630 = vmatprep.subr.bf16.mxu0 %v581
  %631 = vmatpush1.bf16.msra.mxu0 %v580
  %632 = vmatprep.subr.bf16.mxu0 %v577
  %633 = vmatpush1.bf16.msra.mxu0 %v576
  %634 = vmatprep.subr.bf16.mxu0 0
  %635 = vmatpush2.bf16.msra.mxu0 0
  %636 = vmatprep.subr.bf16.mxu0 0
  %637 = vmatpush2.bf16.msra.mxu0 0
  %638 = vmatprep.subr.bf16.mxu0 0
  %639 = vmatpush2.bf16.msra.mxu0 0
  %640 = vmatprep.subr.bf16.mxu0 0
  %641 = vmatpush2.bf16.msra.mxu0 0
  %642 = vmatprep.subr.bf16.mxu0 0
  %643 = vmatpush2.bf16.msra.mxu0 0
  %644 = vmatprep.subr.bf16.mxu0 0
  %645 = vmatpush2.bf16.msra.mxu0 0
  %646 = vmatprep.subr.bf16.mxu0 0
  %647 = vmatpush2.bf16.msra.mxu0 0
  %648 = vmatprep.subr.bf16.mxu0 0
  %649 = vmatpush2.bf16.msra.mxu0 0
  %650 = vmatprep.mubr.bf16.mxu0 0
  %651 = vmatmul.mubr.bf16.gmra.mxu0 %v604
  %v652 = vpop.f32.mrf.mxu0
  %v653 = vadd.f32 0.0, %v652
  %v654 = vpop.f32.mrf.mxu0
  %v655 = vadd.f32 0.0, %v654
  %v656 = vpop.f32.mrf.mxu0
  %v657 = vadd.f32 0.0, %v656
  %v658 = vpop.f32.mrf.mxu0
  %v659 = vadd.f32 0.0, %v658
  %660 = vdwg.mxu0
  %661 = vmatprep.subr.bf16.mxu0 0
  %662 = vmatpush1.bf16.msra.mxu0 0
  %663 = vmatprep.subr.bf16.mxu0 0
  %664 = vmatpush1.bf16.msra.mxu0 0
  %665 = vmatprep.subr.bf16.mxu0 0
  %666 = vmatpush1.bf16.msra.mxu0 0
  %667 = vmatprep.subr.bf16.mxu0 %v616
  %668 = vmatpush1.bf16.msra.mxu0 %v613
  %669 = vmatprep.subr.bf16.mxu0 %v591
  %670 = vmatpush1.bf16.msra.mxu0 %v590
  %671 = vmatprep.subr.bf16.mxu0 %v587
  %672 = vmatpush1.bf16.msra.mxu0 %v586
  %673 = vmatprep.subr.bf16.mxu0 %v583
  %674 = vmatpush1.bf16.msra.mxu0 %v582
  %675 = vmatprep.subr.bf16.mxu0 %v579
  %676 = vmatpush1.bf16.msra.mxu0 %v578
  %677 = vmatprep.subr.bf16.mxu0 0
  %678 = vmatpush2.bf16.msra.mxu0 0
  %679 = vmatprep.subr.bf16.mxu0 0
  %680 = vmatpush2.bf16.msra.mxu0 0
  %681 = vmatprep.subr.bf16.mxu0 0
  %682 = vmatpush2.bf16.msra.mxu0 0
  %683 = vmatprep.subr.bf16.mxu0 0
  %684 = vmatpush2.bf16.msra.mxu0 0
  %685 = vmatprep.subr.bf16.mxu0 0
  %686 = vmatpush2.bf16.msra.mxu0 0
  %687 = vmatprep.subr.bf16.mxu0 0
  %688 = vmatpush2.bf16.msra.mxu0 0
  %689 = vmatprep.subr.bf16.mxu0 0
  %690 = vmatpush2.bf16.msra.mxu0 0
  %691 = vmatprep.subr.bf16.mxu0 0
  %692 = vmatpush2.bf16.msra.mxu0 0
  %693 = vmatprep.mubr.bf16.mxu0 0
  %694 = vmatmul.mubr.bf16.gmra.mxu0 %v604
  %v695 = vpop.f32.mrf.mxu0
  %v696 = vadd.f32 0.0, %v695
  %v697 = vpop.f32.mrf.mxu0
  %v698 = vadd.f32 0.0, %v697
  %v699 = vpop.f32.mrf.mxu0
  %v700 = vadd.f32 0.0, %v699
  %v701 = vpop.f32.mrf.mxu0
  %v702 = vadd.f32 0.0, %v701
  %703 = vdwg.mxu0
  %v704 = vpack.c.bf16 %v657, %v653
  %v705 = vpack.c.bf16 %v659, %v655
  %v706 = vpack.c.bf16 %v700, %v696
  %v707 = vpack.c.bf16 %v702, %v698
  %v708 = vld [vmem:[%s4] sm:$0xf]
  %v709 = vld [vmem:[%s4 + $0x4] sm:$0xf]
  %v710 = vld [vmem:[%s4 + $0x8] sm:$0xf]
  %v711 = vld [vmem:[%s4 + $0xc] sm:$0xf]
  %v712 = vld [vmem:[%s4 + $0x10] sm:$0xf]
  %v713 = vld [vmem:[%s4 + $0x14] sm:$0xf]
  %v714 = vld [vmem:[%s4 + $0x18] sm:$0xf]
  %v715 = vld [vmem:[%s4 + $0x1c] sm:$0xf]
  %v716 = vld [vmem:[%s4 + $0x20] sm:$0xf]
  %v717 = vld [vmem:[%s4 + $0x24] sm:$0xf]
  %v718 = vld [vmem:[%s4 + $0x28] sm:$0xf]
  %v719 = vld [vmem:[%s4 + $0x2c] sm:$0xf]
  %v720 = vld [vmem:[%s4 + $0x30] sm:$0xf]
  %v721 = vld [vmem:[%s4 + $0x34] sm:$0xf]
  %v722 = vld [vmem:[%s4 + $0x38] sm:$0xf]
  %v723 = vld [vmem:[%s4 + $0x3c] sm:$0xf]
  %v724 = vld [vmem:[%s4 + $0x40] sm:$0xf]
  %v725 = vld [vmem:[%s4 + $0x44] sm:$0xf]
  %v726 = vld [vmem:[%s4 + $0x48] sm:$0xf]
  %v727 = vld [vmem:[%s4 + $0x4c] sm:$0xf]
  %v728 = vld [vmem:[%s4 + $0x50] sm:$0xf]
  %v729 = vld [vmem:[%s4 + $0x54] sm:$0xf]
  %v730 = vld [vmem:[%s4 + $0x58] sm:$0xf]
  %v731 = vld [vmem:[%s4 + $0x5c] sm:$0xf]
  %v732 = vld [vmem:[%s4 + $0x60] sm:$0xf]
  %v733 = vld [vmem:[%s4 + $0x64] sm:$0xf]
  %v734 = vld [vmem:[%s4 + $0x68] sm:$0xf]
  %v735 = vld [vmem:[%s4 + $0x6c] sm:$0xf]
  %v736 = vld [vmem:[%s4 + $0x70] sm:$0xf]
  %v737 = vld [vmem:[%s4 + $0x74] sm:$0xf]
  %v738 = vld [vmem:[%s4 + $0x78] sm:$0xf]
  %v739 = vld [vmem:[%s4 + $0x7c] sm:$0xf]
  %v740 = vld [vmem:[%s4 + $0x80] sm:$0xf]
  %v741 = vld [vmem:[%s4 + $0x84] sm:$0xf]
  %v742 = vld [vmem:[%s4 + $0x88] sm:$0xf]
  %v743 = vld [vmem:[%s4 + $0x8c] sm:$0xf]
  %v744 = vld [vmem:[%s4 + $0x90] sm:$0xf]
  %v745 = vld [vmem:[%s4 + $0x94] sm:$0xf]
  %v746 = vld [vmem:[%s4 + $0x98] sm:$0xf]
  %v747 = vld [vmem:[%s4 + $0x9c] sm:$0xf]
  %v748 = vld [vmem:[%s4 + $0xa0] sm:$0xf]
  %v749 = vld [vmem:[%s4 + $0xa4] sm:$0xf]
  %v750 = vld [vmem:[%s4 + $0xa8] sm:$0xf]
  %v751 = vld [vmem:[%s4 + $0xac] sm:$0xf]
  %v752 = vld [vmem:[%s4 + $0xb0] sm:$0xf]
  %v753 = vld [vmem:[%s4 + $0xb4] sm:$0xf]
  %v754 = vld [vmem:[%s4 + $0xb8] sm:$0xf]
  %v755 = vld [vmem:[%s4 + $0xbc] sm:$0xf]
  %v756 = vld [vmem:[%s4 + $0xc0] sm:$0xf]
  %v757 = vld [vmem:[%s4 + $0xc4] sm:$0xf]
  %v758 = vld [vmem:[%s4 + $0xc8] sm:$0xf]
  %v759 = vld [vmem:[%s4 + $0xcc] sm:$0xf]
  %v760 = vld [vmem:[%s4 + $0xd0] sm:$0xf]
  %v761 = vld [vmem:[%s4 + $0xd4] sm:$0xf]
  %v762 = vld [vmem:[%s4 + $0xd8] sm:$0xf]
  %v763 = vld [vmem:[%s4 + $0xdc] sm:$0xf]
  %v764 = vld [vmem:[%s4 + $0xe0] sm:$0xf]
  %v765 = vld [vmem:[%s4 + $0xe4] sm:$0xf]
  %v766 = vld [vmem:[%s4 + $0xe8] sm:$0xf]
  %v767 = vld [vmem:[%s4 + $0xec] sm:$0xf]
  %v768 = vld [vmem:[%s4 + $0xf0] sm:$0xf]
  %v769 = vld [vmem:[%s4 + $0xf4] sm:$0xf]
  %v770 = vld [vmem:[%s4 + $0xf8] sm:$0xf]
  %v771 = vld [vmem:[%s4 + $0xfc] sm:$0xf]
  %v772 = vld [vmem:[%s9 + $0x10] sm:$0xff]
  %v773 = vld [vmem:[%s9 + $0x18] sm:$0xff]
  %775 = vset.pattern.permute.xlu0 0
  %776 = vperm.xlu0 %775, %v772
  %v777 = vpop.permute.xlu0 %776
  %780 = vset.pattern.permute.xlu0 0
  %781 = vperm.xlu0 %780, %v773
  %v782 = vpop.permute.xlu0 %781
  %v848 = vunpack.c.l.b16 %v708
  %v849 = vunpack.c.l.b16 %v709
  %v850 = vunpack.c.l.b16 %v710
  %v851 = vunpack.c.l.b16 %v711
  %v852 = vunpack.c.l.b16 %v712
  %v853 = vunpack.c.l.b16 %v713
  %v854 = vunpack.c.l.b16 %v714
  %v855 = vunpack.c.l.b16 %v715
  %v856 = vunpack.c.l.b16 %v716
  %v857 = vunpack.c.l.b16 %v717
  %v858 = vunpack.c.l.b16 %v718
  %v859 = vunpack.c.l.b16 %v719
  %v860 = vunpack.c.l.b16 %v720
  %v861 = vunpack.c.l.b16 %v721
  %v862 = vunpack.c.l.b16 %v722
  %v863 = vunpack.c.l.b16 %v723
  %v864 = vunpack.c.l.b16 %v724
  %v865 = vunpack.c.l.b16 %v725
  %v866 = vunpack.c.l.b16 %v726
  %v867 = vunpack.c.l.b16 %v727
  %v868 = vunpack.c.l.b16 %v728
  %v869 = vunpack.c.l.b16 %v729
  %v870 = vunpack.c.l.b16 %v730
  %v871 = vunpack.c.l.b16 %v731
  %v872 = vunpack.c.l.b16 %v732
  %v873 = vunpack.c.l.b16 %v733
  %v874 = vunpack.c.l.b16 %v734
  %v875 = vunpack.c.l.b16 %v735
  %v876 = vunpack.c.l.b16 %v736
  %v877 = vunpack.c.l.b16 %v737
  %v878 = vunpack.c.l.b16 %v738
  %v879 = vunpack.c.l.b16 %v739
  %v880 = vunpack.c.l.b16 %v740
  %v881 = vunpack.c.l.b16 %v741
  %v882 = vunpack.c.l.b16 %v742
  %v883 = vunpack.c.l.b16 %v743
  %v884 = vunpack.c.l.b16 %v744
  %v885 = vunpack.c.l.b16 %v745
  %v886 = vunpack.c.l.b16 %v746
  %v887 = vunpack.c.l.b16 %v747
  %v888 = vunpack.c.l.b16 %v748
  %v889 = vunpack.c.l.b16 %v749
  %v890 = vunpack.c.l.b16 %v750
  %v891 = vunpack.c.l.b16 %v751
  %v892 = vunpack.c.l.b16 %v752
  %v893 = vunpack.c.l.b16 %v753
  %v894 = vunpack.c.l.b16 %v754
  %v895 = vunpack.c.l.b16 %v755
  %v896 = vunpack.c.l.b16 %v756
  %v897 = vunpack.c.l.b16 %v757
  %v898 = vunpack.c.l.b16 %v758
  %v899 = vunpack.c.l.b16 %v759
  %v900 = vunpack.c.l.b16 %v760
  %v901 = vunpack.c.l.b16 %v761
  %v902 = vunpack.c.l.b16 %v762
  %v903 = vunpack.c.l.b16 %v763
  %v904 = vunpack.c.l.b16 %v764
  %v905 = vunpack.c.l.b16 %v765
  %v906 = vunpack.c.l.b16 %v766
  %v907 = vunpack.c.l.b16 %v767
  %v908 = vunpack.c.l.b16 %v768
  %v909 = vunpack.c.l.b16 %v769
  %v910 = vunpack.c.l.b16 %v770
  %v911 = vunpack.c.l.b16 %v771
  %v912 = vpack.c.b16 %v849, %v848
  %v913 = vpack.c.b16 %v851, %v850
  %v914 = vpack.c.b16 %v853, %v852
  %v915 = vpack.c.b16 %v855, %v854
  %v916 = vpack.c.b16 %v857, %v856
  %v917 = vpack.c.b16 %v859, %v858
  %v918 = vpack.c.b16 %v861, %v860
  %v919 = vpack.c.b16 %v863, %v862
  %v920 = vpack.c.b16 %v865, %v864
  %v921 = vpack.c.b16 %v867, %v866
  %v922 = vpack.c.b16 %v869, %v868
  %v923 = vpack.c.b16 %v871, %v870
  %v924 = vpack.c.b16 %v873, %v872
  %v925 = vpack.c.b16 %v875, %v874
  %v926 = vpack.c.b16 %v877, %v876
  %v927 = vpack.c.b16 %v879, %v878
  %v928 = vpack.c.b16 %v881, %v880
  %v929 = vpack.c.b16 %v883, %v882
  %v930 = vpack.c.b16 %v885, %v884
  %v931 = vpack.c.b16 %v887, %v886
  %v932 = vpack.c.b16 %v889, %v888
  %v933 = vpack.c.b16 %v891, %v890
  %v934 = vpack.c.b16 %v893, %v892
  %v935 = vpack.c.b16 %v895, %v894
  %v936 = vpack.c.b16 %v897, %v896
  %v937 = vpack.c.b16 %v899, %v898
  %v938 = vpack.c.b16 %v901, %v900
  %v939 = vpack.c.b16 %v903, %v902
  %v940 = vpack.c.b16 %v905, %v904
  %v941 = vpack.c.b16 %v907, %v906
  %v942 = vpack.c.b16 %v909, %v908
  %v943 = vpack.c.b16 %v911, %v910
  %976 = vmatprep.subr.bf16.mxu0 0
  %977 = vmatpush1.bf16.msra.mxu0 %v919
  %978 = vmatprep.subr.bf16.mxu0 0
  %979 = vmatpush1.bf16.msra.mxu0 %v918
  %980 = vmatprep.subr.bf16.mxu0 0
  %981 = vmatpush1.bf16.msra.mxu0 %v917
  %982 = vmatprep.subr.bf16.mxu0 0
  %983 = vmatpush1.bf16.msra.mxu0 %v916
  %984 = vmatprep.subr.bf16.mxu0 0
  %985 = vmatpush1.bf16.msra.mxu0 %v915
  %986 = vmatprep.subr.bf16.mxu0 0
  %987 = vmatpush1.bf16.msra.mxu0 %v914
  %988 = vmatprep.subr.bf16.mxu0 0
  %989 = vmatpush1.bf16.msra.mxu0 %v913
  %990 = vmatprep.subr.bf16.mxu0 0
  %991 = vmatpush1.bf16.msra.mxu0 %v912
  %992 = vmatprep.subr.bf16.mxu0 0
  %993 = vmatpush2.bf16.msra.mxu0 %v927
  %994 = vmatprep.subr.bf16.mxu0 0
  %995 = vmatpush2.bf16.msra.mxu0 %v926
  %996 = vmatprep.subr.bf16.mxu0 0
  %997 = vmatpush2.bf16.msra.mxu0 %v925
  %998 = vmatprep.subr.bf16.mxu0 0
  %999 = vmatpush2.bf16.msra.mxu0 %v924
  %1000 = vmatprep.subr.bf16.mxu0 0
  %1001 = vmatpush2.bf16.msra.mxu0 %v923
  %1002 = vmatprep.subr.bf16.mxu0 0
  %1003 = vmatpush2.bf16.msra.mxu0 %v922
  %1004 = vmatprep.subr.bf16.mxu0 0
  %1005 = vmatpush2.bf16.msra.mxu0 %v921
  %1006 = vmatprep.subr.bf16.mxu0 0
  %1007 = vmatpush2.bf16.msra.mxu0 %v920
  %1008 = vmatprep.mubr.bf16.mxu0 %v705
  %1009 = vmatmul.mubr.bf16.gmra.mxu0 %v704
  %v1010 = vpop.f32.mrf.mxu0
  %v1011 = vadd.f32 %v777, %v1010
  %v1012 = vpop.f32.mrf.mxu0
  %v1013 = vpop.f32.mrf.mxu0
  %v1014 = vadd.f32 %v782, %v1013
  %v1015 = vpop.f32.mrf.mxu0
  %1016 = vdwg.mxu0
  %1017 = vmatprep.subr.bf16.mxu0 0
  %1018 = vmatpush1.bf16.msra.mxu0 %v935
  %1019 = vmatprep.subr.bf16.mxu0 0
  %1020 = vmatpush1.bf16.msra.mxu0 %v934
  %1021 = vmatprep.subr.bf16.mxu0 0
  %1022 = vmatpush1.bf16.msra.mxu0 %v933
  %1023 = vmatprep.subr.bf16.mxu0 0
  %1024 = vmatpush1.bf16.msra.mxu0 %v932
  %1025 = vmatprep.subr.bf16.mxu0 0
  %1026 = vmatpush1.bf16.msra.mxu0 %v931
  %1027 = vmatprep.subr.bf16.mxu0 0
  %1028 = vmatpush1.bf16.msra.mxu0 %v930
  %1029 = vmatprep.subr.bf16.mxu0 0
  %1030 = vmatpush1.bf16.msra.mxu0 %v929
  %1031 = vmatprep.subr.bf16.mxu0 0
  %1032 = vmatpush1.bf16.msra.mxu0 %v928
  %1033 = vmatprep.subr.bf16.mxu0 0
  %1034 = vmatpush2.bf16.msra.mxu0 %v943
  %1035 = vmatprep.subr.bf16.mxu0 0
  %1036 = vmatpush2.bf16.msra.mxu0 %v942
  %1037 = vmatprep.subr.bf16.mxu0 0
  %1038 = vmatpush2.bf16.msra.mxu0 %v941
  %1039 = vmatprep.subr.bf16.mxu0 0
  %1040 = vmatpush2.bf16.msra.mxu0 %v940
  %1041 = vmatprep.subr.bf16.mxu0 0
  %1042 = vmatpush2.bf16.msra.mxu0 %v939
  %1043 = vmatprep.subr.bf16.mxu0 0
  %1044 = vmatpush2.bf16.msra.mxu0 %v938
  %1045 = vmatprep.subr.bf16.mxu0 0
  %1046 = vmatpush2.bf16.msra.mxu0 %v937
  %1047 = vmatprep.subr.bf16.mxu0 0
  %1048 = vmatpush2.bf16.msra.mxu0 %v936
  %1049 = vmatprep.mubr.bf16.mxu0 %v707
  %1050 = vmatmul.mubr.bf16.gmra.mxu0 %v706
  %v1051 = vpop.f32.mrf.mxu0
  %v1052 = vadd.f32 %v1011, %v1051
  %v1053 = vpop.f32.mrf.mxu0
  %v1054 = vpop.f32.mrf.mxu0
  %v1055 = vadd.f32 %v1014, %v1054
  %v1056 = vpop.f32.mrf.mxu0
  %1057 = vdwg.mxu0
  %v1058 = vmax.f32 %v1052, 0.0
  %v1059 = vmax.f32 %v1055, 0.0
  %1060 = vrot.lane.b32.xlu0 %v1058, 9
  %v1061 = vpop.permute.xlu0 %1060
  %1062 = vrot.lane.b32.xlu0 %v1059, 9
  %v1063 = vpop.permute.xlu0 %1062
  %v1064 = vlaneseq
  %v1065 = vshrl.u32 %v1064, 7
  %v1066 = vsub.s32 0, %v1065
  %v1067 = vrot.slane %v44, %v1066
  %v1068 = vmul.f32 %v1061, %v1067
  %v1069 = vmul.f32 %v1063, %v1067
  %1070 = vrot.lane.b32.xlu0 %v1058, 8
  %v1071 = vpop.permute.xlu0 %1070
  %1072 = vrot.lane.b32.xlu0 %v1059, 8
  %v1073 = vpop.permute.xlu0 %1072
  %v1074 = vlaneseq
  %v1075 = vshrl.u32 %v1074, 7
  %v1076 = vsub.s32 1, %v1075
  %v1077 = vrot.slane %v44, %v1076
  %v1078 = vmul.f32 %v1071, %v1077
  %v1079 = vmul.f32 %v1073, %v1077
  %1080 = vrot.lane.b32.xlu0 %v1058, 7
  %v1081 = vpop.permute.xlu0 %1080
  %1082 = vrot.lane.b32.xlu0 %v1059, 7
  %v1083 = vpop.permute.xlu0 %1082
  %v1084 = vlaneseq
  %v1085 = vshrl.u32 %v1084, 7
  %v1086 = vsub.s32 2, %v1085
  %v1087 = vrot.slane %v44, %v1086
  %v1088 = vmul.f32 %v1081, %v1087
  %v1089 = vmul.f32 %v1083, %v1087
  %1090 = vrot.lane.b32.xlu0 %v1058, 1
  %v1091 = vpop.permute.xlu0 %1090
  %1092 = vrot.lane.b32.xlu0 %v1059, 1
  %v1093 = vpop.permute.xlu0 %1092
  %v1094 = vlaneseq
  %v1095 = vshrl.u32 %v1094, 7
  %v1096 = vsub.s32 3, %v1095
  %v1097 = vrot.slane %v44, %v1096
  %v1098 = vmul.f32 %v1091, %v1097
  %v1099 = vmul.f32 %v1093, %v1097
  %1100 = vrot.lane.b32.xlu0 %v1058, 127
  %v1101 = vpop.permute.xlu0 %1100
  %1102 = vrot.lane.b32.xlu0 %v1059, 127
  %v1103 = vpop.permute.xlu0 %1102
  %v1104 = vlaneseq
  %v1105 = vshrl.u32 %v1104, 7
  %v1106 = vsub.s32 5, %v1105
  %v1107 = vrot.slane %v44, %v1106
  %v1108 = vmul.f32 %v1101, %v1107
  %v1109 = vmul.f32 %v1103, %v1107
  %1110 = vrot.lane.b32.xlu0 %v1058, 121
  %v1111 = vpop.permute.xlu0 %1110
  %1112 = vrot.lane.b32.xlu0 %v1059, 121
  %v1113 = vpop.permute.xlu0 %1112
  %v1114 = vlaneseq
  %v1115 = vshrl.u32 %v1114, 7
  %v1116 = vsub.s32 6, %v1115
  %v1117 = vrot.slane %v44, %v1116
  %v1118 = vmul.f32 %v1111, %v1117
  %v1119 = vmul.f32 %v1113, %v1117
  %1120 = vrot.lane.b32.xlu0 %v1058, 120
  %v1121 = vpop.permute.xlu0 %1120
  %1122 = vrot.lane.b32.xlu0 %v1059, 120
  %v1123 = vpop.permute.xlu0 %1122
  %v1124 = vlaneseq
  %v1125 = vshrl.u32 %v1124, 7
  %v1126 = vsub.s32 7, %v1125
  %v1127 = vrot.slane %v44, %v1126
  %v1128 = vmul.f32 %v1121, %v1127
  %v1129 = vmul.f32 %v1123, %v1127
  %1130 = vrot.lane.b32.xlu0 %v1058, 119
  %v1131 = vpop.permute.xlu0 %1130
  %1132 = vrot.lane.b32.xlu0 %v1059, 119
  %v1133 = vpop.permute.xlu0 %1132
  %v1134 = vlaneseq
  %v1135 = vshrl.u32 %v1134, 7
  %v1136 = vsub.s32 0, %v1135
  %v1137 = vrot.slane %v45, %v1136
  %v1138 = vmul.f32 %v1131, %v1137
  %v1139 = vmul.f32 %v1133, %v1137
  %v1140 = vpack.c.bf16 %v1069, %v1068
  %v1141 = vpack.c.bf16 %v1079, %v1078
  %v1142 = vpack.c.bf16 %v1089, %v1088
  %v1143 = vpack.c.bf16 %v1099, %v1098
  %v1144 = vpack.c.bf16 %v1059, %v1058
  %v1145 = vpack.c.bf16 %v1109, %v1108
  %v1146 = vpack.c.bf16 %v1119, %v1118
  %v1147 = vpack.c.bf16 %v1129, %v1128
  %v1148 = vpack.c.bf16 %v1139, %v1138
  %v1149 = vld [vmem:[%s8 + $0x30] sm:$0xff]
  %v1150 = vld [vmem:[%s8 + $0x3c] sm:$0xff]
  %v1151 = vld [vmem:[%s8 + $0x48] sm:$0xff]
  %v1152 = vld [vmem:[%s8 + $0x54] sm:$0xff]
  %v1157 = vunpack.c.l.b16 %v1149
  %v1158 = vunpack.c.h.b16 %v1149
  %v1159 = vunpack.c.l.b16 %v1150
  %v1160 = vunpack.c.h.b16 %v1150
  %v1161 = vunpack.c.l.b16 %v1151
  %v1162 = vunpack.c.h.b16 %v1151
  %v1163 = vunpack.c.l.b16 %v1152
  %v1164 = vunpack.c.h.b16 %v1152
  %v1165 = vpack.c.b16 %v1159, %v1157
  %v1166 = vpack.c.b16 %v1160, %v1158
  %v1167 = vpack.c.b16 %v1163, %v1161
  %v1168 = vpack.c.b16 %v1164, %v1162
  %vm1171 = vcmask 130048
  %v1173 = vsel %vm1171, %v1166, 0
  %v1176 = vsel %vm1171, %v1168, 0
  %1178 = vmatprep.subr.bf16.mxu0 0
  %1179 = vmatpush1.bf16.msra.mxu0 %v1147
  %1180 = vmatprep.subr.bf16.mxu0 0
  %1181 = vmatpush1.bf16.msra.mxu0 %v1146
  %1182 = vmatprep.subr.bf16.mxu0 0
  %1183 = vmatpush1.bf16.msra.mxu0 %v1145
  %1184 = vmatprep.subr.bf16.mxu0 0
  %1185 = vmatpush1.bf16.msra.mxu0 %v1144
  %1186 = vmatprep.subr.bf16.mxu0 0
  %1187 = vmatpush1.bf16.msra.mxu0 %v1143
  %1188 = vmatprep.subr.bf16.mxu0 0
  %1189 = vmatpush1.bf16.msra.mxu0 %v1142
  %1190 = vmatprep.subr.bf16.mxu0 0
  %1191 = vmatpush1.bf16.msra.mxu0 %v1141
  %1192 = vmatprep.subr.bf16.mxu0 0
  %1193 = vmatpush1.bf16.msra.mxu0 %v1140
  %1194 = vmatprep.subr.bf16.mxu0 0
  %1195 = vmatpush2.bf16.msra.mxu0 0
  %1196 = vmatprep.subr.bf16.mxu0 0
  %1197 = vmatpush2.bf16.msra.mxu0 0
  %1198 = vmatprep.subr.bf16.mxu0 0
  %1199 = vmatpush2.bf16.msra.mxu0 0
  %1200 = vmatprep.subr.bf16.mxu0 0
  %1201 = vmatpush2.bf16.msra.mxu0 0
  %1202 = vmatprep.subr.bf16.mxu0 0
  %1203 = vmatpush2.bf16.msra.mxu0 0
  %1204 = vmatprep.subr.bf16.mxu0 0
  %1205 = vmatpush2.bf16.msra.mxu0 0
  %1206 = vmatprep.subr.bf16.mxu0 0
  %1207 = vmatpush2.bf16.msra.mxu0 0
  %1208 = vmatprep.subr.bf16.mxu0 0
  %1209 = vmatpush2.bf16.msra.mxu0 %v1148
  %1210 = vmatprep.mubr.bf16.mxu0 %v1173
  %1211 = vmatmul.mubr.bf16.gmra.mxu0 %v1165
  %v1212 = vpop.f32.mrf.mxu0
  %v1213 = vadd.f32 0.0, %v1212
  %v1214 = vpop.f32.mrf.mxu0
  %v1215 = vpop.f32.mrf.mxu0
  %v1216 = vadd.f32 0.0, %v1215
  %v1217 = vpop.f32.mrf.mxu0
  %1218 = vmatprep.mubr.bf16.mxu0 %v1176
  %1219 = vmatmul.mubr.bf16.gmra.mxu0 %v1167
  %v1220 = vpop.f32.mrf.mxu0
  %v1221 = vadd.f32 0.0, %v1220
  %v1222 = vpop.f32.mrf.mxu0
  %v1223 = vpop.f32.mrf.mxu0
  %v1224 = vadd.f32 0.0, %v1223
  %v1225 = vpop.f32.mrf.mxu0
  %1226 = vdwg.mxu0
  %v1227 = vpack.c.bf16 %v1216, %v1213
  %v1228 = vpack.c.bf16 %v1224, %v1221
  %v1229 = vld [vmem:[%s5] sm:$0xf]
  %v1230 = vld [vmem:[%s5 + $0x4] sm:$0xf]
  %v1231 = vld [vmem:[%s5 + $0x8] sm:$0xf]
  %v1232 = vld [vmem:[%s5 + $0xc] sm:$0xf]
  %v1233 = vld [vmem:[%s5 + $0x10] sm:$0xf]
  %v1234 = vld [vmem:[%s5 + $0x14] sm:$0xf]
  %v1235 = vld [vmem:[%s5 + $0x18] sm:$0xf]
  %v1236 = vld [vmem:[%s5 + $0x1c] sm:$0xf]
  %v1237 = vld [vmem:[%s5 + $0x20] sm:$0xf]
  %v1238 = vld [vmem:[%s5 + $0x24] sm:$0xf]
  %v1239 = vld [vmem:[%s5 + $0x28] sm:$0xf]
  %v1240 = vld [vmem:[%s5 + $0x2c] sm:$0xf]
  %v1241 = vld [vmem:[%s5 + $0x30] sm:$0xf]
  %v1242 = vld [vmem:[%s5 + $0x34] sm:$0xf]
  %v1243 = vld [vmem:[%s5 + $0x38] sm:$0xf]
  %v1244 = vld [vmem:[%s5 + $0x3c] sm:$0xf]
  %v1245 = vld [vmem:[%s9 + $0x20] sm:$0xff]
  %v1246 = vld [vmem:[%s9 + $0x28] sm:$0xff]
  %v1247 = vld [vmem:[%s9 + $0x30] sm:$0xff]
  %v1248 = vld [vmem:[%s9 + $0x38] sm:$0xff]
  %1250 = vset.pattern.permute.xlu0 0
  %1251 = vperm.xlu0 %1250, %v1245
  %v1252 = vpop.permute.xlu0 %1251
  %1255 = vset.pattern.permute.xlu0 0
  %1256 = vperm.xlu0 %1255, %v1246
  %v1257 = vpop.permute.xlu0 %1256
  %1260 = vset.pattern.permute.xlu0 0
  %1261 = vperm.xlu0 %1260, %v1247
  %v1262 = vpop.permute.xlu0 %1261
  %1265 = vset.pattern.permute.xlu0 0
  %1266 = vperm.xlu0 %1265, %v1248
  %v1267 = vpop.permute.xlu0 %1266
  %v1285 = vunpack.c.l.b16 %v1229
  %v1286 = vunpack.c.l.b16 %v1230
  %v1287 = vunpack.c.l.b16 %v1231
  %v1288 = vunpack.c.l.b16 %v1232
  %v1289 = vunpack.c.l.b16 %v1233
  %v1290 = vunpack.c.l.b16 %v1234
  %v1291 = vunpack.c.l.b16 %v1235
  %v1292 = vunpack.c.l.b16 %v1236
  %v1293 = vunpack.c.l.b16 %v1237
  %v1294 = vunpack.c.l.b16 %v1238
  %v1295 = vunpack.c.l.b16 %v1239
  %v1296 = vunpack.c.l.b16 %v1240
  %v1297 = vunpack.c.l.b16 %v1241
  %v1298 = vunpack.c.l.b16 %v1242
  %v1299 = vunpack.c.l.b16 %v1243
  %v1300 = vunpack.c.l.b16 %v1244
  %v1301 = vpack.c.b16 %v1286, %v1285
  %v1302 = vpack.c.b16 %v1288, %v1287
  %v1303 = vpack.c.b16 %v1290, %v1289
  %v1304 = vpack.c.b16 %v1292, %v1291
  %v1305 = vpack.c.b16 %v1294, %v1293
  %v1306 = vpack.c.b16 %v1296, %v1295
  %v1307 = vpack.c.b16 %v1298, %v1297
  %v1308 = vpack.c.b16 %v1300, %v1299
  %1317 = vmatprep.subr.bf16.mxu0 0
  %1318 = vmatpush1.bf16.msra.mxu0 %v1308
  %1319 = vmatprep.subr.bf16.mxu0 0
  %1320 = vmatpush1.bf16.msra.mxu0 %v1307
  %1321 = vmatprep.subr.bf16.mxu0 0
  %1322 = vmatpush1.bf16.msra.mxu0 %v1306
  %1323 = vmatprep.subr.bf16.mxu0 0
  %1324 = vmatpush1.bf16.msra.mxu0 %v1305
  %1325 = vmatprep.subr.bf16.mxu0 0
  %1326 = vmatpush1.bf16.msra.mxu0 %v1304
  %1327 = vmatprep.subr.bf16.mxu0 0
  %1328 = vmatpush1.bf16.msra.mxu0 %v1303
  %1329 = vmatprep.subr.bf16.mxu0 0
  %1330 = vmatpush1.bf16.msra.mxu0 %v1302
  %1331 = vmatprep.subr.bf16.mxu0 0
  %1332 = vmatpush1.bf16.msra.mxu0 %v1301
  %1333 = vmatprep.subr.bf16.mxu0 0
  %1334 = vmatpush2.bf16.msra.mxu0 0
  %1335 = vmatprep.subr.bf16.mxu0 0
  %1336 = vmatpush2.bf16.msra.mxu0 0
  %1337 = vmatprep.subr.bf16.mxu0 0
  %1338 = vmatpush2.bf16.msra.mxu0 0
  %1339 = vmatprep.subr.bf16.mxu0 0
  %1340 = vmatpush2.bf16.msra.mxu0 0
  %1341 = vmatprep.subr.bf16.mxu0 0
  %1342 = vmatpush2.bf16.msra.mxu0 0
  %1343 = vmatprep.subr.bf16.mxu0 0
  %1344 = vmatpush2.bf16.msra.mxu0 0
  %1345 = vmatprep.subr.bf16.mxu0 0
  %1346 = vmatpush2.bf16.msra.mxu0 0
  %1347 = vmatprep.subr.bf16.mxu0 0
  %1348 = vmatpush2.bf16.msra.mxu0 0
  %1349 = vmatprep.mubr.bf16.mxu0 0
  %1350 = vmatmul.mubr.bf16.gmra.mxu0 %v1227
  %v1351 = vpop.f32.mrf.mxu0
  %v1352 = vadd.f32 %v1252, %v1351
  %v1353 = vpop.f32.mrf.mxu0
  %v1354 = vpop.f32.mrf.mxu0
  %v1355 = vadd.f32 %v1257, %v1354
  %v1356 = vpop.f32.mrf.mxu0
  %1357 = vmatprep.mubr.bf16.mxu0 0
  %1358 = vmatmul.mubr.bf16.gmra.mxu0 %v1228
  %v1359 = vpop.f32.mrf.mxu0
  %v1360 = vadd.f32 %v1262, %v1359
  %v1361 = vpop.f32.mrf.mxu0
  %v1362 = vpop.f32.mrf.mxu0
  %v1363 = vadd.f32 %v1267, %v1362
  %v1364 = vpop.f32.mrf.mxu0
  %1365 = vdwg.mxu0
  %v1366 = vmax.f32 %v1352, 0.0
  %v1367 = vmax.f32 %v1355, 0.0
  %v1368 = vmax.f32 %v1360, 0.0
  %v1369 = vmax.f32 %v1363, 0.0
  %v1370 = vpack.c.bf16 %v1367, %v1366
  %v1371 = vpack.c.bf16 %v1369, %v1368
  %v1372 = vld [vmem:[%s3] sm:$0xf]
  %v1373 = vld [vmem:[%s3 + $0x4] sm:$0xf]
  %v1374 = vld [vmem:[%s3 + $0x8] sm:$0xf]
  %v1375 = vld [vmem:[%s3 + $0xc] sm:$0xf]
  %v1380 = vunpack.c.l.b16 %v1372
  %v1381 = vunpack.c.l.b16 %v1373
  %v1382 = vunpack.c.l.b16 %v1374
  %v1383 = vunpack.c.l.b16 %v1375
  %v1384 = vpack.c.b16 %v1381, %v1380
  %v1385 = vpack.c.b16 %v1383, %v1382
  %vm1388 = vcmask 261120
  %v1390 = vsel %vm1388, %v1370, 0
  %v1393 = vsel %vm1388, %v1371, 0
  %1395 = vmatprep.subr.bf16.mxu0 0
  %1396 = vmatpush1.bf16.msra.mxu0 0
  %1397 = vmatprep.subr.bf16.mxu0 0
  %1398 = vmatpush1.bf16.msra.mxu0 0
  %1399 = vmatprep.subr.bf16.mxu0 0
  %1400 = vmatpush1.bf16.msra.mxu0 0
  %1401 = vmatprep.subr.bf16.mxu0 0
  %1402 = vmatpush1.bf16.msra.mxu0 0
  %1403 = vmatprep.subr.bf16.mxu0 0
  %1404 = vmatpush1.bf16.msra.mxu0 0
  %1405 = vmatprep.subr.bf16.mxu0 0
  %1406 = vmatpush1.bf16.msra.mxu0 0
  %1407 = vmatprep.subr.bf16.mxu0 0
  %1408 = vmatpush1.bf16.msra.mxu0 %v1385
  %1409 = vmatprep.subr.bf16.mxu0 0
  %1410 = vmatpush1.bf16.msra.mxu0 %v1384
  %1411 = vmatprep.subr.bf16.mxu0 0
  %1412 = vmatpush2.bf16.msra.mxu0 0
  %1413 = vmatprep.subr.bf16.mxu0 0
  %1414 = vmatpush2.bf16.msra.mxu0 0
  %1415 = vmatprep.subr.bf16.mxu0 0
  %1416 = vmatpush2.bf16.msra.mxu0 0
  %1417 = vmatprep.subr.bf16.mxu0 0
  %1418 = vmatpush2.bf16.msra.mxu0 0
  %1419 = vmatprep.subr.bf16.mxu0 0
  %1420 = vmatpush2.bf16.msra.mxu0 0
  %1421 = vmatprep.subr.bf16.mxu0 0
  %1422 = vmatpush2.bf16.msra.mxu0 0
  %1423 = vmatprep.subr.bf16.mxu0 0
  %1424 = vmatpush2.bf16.msra.mxu0 0
  %1425 = vmatprep.subr.bf16.mxu0 0
  %1426 = vmatpush2.bf16.msra.mxu0 0
  %1427 = vmatprep.mubr.bf16.mxu0 0
  %1428 = vmatmul.mubr.bf16.gmra.mxu0 %v1390
  %v1429 = vpop.f32.mrf.mxu0
  %v1430 = vadd.f32 0.0, %v1429
  %v1431 = vpop.f32.mrf.mxu0
  %v1432 = vpop.f32.mrf.mxu0
  %v1433 = vadd.f32 0.0, %v1432
  %v1434 = vpop.f32.mrf.mxu0
  %1435 = vmatprep.mubr.bf16.mxu0 0
  %1436 = vmatmul.mubr.bf16.gmra.mxu0 %v1393
  %v1437 = vpop.f32.mrf.mxu0
  %v1438 = vadd.f32 0.0, %v1437
  %v1439 = vpop.f32.mrf.mxu0
  %v1440 = vpop.f32.mrf.mxu0
  %v1441 = vadd.f32 0.0, %v1440
  %v1442 = vpop.f32.mrf.mxu0
  %1443 = vdwg.mxu0
  %s1444 = scalar_lea.vmem %s3, 16
  %v1445 = vld [vmem:[%s1444] sm:$0xf]
  %v1446 = vld [vmem:[%s1444 + $0x4] sm:$0xf]
  %v1447 = vld [vmem:[%s1444 + $0x8] sm:$0xf]
  %v1448 = vld [vmem:[%s1444 + $0xc] sm:$0xf]
  %v1453 = vunpack.c.l.b16 %v1445
  %v1454 = vunpack.c.l.b16 %v1446
  %v1455 = vunpack.c.l.b16 %v1447
  %v1456 = vunpack.c.l.b16 %v1448
  %v1457 = vpack.c.b16 %v1454, %v1453
  %v1458 = vpack.c.b16 %v1456, %v1455
  %1461 = vmatprep.subr.bf16.mxu0 0
  %1462 = vmatpush1.bf16.msra.mxu0 0
  %1463 = vmatprep.subr.bf16.mxu0 0
  %1464 = vmatpush1.bf16.msra.mxu0 0
  %1465 = vmatprep.subr.bf16.mxu0 0
  %1466 = vmatpush1.bf16.msra.mxu0 0
  %1467 = vmatprep.subr.bf16.mxu0 0
  %1468 = vmatpush1.bf16.msra.mxu0 0
  %1469 = vmatprep.subr.bf16.mxu0 0
  %1470 = vmatpush1.bf16.msra.mxu0 0
  %1471 = vmatprep.subr.bf16.mxu0 0
  %1472 = vmatpush1.bf16.msra.mxu0 0
  %1473 = vmatprep.subr.bf16.mxu0 0
  %1474 = vmatpush1.bf16.msra.mxu0 %v1458
  %1475 = vmatprep.subr.bf16.mxu0 0
  %1476 = vmatpush1.bf16.msra.mxu0 %v1457
  %1477 = vmatprep.subr.bf16.mxu0 0
  %1478 = vmatpush2.bf16.msra.mxu0 0
  %1479 = vmatprep.subr.bf16.mxu0 0
  %1480 = vmatpush2.bf16.msra.mxu0 0
  %1481 = vmatprep.subr.bf16.mxu0 0
  %1482 = vmatpush2.bf16.msra.mxu0 0
  %1483 = vmatprep.subr.bf16.mxu0 0
  %1484 = vmatpush2.bf16.msra.mxu0 0
  %1485 = vmatprep.subr.bf16.mxu0 0
  %1486 = vmatpush2.bf16.msra.mxu0 0
  %1487 = vmatprep.subr.bf16.mxu0 0
  %1488 = vmatpush2.bf16.msra.mxu0 0
  %1489 = vmatprep.subr.bf16.mxu0 0
  %1490 = vmatpush2.bf16.msra.mxu0 0
  %1491 = vmatprep.subr.bf16.mxu0 0
  %1492 = vmatpush2.bf16.msra.mxu0 0
  %1493 = vmatprep.mubr.bf16.mxu0 0
  %1494 = vmatmul.mubr.bf16.gmra.mxu0 %v1390
  %v1495 = vpop.f32.mrf.mxu0
  %v1496 = vadd.f32 0.0, %v1495
  %v1497 = vpop.f32.mrf.mxu0
  %v1498 = vpop.f32.mrf.mxu0
  %v1499 = vadd.f32 0.0, %v1498
  %v1500 = vpop.f32.mrf.mxu0
  %1501 = vmatprep.mubr.bf16.mxu0 0
  %1502 = vmatmul.mubr.bf16.gmra.mxu0 %v1393
  %v1503 = vpop.f32.mrf.mxu0
  %v1504 = vadd.f32 0.0, %v1503
  %v1505 = vpop.f32.mrf.mxu0
  %v1506 = vpop.f32.mrf.mxu0
  %v1507 = vadd.f32 0.0, %v1506
  %v1508 = vpop.f32.mrf.mxu0
  %1509 = vdwg.mxu0
  %s1510 = scalar_lea.vmem %s3, 32
  %v1511 = vld [vmem:[%s1510] sm:$0xf]
  %v1512 = vld [vmem:[%s1510 + $0x4] sm:$0xf]
  %v1513 = vld [vmem:[%s1510 + $0x8] sm:$0xf]
  %v1514 = vld [vmem:[%s1510 + $0xc] sm:$0xf]
  %v1519 = vunpack.c.l.b16 %v1511
  %v1520 = vunpack.c.l.b16 %v1512
  %v1521 = vunpack.c.l.b16 %v1513
  %v1522 = vunpack.c.l.b16 %v1514
  %v1523 = vpack.c.b16 %v1520, %v1519
  %v1524 = vpack.c.b16 %v1522, %v1521
  %1527 = vmatprep.subr.bf16.mxu0 0
  %1528 = vmatpush1.bf16.msra.mxu0 0
  %1529 = vmatprep.subr.bf16.mxu0 0
  %1530 = vmatpush1.bf16.msra.mxu0 0
  %1531 = vmatprep.subr.bf16.mxu0 0
  %1532 = vmatpush1.bf16.msra.mxu0 0
  %1533 = vmatprep.subr.bf16.mxu0 0
  %1534 = vmatpush1.bf16.msra.mxu0 0
  %1535 = vmatprep.subr.bf16.mxu0 0
  %1536 = vmatpush1.bf16.msra.mxu0 0
  %1537 = vmatprep.subr.bf16.mxu0 0
  %1538 = vmatpush1.bf16.msra.mxu0 0
  %1539 = vmatprep.subr.bf16.mxu0 0
  %1540 = vmatpush1.bf16.msra.mxu0 %v1524
  %1541 = vmatprep.subr.bf16.mxu0 0
  %1542 = vmatpush1.bf16.msra.mxu0 %v1523
  %1543 = vmatprep.subr.bf16.mxu0 0
  %1544 = vmatpush2.bf16.msra.mxu0 0
  %1545 = vmatprep.subr.bf16.mxu0 0
  %1546 = vmatpush2.bf16.msra.mxu0 0
  %1547 = vmatprep.subr.bf16.mxu0 0
  %1548 = vmatpush2.bf16.msra.mxu0 0
  %1549 = vmatprep.subr.bf16.mxu0 0
  %1550 = vmatpush2.bf16.msra.mxu0 0
  %1551 = vmatprep.subr.bf16.mxu0 0
  %1552 = vmatpush2.bf16.msra.mxu0 0
  %1553 = vmatprep.subr.bf16.mxu0 0
  %1554 = vmatpush2.bf16.msra.mxu0 0
  %1555 = vmatprep.subr.bf16.mxu0 0
  %1556 = vmatpush2.bf16.msra.mxu0 0
  %1557 = vmatprep.subr.bf16.mxu0 0
  %1558 = vmatpush2.bf16.msra.mxu0 0
  %1559 = vmatprep.mubr.bf16.mxu0 0
  %1560 = vmatmul.mubr.bf16.gmra.mxu0 %v1390
  %v1561 = vpop.f32.mrf.mxu0
  %v1562 = vadd.f32 0.0, %v1561
  %v1563 = vpop.f32.mrf.mxu0
  %v1564 = vpop.f32.mrf.mxu0
  %v1565 = vadd.f32 0.0, %v1564
  %v1566 = vpop.f32.mrf.mxu0
  %1567 = vmatprep.mubr.bf16.mxu0 0
  %1568 = vmatmul.mubr.bf16.gmra.mxu0 %v1393
  %v1569 = vpop.f32.mrf.mxu0
  %v1570 = vadd.f32 0.0, %v1569
  %v1571 = vpop.f32.mrf.mxu0
  %v1572 = vpop.f32.mrf.mxu0
  %v1573 = vadd.f32 0.0, %v1572
  %v1574 = vpop.f32.mrf.mxu0
  %1575 = vdwg.mxu0
  %s1576 = scalar_lea.vmem %s3, 48
  %v1577 = vld [vmem:[%s1576] sm:$0xf]
  %v1578 = vld [vmem:[%s1576 + $0x4] sm:$0xf]
  %v1579 = vld [vmem:[%s1576 + $0x8] sm:$0xf]
  %v1580 = vld [vmem:[%s1576 + $0xc] sm:$0xf]
  %v1585 = vunpack.c.l.b16 %v1577
  %v1586 = vunpack.c.l.b16 %v1578
  %v1587 = vunpack.c.l.b16 %v1579
  %v1588 = vunpack.c.l.b16 %v1580
  %v1589 = vpack.c.b16 %v1586, %v1585
  %v1590 = vpack.c.b16 %v1588, %v1587
  %1593 = vmatprep.subr.bf16.mxu0 0
  %1594 = vmatpush1.bf16.msra.mxu0 0
  %1595 = vmatprep.subr.bf16.mxu0 0
  %1596 = vmatpush1.bf16.msra.mxu0 0
  %1597 = vmatprep.subr.bf16.mxu0 0
  %1598 = vmatpush1.bf16.msra.mxu0 0
  %1599 = vmatprep.subr.bf16.mxu0 0
  %1600 = vmatpush1.bf16.msra.mxu0 0
  %1601 = vmatprep.subr.bf16.mxu0 0
  %1602 = vmatpush1.bf16.msra.mxu0 0
  %1603 = vmatprep.subr.bf16.mxu0 0
  %1604 = vmatpush1.bf16.msra.mxu0 0
  %1605 = vmatprep.subr.bf16.mxu0 0
  %1606 = vmatpush1.bf16.msra.mxu0 %v1590
  %1607 = vmatprep.subr.bf16.mxu0 0
  %1608 = vmatpush1.bf16.msra.mxu0 %v1589
  %1609 = vmatprep.subr.bf16.mxu0 0
  %1610 = vmatpush2.bf16.msra.mxu0 0
  %1611 = vmatprep.subr.bf16.mxu0 0
  %1612 = vmatpush2.bf16.msra.mxu0 0
  %1613 = vmatprep.subr.bf16.mxu0 0
  %1614 = vmatpush2.bf16.msra.mxu0 0
  %1615 = vmatprep.subr.bf16.mxu0 0
  %1616 = vmatpush2.bf16.msra.mxu0 0
  %1617 = vmatprep.subr.bf16.mxu0 0
  %1618 = vmatpush2.bf16.msra.mxu0 0
  %1619 = vmatprep.subr.bf16.mxu0 0
  %1620 = vmatpush2.bf16.msra.mxu0 0
  %1621 = vmatprep.subr.bf16.mxu0 0
  %1622 = vmatpush2.bf16.msra.mxu0 0
  %1623 = vmatprep.subr.bf16.mxu0 0
  %1624 = vmatpush2.bf16.msra.mxu0 0
  %1625 = vmatprep.mubr.bf16.mxu0 0
  %1626 = vmatmul.mubr.bf16.gmra.mxu0 %v1390
  %v1627 = vpop.f32.mrf.mxu0
  %v1628 = vadd.f32 0.0, %v1627
  %v1629 = vpop.f32.mrf.mxu0
  %v1630 = vpop.f32.mrf.mxu0
  %v1631 = vadd.f32 0.0, %v1630
  %v1632 = vpop.f32.mrf.mxu0
  %1633 = vmatprep.mubr.bf16.mxu0 0
  %1634 = vmatmul.mubr.bf16.gmra.mxu0 %v1393
  %v1635 = vpop.f32.mrf.mxu0
  %v1636 = vadd.f32 0.0, %v1635
  %v1637 = vpop.f32.mrf.mxu0
  %v1638 = vpop.f32.mrf.mxu0
  %v1639 = vadd.f32 0.0, %v1638
  %v1640 = vpop.f32.mrf.mxu0
  %1641 = vdwg.mxu0
  %s1642 = scalar_lea.vmem %s3, 64
  %v1643 = vld [vmem:[%s1642] sm:$0xf]
  %v1644 = vld [vmem:[%s1642 + $0x4] sm:$0xf]
  %v1645 = vld [vmem:[%s1642 + $0x8] sm:$0xf]
  %v1646 = vld [vmem:[%s1642 + $0xc] sm:$0xf]
  %v1651 = vunpack.c.l.b16 %v1643
  %v1652 = vunpack.c.l.b16 %v1644
  %v1653 = vunpack.c.l.b16 %v1645
  %v1654 = vunpack.c.l.b16 %v1646
  %v1655 = vpack.c.b16 %v1652, %v1651
  %v1656 = vpack.c.b16 %v1654, %v1653
  %1659 = vmatprep.subr.bf16.mxu0 0
  %1660 = vmatpush1.bf16.msra.mxu0 0
  %1661 = vmatprep.subr.bf16.mxu0 0
  %1662 = vmatpush1.bf16.msra.mxu0 0
  %1663 = vmatprep.subr.bf16.mxu0 0
  %1664 = vmatpush1.bf16.msra.mxu0 0
  %1665 = vmatprep.subr.bf16.mxu0 0
  %1666 = vmatpush1.bf16.msra.mxu0 0
  %1667 = vmatprep.subr.bf16.mxu0 0
  %1668 = vmatpush1.bf16.msra.mxu0 0
  %1669 = vmatprep.subr.bf16.mxu0 0
  %1670 = vmatpush1.bf16.msra.mxu0 0
  %1671 = vmatprep.subr.bf16.mxu0 0
  %1672 = vmatpush1.bf16.msra.mxu0 %v1656
  %1673 = vmatprep.subr.bf16.mxu0 0
  %1674 = vmatpush1.bf16.msra.mxu0 %v1655
  %1675 = vmatprep.subr.bf16.mxu0 0
  %1676 = vmatpush2.bf16.msra.mxu0 0
  %1677 = vmatprep.subr.bf16.mxu0 0
  %1678 = vmatpush2.bf16.msra.mxu0 0
  %1679 = vmatprep.subr.bf16.mxu0 0
  %1680 = vmatpush2.bf16.msra.mxu0 0
  %1681 = vmatprep.subr.bf16.mxu0 0
  %1682 = vmatpush2.bf16.msra.mxu0 0
  %1683 = vmatprep.subr.bf16.mxu0 0
  %1684 = vmatpush2.bf16.msra.mxu0 0
  %1685 = vmatprep.subr.bf16.mxu0 0
  %1686 = vmatpush2.bf16.msra.mxu0 0
  %1687 = vmatprep.subr.bf16.mxu0 0
  %1688 = vmatpush2.bf16.msra.mxu0 0
  %1689 = vmatprep.subr.bf16.mxu0 0
  %1690 = vmatpush2.bf16.msra.mxu0 0
  %1691 = vmatprep.mubr.bf16.mxu0 0
  %1692 = vmatmul.mubr.bf16.gmra.mxu0 %v1390
  %v1693 = vpop.f32.mrf.mxu0
  %v1694 = vadd.f32 0.0, %v1693
  %v1695 = vpop.f32.mrf.mxu0
  %v1696 = vpop.f32.mrf.mxu0
  %v1697 = vadd.f32 0.0, %v1696
  %v1698 = vpop.f32.mrf.mxu0
  %1699 = vmatprep.mubr.bf16.mxu0 0
  %1700 = vmatmul.mubr.bf16.gmra.mxu0 %v1393
  %v1701 = vpop.f32.mrf.mxu0
  %v1702 = vadd.f32 0.0, %v1701
  %v1703 = vpop.f32.mrf.mxu0
  %v1704 = vpop.f32.mrf.mxu0
  %v1705 = vadd.f32 0.0, %v1704
  %v1706 = vpop.f32.mrf.mxu0
  %1707 = vdwg.mxu0
  %s1708 = scalar_lea.vmem %s3, 80
  %v1709 = vld [vmem:[%s1708] sm:$0xf]
  %v1710 = vld [vmem:[%s1708 + $0x4] sm:$0xf]
  %v1711 = vld [vmem:[%s1708 + $0x8] sm:$0xf]
  %v1712 = vld [vmem:[%s1708 + $0xc] sm:$0xf]
  %v1717 = vunpack.c.l.b16 %v1709
  %v1718 = vunpack.c.l.b16 %v1710
  %v1719 = vunpack.c.l.b16 %v1711
  %v1720 = vunpack.c.l.b16 %v1712
  %v1721 = vpack.c.b16 %v1718, %v1717
  %v1722 = vpack.c.b16 %v1720, %v1719
  %1725 = vmatprep.subr.bf16.mxu0 0
  %1726 = vmatpush1.bf16.msra.mxu0 0
  %1727 = vmatprep.subr.bf16.mxu0 0
  %1728 = vmatpush1.bf16.msra.mxu0 0
  %1729 = vmatprep.subr.bf16.mxu0 0
  %1730 = vmatpush1.bf16.msra.mxu0 0
  %1731 = vmatprep.subr.bf16.mxu0 0
  %1732 = vmatpush1.bf16.msra.mxu0 0
  %1733 = vmatprep.subr.bf16.mxu0 0
  %1734 = vmatpush1.bf16.msra.mxu0 0
  %1735 = vmatprep.subr.bf16.mxu0 0
  %1736 = vmatpush1.bf16.msra.mxu0 0
  %1737 = vmatprep.subr.bf16.mxu0 0
  %1738 = vmatpush1.bf16.msra.mxu0 %v1722
  %1739 = vmatprep.subr.bf16.mxu0 0
  %1740 = vmatpush1.bf16.msra.mxu0 %v1721
  %1741 = vmatprep.subr.bf16.mxu0 0
  %1742 = vmatpush2.bf16.msra.mxu0 0
  %1743 = vmatprep.subr.bf16.mxu0 0
  %1744 = vmatpush2.bf16.msra.mxu0 0
  %1745 = vmatprep.subr.bf16.mxu0 0
  %1746 = vmatpush2.bf16.msra.mxu0 0
  %1747 = vmatprep.subr.bf16.mxu0 0
  %1748 = vmatpush2.bf16.msra.mxu0 0
  %1749 = vmatprep.subr.bf16.mxu0 0
  %1750 = vmatpush2.bf16.msra.mxu0 0
  %1751 = vmatprep.subr.bf16.mxu0 0
  %1752 = vmatpush2.bf16.msra.mxu0 0
  %1753 = vmatprep.subr.bf16.mxu0 0
  %1754 = vmatpush2.bf16.msra.mxu0 0
  %1755 = vmatprep.subr.bf16.mxu0 0
  %1756 = vmatpush2.bf16.msra.mxu0 0
  %1757 = vmatprep.mubr.bf16.mxu0 0
  %1758 = vmatmul.mubr.bf16.gmra.mxu0 %v1390
  %v1759 = vpop.f32.mrf.mxu0
  %v1760 = vadd.f32 0.0, %v1759
  %v1761 = vpop.f32.mrf.mxu0
  %v1762 = vpop.f32.mrf.mxu0
  %v1763 = vadd.f32 0.0, %v1762
  %v1764 = vpop.f32.mrf.mxu0
  %1765 = vmatprep.mubr.bf16.mxu0 0
  %1766 = vmatmul.mubr.bf16.gmra.mxu0 %v1393
  %v1767 = vpop.f32.mrf.mxu0
  %v1768 = vadd.f32 0.0, %v1767
  %v1769 = vpop.f32.mrf.mxu0
  %v1770 = vpop.f32.mrf.mxu0
  %v1771 = vadd.f32 0.0, %v1770
  %v1772 = vpop.f32.mrf.mxu0
  %1773 = vdwg.mxu0
  %s1774 = scalar_lea.vmem %s3, 96
  %v1775 = vld [vmem:[%s1774] sm:$0xf]
  %v1776 = vld [vmem:[%s1774 + $0x4] sm:$0xf]
  %v1777 = vld [vmem:[%s1774 + $0x8] sm:$0xf]
  %v1778 = vld [vmem:[%s1774 + $0xc] sm:$0xf]
  %v1783 = vunpack.c.l.b16 %v1775
  %v1784 = vunpack.c.l.b16 %v1776
  %v1785 = vunpack.c.l.b16 %v1777
  %v1786 = vunpack.c.l.b16 %v1778
  %v1787 = vpack.c.b16 %v1784, %v1783
  %v1788 = vpack.c.b16 %v1786, %v1785
  %1791 = vmatprep.subr.bf16.mxu0 0
  %1792 = vmatpush1.bf16.msra.mxu0 0
  %1793 = vmatprep.subr.bf16.mxu0 0
  %1794 = vmatpush1.bf16.msra.mxu0 0
  %1795 = vmatprep.subr.bf16.mxu0 0
  %1796 = vmatpush1.bf16.msra.mxu0 0
  %1797 = vmatprep.subr.bf16.mxu0 0
  %1798 = vmatpush1.bf16.msra.mxu0 0
  %1799 = vmatprep.subr.bf16.mxu0 0
  %1800 = vmatpush1.bf16.msra.mxu0 0
  %1801 = vmatprep.subr.bf16.mxu0 0
  %1802 = vmatpush1.bf16.msra.mxu0 0
  %1803 = vmatprep.subr.bf16.mxu0 0
  %1804 = vmatpush1.bf16.msra.mxu0 %v1788
  %1805 = vmatprep.subr.bf16.mxu0 0
  %1806 = vmatpush1.bf16.msra.mxu0 %v1787
  %1807 = vmatprep.subr.bf16.mxu0 0
  %1808 = vmatpush2.bf16.msra.mxu0 0
  %1809 = vmatprep.subr.bf16.mxu0 0
  %1810 = vmatpush2.bf16.msra.mxu0 0
  %1811 = vmatprep.subr.bf16.mxu0 0
  %1812 = vmatpush2.bf16.msra.mxu0 0
  %1813 = vmatprep.subr.bf16.mxu0 0
  %1814 = vmatpush2.bf16.msra.mxu0 0
  %1815 = vmatprep.subr.bf16.mxu0 0
  %1816 = vmatpush2.bf16.msra.mxu0 0
  %1817 = vmatprep.subr.bf16.mxu0 0
  %1818 = vmatpush2.bf16.msra.mxu0 0
  %1819 = vmatprep.subr.bf16.mxu0 0
  %1820 = vmatpush2.bf16.msra.mxu0 0
  %1821 = vmatprep.subr.bf16.mxu0 0
  %1822 = vmatpush2.bf16.msra.mxu0 0
  %1823 = vmatprep.mubr.bf16.mxu0 0
  %1824 = vmatmul.mubr.bf16.gmra.mxu0 %v1390
  %v1825 = vpop.f32.mrf.mxu0
  %v1826 = vadd.f32 0.0, %v1825
  %v1827 = vpop.f32.mrf.mxu0
  %v1828 = vpop.f32.mrf.mxu0
  %v1829 = vadd.f32 0.0, %v1828
  %v1830 = vpop.f32.mrf.mxu0
  %1831 = vmatprep.mubr.bf16.mxu0 0
  %1832 = vmatmul.mubr.bf16.gmra.mxu0 %v1393
  %v1833 = vpop.f32.mrf.mxu0
  %v1834 = vadd.f32 0.0, %v1833
  %v1835 = vpop.f32.mrf.mxu0
  %v1836 = vpop.f32.mrf.mxu0
  %v1837 = vadd.f32 0.0, %v1836
  %v1838 = vpop.f32.mrf.mxu0
  %1839 = vdwg.mxu0
  %s1840 = scalar_lea.vmem %s3, 112
  %v1841 = vld [vmem:[%s1840] sm:$0xf]
  %v1842 = vld [vmem:[%s1840 + $0x4] sm:$0xf]
  %v1843 = vld [vmem:[%s1840 + $0x8] sm:$0xf]
  %v1844 = vld [vmem:[%s1840 + $0xc] sm:$0xf]
  %v1849 = vunpack.c.l.b16 %v1841
  %v1850 = vunpack.c.l.b16 %v1842
  %v1851 = vunpack.c.l.b16 %v1843
  %v1852 = vunpack.c.l.b16 %v1844
  %v1853 = vpack.c.b16 %v1850, %v1849
  %v1854 = vpack.c.b16 %v1852, %v1851
  %1857 = vmatprep.subr.bf16.mxu0 0
  %1858 = vmatpush1.bf16.msra.mxu0 0
  %1859 = vmatprep.subr.bf16.mxu0 0
  %1860 = vmatpush1.bf16.msra.mxu0 0
  %1861 = vmatprep.subr.bf16.mxu0 0
  %1862 = vmatpush1.bf16.msra.mxu0 0
  %1863 = vmatprep.subr.bf16.mxu0 0
  %1864 = vmatpush1.bf16.msra.mxu0 0
  %1865 = vmatprep.subr.bf16.mxu0 0
  %1866 = vmatpush1.bf16.msra.mxu0 0
  %1867 = vmatprep.subr.bf16.mxu0 0
  %1868 = vmatpush1.bf16.msra.mxu0 0
  %1869 = vmatprep.subr.bf16.mxu0 0
  %1870 = vmatpush1.bf16.msra.mxu0 %v1854
  %1871 = vmatprep.subr.bf16.mxu0 0
  %1872 = vmatpush1.bf16.msra.mxu0 %v1853
  %1873 = vmatprep.subr.bf16.mxu0 0
  %1874 = vmatpush2.bf16.msra.mxu0 0
  %1875 = vmatprep.subr.bf16.mxu0 0
  %1876 = vmatpush2.bf16.msra.mxu0 0
  %1877 = vmatprep.subr.bf16.mxu0 0
  %1878 = vmatpush2.bf16.msra.mxu0 0
  %1879 = vmatprep.subr.bf16.mxu0 0
  %1880 = vmatpush2.bf16.msra.mxu0 0
  %1881 = vmatprep.subr.bf16.mxu0 0
  %1882 = vmatpush2.bf16.msra.mxu0 0
  %1883 = vmatprep.subr.bf16.mxu0 0
  %1884 = vmatpush2.bf16.msra.mxu0 0
  %1885 = vmatprep.subr.bf16.mxu0 0
  %1886 = vmatpush2.bf16.msra.mxu0 0
  %1887 = vmatprep.subr.bf16.mxu0 0
  %1888 = vmatpush2.bf16.msra.mxu0 0
  %1889 = vmatprep.mubr.bf16.mxu0 0
  %1890 = vmatmul.mubr.bf16.gmra.mxu0 %v1390
  %v1891 = vpop.f32.mrf.mxu0
  %v1892 = vadd.f32 0.0, %v1891
  %v1893 = vpop.f32.mrf.mxu0
  %v1894 = vpop.f32.mrf.mxu0
  %v1895 = vadd.f32 0.0, %v1894
  %v1896 = vpop.f32.mrf.mxu0
  %1897 = vmatprep.mubr.bf16.mxu0 0
  %1898 = vmatmul.mubr.bf16.gmra.mxu0 %v1393
  %v1899 = vpop.f32.mrf.mxu0
  %v1900 = vadd.f32 0.0, %v1899
  %v1901 = vpop.f32.mrf.mxu0
  %v1902 = vpop.f32.mrf.mxu0
  %v1903 = vadd.f32 0.0, %v1902
  %v1904 = vpop.f32.mrf.mxu0
  %1905 = vdwg.mxu0
  %s1906 = scalar_lea.vmem %s3, 128
  %v1907 = vld [vmem:[%s1906] sm:$0xf]
  %v1908 = vld [vmem:[%s1906 + $0x4] sm:$0xf]
  %v1909 = vld [vmem:[%s1906 + $0x8] sm:$0xf]
  %v1910 = vld [vmem:[%s1906 + $0xc] sm:$0xf]
  %v1915 = vunpack.c.l.b16 %v1907
  %v1916 = vunpack.c.l.b16 %v1908
  %v1917 = vunpack.c.l.b16 %v1909
  %v1918 = vunpack.c.l.b16 %v1910
  %v1919 = vpack.c.b16 %v1916, %v1915
  %v1920 = vpack.c.b16 %v1918, %v1917
  %1923 = vmatprep.subr.bf16.mxu0 0
  %1924 = vmatpush1.bf16.msra.mxu0 0
  %1925 = vmatprep.subr.bf16.mxu0 0
  %1926 = vmatpush1.bf16.msra.mxu0 0
  %1927 = vmatprep.subr.bf16.mxu0 0
  %1928 = vmatpush1.bf16.msra.mxu0 0
  %1929 = vmatprep.subr.bf16.mxu0 0
  %1930 = vmatpush1.bf16.msra.mxu0 0
  %1931 = vmatprep.subr.bf16.mxu0 0
  %1932 = vmatpush1.bf16.msra.mxu0 0
  %1933 = vmatprep.subr.bf16.mxu0 0
  %1934 = vmatpush1.bf16.msra.mxu0 0
  %1935 = vmatprep.subr.bf16.mxu0 0
  %1936 = vmatpush1.bf16.msra.mxu0 %v1920
  %1937 = vmatprep.subr.bf16.mxu0 0
  %1938 = vmatpush1.bf16.msra.mxu0 %v1919
  %1939 = vmatprep.subr.bf16.mxu0 0
  %1940 = vmatpush2.bf16.msra.mxu0 0
  %1941 = vmatprep.subr.bf16.mxu0 0
  %1942 = vmatpush2.bf16.msra.mxu0 0
  %1943 = vmatprep.subr.bf16.mxu0 0
  %1944 = vmatpush2.bf16.msra.mxu0 0
  %1945 = vmatprep.subr.bf16.mxu0 0
  %1946 = vmatpush2.bf16.msra.mxu0 0
  %1947 = vmatprep.subr.bf16.mxu0 0
  %1948 = vmatpush2.bf16.msra.mxu0 0
  %1949 = vmatprep.subr.bf16.mxu0 0
  %1950 = vmatpush2.bf16.msra.mxu0 0
  %1951 = vmatprep.subr.bf16.mxu0 0
  %1952 = vmatpush2.bf16.msra.mxu0 0
  %1953 = vmatprep.subr.bf16.mxu0 0
  %1954 = vmatpush2.bf16.msra.mxu0 0
  %1955 = vmatprep.mubr.bf16.mxu0 0
  %1956 = vmatmul.mubr.bf16.gmra.mxu0 %v1390
  %v1957 = vpop.f32.mrf.mxu0
  %v1958 = vadd.f32 0.0, %v1957
  %v1959 = vpop.f32.mrf.mxu0
  %v1960 = vpop.f32.mrf.mxu0
  %v1961 = vadd.f32 0.0, %v1960
  %v1962 = vpop.f32.mrf.mxu0
  %1963 = vmatprep.mubr.bf16.mxu0 0
  %1964 = vmatmul.mubr.bf16.gmra.mxu0 %v1393
  %v1965 = vpop.f32.mrf.mxu0
  %v1966 = vadd.f32 0.0, %v1965
  %v1967 = vpop.f32.mrf.mxu0
  %v1968 = vpop.f32.mrf.mxu0
  %v1969 = vadd.f32 0.0, %v1968
  %v1970 = vpop.f32.mrf.mxu0
  %1971 = vdwg.mxu0
  %v1972 = vpack.c.bf16 %v1433, %v1430
  %v1973 = vpack.c.bf16 %v1441, %v1438
  %v1974 = vpack.c.bf16 %v1499, %v1496
  %v1975 = vpack.c.bf16 %v1507, %v1504
  %v1976 = vpack.c.bf16 %v1565, %v1562
  %v1977 = vpack.c.bf16 %v1573, %v1570
  %v1978 = vpack.c.bf16 %v1631, %v1628
  %v1979 = vpack.c.bf16 %v1639, %v1636
  %v1980 = vpack.c.bf16 %v1697, %v1694
  %v1981 = vpack.c.bf16 %v1705, %v1702
  %v1982 = vpack.c.bf16 %v1763, %v1760
  %v1983 = vpack.c.bf16 %v1771, %v1768
  %v1984 = vpack.c.bf16 %v1829, %v1826
  %v1985 = vpack.c.bf16 %v1837, %v1834
  %v1986 = vpack.c.bf16 %v1895, %v1892
  %v1987 = vpack.c.bf16 %v1903, %v1900
  %v1988 = vpack.c.bf16 %v1961, %v1958
  %v1989 = vpack.c.bf16 %v1969, %v1966
  %v1990 = vld [vmem:[%s8 + $0x60] sm:$0xff]
  %v1991 = vld [vmem:[%s8 + $0x68] sm:$0xf]
  %v1992 = vld [vmem:[%s8 + $0x6c] sm:$0xff]
  %v1993 = vld [vmem:[%s8 + $0x74] sm:$0xf]
  %v1994 = vld [vmem:[%s9 + $0x40] sm:$0xff]
  %v1995 = vld [vmem:[%s9 + $0x48] sm:$0xff]
  %1997 = vset.pattern.permute.xlu0 0
  %1998 = vperm.xlu0 %1997, %v1994
  %v1999 = vpop.permute.xlu0 %1998
  %2002 = vset.pattern.permute.xlu0 0
  %2003 = vperm.xlu0 %2002, %v1995
  %v2004 = vpop.permute.xlu0 %2003
  %v2010 = vunpack.c.l.b16 %v1990
  %v2011 = vunpack.c.h.b16 %v1990
  %v2012 = vunpack.c.l.b16 %v1991
  %v2013 = vunpack.c.l.b16 %v1992
  %v2014 = vunpack.c.h.b16 %v1992
  %v2015 = vunpack.c.l.b16 %v1993
  %v2016 = vpack.c.b16 %v2013, %v2010
  %v2017 = vpack.c.b16 %v2014, %v2011
  %v2018 = vpack.c.b16 %v2015, %v2012
  %v2022 = vsel %vm1388, %v2018, 0
  %2024 = vmatprep.subr.bf16.mxu0 0
  %2025 = vmatpush1.bf16.msra.mxu0 %v1979
  %2026 = vmatprep.subr.bf16.mxu0 0
  %2027 = vmatpush1.bf16.msra.mxu0 %v1978
  %2028 = vmatprep.subr.bf16.mxu0 0
  %2029 = vmatpush1.bf16.msra.mxu0 %v1977
  %2030 = vmatprep.subr.bf16.mxu0 0
  %2031 = vmatpush1.bf16.msra.mxu0 %v1976
  %2032 = vmatprep.subr.bf16.mxu0 0
  %2033 = vmatpush1.bf16.msra.mxu0 %v1975
  %2034 = vmatprep.subr.bf16.mxu0 0
  %2035 = vmatpush1.bf16.msra.mxu0 %v1974
  %2036 = vmatprep.subr.bf16.mxu0 0
  %2037 = vmatpush1.bf16.msra.mxu0 %v1973
  %2038 = vmatprep.subr.bf16.mxu0 0
  %2039 = vmatpush1.bf16.msra.mxu0 %v1972
  %2040 = vmatprep.subr.bf16.mxu0 0
  %2041 = vmatpush2.bf16.msra.mxu0 %v1987
  %2042 = vmatprep.subr.bf16.mxu0 0
  %2043 = vmatpush2.bf16.msra.mxu0 %v1986
  %2044 = vmatprep.subr.bf16.mxu0 0
  %2045 = vmatpush2.bf16.msra.mxu0 %v1985
  %2046 = vmatprep.subr.bf16.mxu0 0
  %2047 = vmatpush2.bf16.msra.mxu0 %v1984
  %2048 = vmatprep.subr.bf16.mxu0 0
  %2049 = vmatpush2.bf16.msra.mxu0 %v1983
  %2050 = vmatprep.subr.bf16.mxu0 0
  %2051 = vmatpush2.bf16.msra.mxu0 %v1982
  %2052 = vmatprep.subr.bf16.mxu0 0
  %2053 = vmatpush2.bf16.msra.mxu0 %v1981
  %2054 = vmatprep.subr.bf16.mxu0 0
  %2055 = vmatpush2.bf16.msra.mxu0 %v1980
  %2056 = vmatprep.mubr.bf16.mxu0 %v2017
  %2057 = vmatmul.mubr.bf16.gmra.mxu0 %v2016
  %v2058 = vpop.f32.mrf.mxu0
  %v2059 = vadd.f32 %v1999, %v2058
  %v2060 = vpop.f32.mrf.mxu0
  %v2061 = vpop.f32.mrf.mxu0
  %v2062 = vadd.f32 %v2004, %v2061
  %v2063 = vpop.f32.mrf.mxu0
  %2064 = vdwg.mxu0
  %2065 = vmatprep.subr.bf16.mxu0 0
  %2066 = vmatpush1.bf16.msra.mxu0 0
  %2067 = vmatprep.subr.bf16.mxu0 0
  %2068 = vmatpush1.bf16.msra.mxu0 0
  %2069 = vmatprep.subr.bf16.mxu0 0
  %2070 = vmatpush1.bf16.msra.mxu0 0
  %2071 = vmatprep.subr.bf16.mxu0 0
  %2072 = vmatpush1.bf16.msra.mxu0 0
  %2073 = vmatprep.subr.bf16.mxu0 0
  %2074 = vmatpush1.bf16.msra.mxu0 0
  %2075 = vmatprep.subr.bf16.mxu0 0
  %2076 = vmatpush1.bf16.msra.mxu0 0
  %2077 = vmatprep.subr.bf16.mxu0 0
  %2078 = vmatpush1.bf16.msra.mxu0 %v1989
  %2079 = vmatprep.subr.bf16.mxu0 0
  %2080 = vmatpush1.bf16.msra.mxu0 %v1988
  %2081 = vmatprep.subr.bf16.mxu0 0
  %2082 = vmatpush2.bf16.msra.mxu0 0
  %2083 = vmatprep.subr.bf16.mxu0 0
  %2084 = vmatpush2.bf16.msra.mxu0 0
  %2085 = vmatprep.subr.bf16.mxu0 0
  %2086 = vmatpush2.bf16.msra.mxu0 0
  %2087 = vmatprep.subr.bf16.mxu0 0
  %2088 = vmatpush2.bf16.msra.mxu0 0
  %2089 = vmatprep.subr.bf16.mxu0 0
  %2090 = vmatpush2.bf16.msra.mxu0 0
  %2091 = vmatprep.subr.bf16.mxu0 0
  %2092 = vmatpush2.bf16.msra.mxu0 0
  %2093 = vmatprep.subr.bf16.mxu0 0
  %2094 = vmatpush2.bf16.msra.mxu0 0
  %2095 = vmatprep.subr.bf16.mxu0 0
  %2096 = vmatpush2.bf16.msra.mxu0 0
  %2097 = vmatprep.mubr.bf16.mxu0 0
  %2098 = vmatmul.mubr.bf16.gmra.mxu0 %v2022
  %v2099 = vpop.f32.mrf.mxu0
  %v2100 = vadd.f32 %v2059, %v2099
  %v2101 = vpop.f32.mrf.mxu0
  %v2102 = vpop.f32.mrf.mxu0
  %v2103 = vadd.f32 %v2062, %v2102
  %v2104 = vpop.f32.mrf.mxu0
  %2105 = vdwg.mxu0
  %v2106 = vmax.f32 %v2100, 0.0
  %v2107 = vmax.f32 %v2103, 0.0
  %v2108 = vpack.c.bf16 %v2107, %v2106
  %v2109 = vld [vmem:[%s6] sm:$0xf]
  %v2110 = vld [vmem:[%s6 + $0x4] sm:$0xf]
  %v2111 = vld [vmem:[%s6 + $0x8] sm:$0xf]
  %v2112 = vld [vmem:[%s6 + $0xc] sm:$0xf]
  %v2117 = vunpack.c.l.b16 %v2109
  %v2118 = vunpack.c.l.b16 %v2110
  %v2119 = vunpack.c.l.b16 %v2111
  %v2120 = vunpack.c.l.b16 %v2112
  %v2121 = vpack.c.b16 %v2118, %v2117
  %v2122 = vpack.c.b16 %v2120, %v2119
  %v2126 = vsel %vm1388, %v2108, 0
  %2128 = vmatprep.subr.bf16.mxu0 0
  %2129 = vmatpush1.bf16.msra.mxu0 0
  %2130 = vmatprep.subr.bf16.mxu0 0
  %2131 = vmatpush1.bf16.msra.mxu0 0
  %2132 = vmatprep.subr.bf16.mxu0 0
  %2133 = vmatpush1.bf16.msra.mxu0 0
  %2134 = vmatprep.subr.bf16.mxu0 0
  %2135 = vmatpush1.bf16.msra.mxu0 0
  %2136 = vmatprep.subr.bf16.mxu0 0
  %2137 = vmatpush1.bf16.msra.mxu0 0
  %2138 = vmatprep.subr.bf16.mxu0 0
  %2139 = vmatpush1.bf16.msra.mxu0 0
  %2140 = vmatprep.subr.bf16.mxu0 0
  %2141 = vmatpush1.bf16.msra.mxu0 %v2122
  %2142 = vmatprep.subr.bf16.mxu0 0
  %2143 = vmatpush1.bf16.msra.mxu0 %v2121
  %2144 = vmatprep.subr.bf16.mxu0 0
  %2145 = vmatpush2.bf16.msra.mxu0 0
  %2146 = vmatprep.subr.bf16.mxu0 0
  %2147 = vmatpush2.bf16.msra.mxu0 0
  %2148 = vmatprep.subr.bf16.mxu0 0
  %2149 = vmatpush2.bf16.msra.mxu0 0
  %2150 = vmatprep.subr.bf16.mxu0 0
  %2151 = vmatpush2.bf16.msra.mxu0 0
  %2152 = vmatprep.subr.bf16.mxu0 0
  %2153 = vmatpush2.bf16.msra.mxu0 0
  %2154 = vmatprep.subr.bf16.mxu0 0
  %2155 = vmatpush2.bf16.msra.mxu0 0
  %2156 = vmatprep.subr.bf16.mxu0 0
  %2157 = vmatpush2.bf16.msra.mxu0 0
  %2158 = vmatprep.subr.bf16.mxu0 0
  %2159 = vmatpush2.bf16.msra.mxu0 0
  %2160 = vmatprep.mubr.bf16.mxu0 0
  %2161 = vmatmul.mubr.bf16.gmra.mxu0 %v2126
  %v2162 = vpop.f32.mrf.mxu0
  %v2163 = vadd.f32 0.0, %v2162
  %v2164 = vpop.f32.mrf.mxu0
  %v2165 = vpop.f32.mrf.mxu0
  %v2166 = vadd.f32 0.0, %v2165
  %v2167 = vpop.f32.mrf.mxu0
  %2168 = vdwg.mxu0
  %2169 = vrot.lane.b32.xlu0 %v2163, 9
  %v2170 = vpop.permute.xlu0 %2169
  %2171 = vrot.lane.b32.xlu0 %v2166, 9
  %v2172 = vpop.permute.xlu0 %2171
  %v2173 = vmul.f32 %v2170, %v1067
  %v2174 = vmul.f32 %v2172, %v1067
  %2175 = vrot.lane.b32.xlu0 %v2163, 8
  %v2176 = vpop.permute.xlu0 %2175
  %2177 = vrot.lane.b32.xlu0 %v2166, 8
  %v2178 = vpop.permute.xlu0 %2177
  %v2179 = vmul.f32 %v2176, %v1077
  %v2180 = vmul.f32 %v2178, %v1077
  %2181 = vrot.lane.b32.xlu0 %v2163, 7
  %v2182 = vpop.permute.xlu0 %2181
  %2183 = vrot.lane.b32.xlu0 %v2166, 7
  %v2184 = vpop.permute.xlu0 %2183
  %v2185 = vmul.f32 %v2182, %v1087
  %v2186 = vmul.f32 %v2184, %v1087
  %2187 = vrot.lane.b32.xlu0 %v2163, 1
  %v2188 = vpop.permute.xlu0 %2187
  %2189 = vrot.lane.b32.xlu0 %v2166, 1
  %v2190 = vpop.permute.xlu0 %2189
  %v2191 = vmul.f32 %v2188, %v1097
  %v2192 = vmul.f32 %v2190, %v1097
  %2193 = vrot.lane.b32.xlu0 %v2163, 127
  %v2194 = vpop.permute.xlu0 %2193
  %2195 = vrot.lane.b32.xlu0 %v2166, 127
  %v2196 = vpop.permute.xlu0 %2195
  %v2197 = vmul.f32 %v2194, %v1107
  %v2198 = vmul.f32 %v2196, %v1107
  %2199 = vrot.lane.b32.xlu0 %v2163, 121
  %v2200 = vpop.permute.xlu0 %2199
  %2201 = vrot.lane.b32.xlu0 %v2166, 121
  %v2202 = vpop.permute.xlu0 %2201
  %v2203 = vmul.f32 %v2200, %v1117
  %v2204 = vmul.f32 %v2202, %v1117
  %2205 = vrot.lane.b32.xlu0 %v2163, 120
  %v2206 = vpop.permute.xlu0 %2205
  %2207 = vrot.lane.b32.xlu0 %v2166, 120
  %v2208 = vpop.permute.xlu0 %2207
  %v2209 = vmul.f32 %v2206, %v1127
  %v2210 = vmul.f32 %v2208, %v1127
  %2211 = vrot.lane.b32.xlu0 %v2163, 119
  %v2212 = vpop.permute.xlu0 %2211
  %2213 = vrot.lane.b32.xlu0 %v2166, 119
  %v2214 = vpop.permute.xlu0 %2213
  %v2215 = vmul.f32 %v2212, %v1137
  %v2216 = vmul.f32 %v2214, %v1137
  %v2217 = vpack.c.bf16 %v2174, %v2173
  %v2218 = vpack.c.bf16 %v2180, %v2179
  %v2219 = vpack.c.bf16 %v2186, %v2185
  %v2220 = vpack.c.bf16 %v2192, %v2191
  %v2221 = vpack.c.bf16 %v2166, %v2163
  %v2222 = vpack.c.bf16 %v2198, %v2197
  %v2223 = vpack.c.bf16 %v2204, %v2203
  %v2224 = vpack.c.bf16 %v2210, %v2209
  %v2225 = vpack.c.bf16 %v2216, %v2215
  %v2226 = vld [vmem:[%s8 + $0x78] sm:$0xff]
  %v2227 = vld [vmem:[%s8 + $0x84] sm:$0xff]
  %v2228 = vld [vmem:[%s8 + $0x90] sm:$0xff]
  %v2229 = vld [vmem:[%s8 + $0x9c] sm:$0xff]
  %v2232 = vunpack.c.l.b16 %v2228
  %v2233 = vunpack.c.h.b16 %v2228
  %v2234 = vunpack.c.l.b16 %v2229
  %v2235 = vunpack.c.h.b16 %v2229
  %v2236 = vpack.c.b16 %v2234, %v2232
  %v2237 = vpack.c.b16 %v2235, %v2233
  %v2240 = vsel %vm1171, %v2237, 0
  %2242 = vmatprep.subr.bf16.mxu0 0
  %2243 = vmatpush1.bf16.msra.mxu0 %v1147
  %2244 = vmatprep.subr.bf16.mxu0 0
  %2245 = vmatpush1.bf16.msra.mxu0 %v1146
  %2246 = vmatprep.subr.bf16.mxu0 0
  %2247 = vmatpush1.bf16.msra.mxu0 %v1145
  %2248 = vmatprep.subr.bf16.mxu0 0
  %2249 = vmatpush1.bf16.msra.mxu0 %v1144
  %2250 = vmatprep.subr.bf16.mxu0 0
  %2251 = vmatpush1.bf16.msra.mxu0 %v1143
  %2252 = vmatprep.subr.bf16.mxu0 0
  %2253 = vmatpush1.bf16.msra.mxu0 %v1142
  %2254 = vmatprep.subr.bf16.mxu0 0
  %2255 = vmatpush1.bf16.msra.mxu0 %v1141
  %2256 = vmatprep.subr.bf16.mxu0 0
  %2257 = vmatpush1.bf16.msra.mxu0 %v1140
  %2258 = vmatprep.subr.bf16.mxu0 0
  %2259 = vmatpush2.bf16.msra.mxu0 0
  %2260 = vmatprep.subr.bf16.mxu0 0
  %2261 = vmatpush2.bf16.msra.mxu0 0
  %2262 = vmatprep.subr.bf16.mxu0 0
  %2263 = vmatpush2.bf16.msra.mxu0 0
  %2264 = vmatprep.subr.bf16.mxu0 0
  %2265 = vmatpush2.bf16.msra.mxu0 0
  %2266 = vmatprep.subr.bf16.mxu0 0
  %2267 = vmatpush2.bf16.msra.mxu0 0
  %2268 = vmatprep.subr.bf16.mxu0 0
  %2269 = vmatpush2.bf16.msra.mxu0 0
  %2270 = vmatprep.subr.bf16.mxu0 0
  %2271 = vmatpush2.bf16.msra.mxu0 0
  %2272 = vmatprep.subr.bf16.mxu0 0
  %2273 = vmatpush2.bf16.msra.mxu0 %v1148
  %2274 = vmatprep.mubr.bf16.mxu0 %v2240
  %2275 = vmatmul.mubr.bf16.gmra.mxu0 %v2236
  %v2276 = vpop.f32.mrf.mxu0
  %v2277 = vadd.f32 0.0, %v2276
  %v2278 = vpop.f32.mrf.mxu0
  %v2279 = vpop.f32.mrf.mxu0
  %v2280 = vadd.f32 0.0, %v2279
  %v2281 = vpop.f32.mrf.mxu0
  %2282 = vdwg.mxu0
  %v2285 = vunpack.c.l.b16 %v2226
  %v2286 = vunpack.c.h.b16 %v2226
  %v2287 = vunpack.c.l.b16 %v2227
  %v2288 = vunpack.c.h.b16 %v2227
  %v2289 = vpack.c.b16 %v2287, %v2285
  %v2290 = vpack.c.b16 %v2288, %v2286
  %v2293 = vsel %vm1171, %v2290, 0
  %2295 = vmatprep.subr.bf16.mxu0 0
  %2296 = vmatpush1.bf16.msra.mxu0 %v2224
  %2297 = vmatprep.subr.bf16.mxu0 0
  %2298 = vmatpush1.bf16.msra.mxu0 %v2223
  %2299 = vmatprep.subr.bf16.mxu0 0
  %2300 = vmatpush1.bf16.msra.mxu0 %v2222
  %2301 = vmatprep.subr.bf16.mxu0 0
  %2302 = vmatpush1.bf16.msra.mxu0 %v2221
  %2303 = vmatprep.subr.bf16.mxu0 0
  %2304 = vmatpush1.bf16.msra.mxu0 %v2220
  %2305 = vmatprep.subr.bf16.mxu0 0
  %2306 = vmatpush1.bf16.msra.mxu0 %v2219
  %2307 = vmatprep.subr.bf16.mxu0 0
  %2308 = vmatpush1.bf16.msra.mxu0 %v2218
  %2309 = vmatprep.subr.bf16.mxu0 0
  %2310 = vmatpush1.bf16.msra.mxu0 %v2217
  %2311 = vmatprep.subr.bf16.mxu0 0
  %2312 = vmatpush2.bf16.msra.mxu0 0
  %2313 = vmatprep.subr.bf16.mxu0 0
  %2314 = vmatpush2.bf16.msra.mxu0 0
  %2315 = vmatprep.subr.bf16.mxu0 0
  %2316 = vmatpush2.bf16.msra.mxu0 0
  %2317 = vmatprep.subr.bf16.mxu0 0
  %2318 = vmatpush2.bf16.msra.mxu0 0
  %2319 = vmatprep.subr.bf16.mxu0 0
  %2320 = vmatpush2.bf16.msra.mxu0 0
  %2321 = vmatprep.subr.bf16.mxu0 0
  %2322 = vmatpush2.bf16.msra.mxu0 0
  %2323 = vmatprep.subr.bf16.mxu0 0
  %2324 = vmatpush2.bf16.msra.mxu0 0
  %2325 = vmatprep.subr.bf16.mxu0 0
  %2326 = vmatpush2.bf16.msra.mxu0 %v2225
  %2327 = vmatprep.mubr.bf16.mxu0 %v2293
  %2328 = vmatmul.mubr.bf16.gmra.mxu0 %v2289
  %v2329 = vpop.f32.mrf.mxu0
  %v2330 = vadd.f32 %v2277, %v2329
  %v2331 = vpop.f32.mrf.mxu0
  %v2332 = vpop.f32.mrf.mxu0
  %v2333 = vadd.f32 %v2280, %v2332
  %v2334 = vpop.f32.mrf.mxu0
  %2335 = vdwg.mxu0
  %v2336 = vld [vmem:[%s9 + $0x50] sm:$0xff]
  %v2337 = vld [vmem:[%s9 + $0x58] sm:$0xff]
  %2339 = vset.pattern.permute.xlu0 0
  %2340 = vperm.xlu0 %2339, %v2336
  %v2341 = vpop.permute.xlu0 %2340
  %2344 = vset.pattern.permute.xlu0 0
  %2345 = vperm.xlu0 %2344, %v2337
  %v2346 = vpop.permute.xlu0 %2345
  %v2348 = vadd.f32 %v2330, %v2341
  %v2349 = vadd.f32 %v2333, %v2346
  %v2350 = vmax.f32 %v2348, 0.0
  %v2351 = vmax.f32 %v2349, 0.0
  %v2352 = vpack.c.bf16 %v2351, %v2350
  %v2353 = vld [vmem:[%s7] sm:$0xff]
  %v2354 = vld [vmem:[%s7 + $0x8] sm:$0xff]
  %v2355 = vld [vmem:[%s7 + $0x10] sm:$0xff]
  %v2356 = vld [vmem:[%s7 + $0x18] sm:$0xff]
  %v2357 = vld [vmem:[%s7 + $0x20] sm:$0xff]
  %v2358 = vld [vmem:[%s7 + $0x28] sm:$0xff]
  %v2359 = vld [vmem:[%s7 + $0x30] sm:$0xff]
  %v2360 = vld [vmem:[%s7 + $0x38] sm:$0xff]
  %v2361 = vld [vmem:[%s7 + $0x40] sm:$0xff]
  %v2362 = vld [vmem:[%s7 + $0x48] sm:$0xff]
  %v2363 = vld [vmem:[%s7 + $0x50] sm:$0xff]
  %v2364 = vld [vmem:[%s7 + $0x58] sm:$0xff]
  %v2365 = vld [vmem:[%s7 + $0x60] sm:$0xff]
  %v2366 = vld [vmem:[%s7 + $0x68] sm:$0xff]
  %v2367 = vld [vmem:[%s7 + $0x70] sm:$0xff]
  %v2368 = vld [vmem:[%s7 + $0x78] sm:$0xff]
  %v2369 = vld [vmem:[%s7 + $0x80] sm:$0xff]
  %v2370 = vld [vmem:[%s7 + $0x88] sm:$0xff]
  %v2371 = vld [vmem:[%s7 + $0x90] sm:$0xff]
  %v2372 = vld [vmem:[%s7 + $0x98] sm:$0xff]
  %v2373 = vld [vmem:[%s7 + $0xa0] sm:$0xff]
  %v2374 = vld [vmem:[%s7 + $0xa8] sm:$0xff]
  %v2375 = vld [vmem:[%s7 + $0xb0] sm:$0xff]
  %v2376 = vld [vmem:[%s7 + $0xb8] sm:$0xff]
  %v2377 = vld [vmem:[%s7 + $0xc0] sm:$0xff]
  %v2378 = vld [vmem:[%s7 + $0xc8] sm:$0xff]
  %v2379 = vld [vmem:[%s7 + $0xd0] sm:$0xff]
  %v2380 = vld [vmem:[%s7 + $0xd8] sm:$0xff]
  %v2381 = vld [vmem:[%s7 + $0xe0] sm:$0xff]
  %v2382 = vld [vmem:[%s7 + $0xe8] sm:$0xff]
  %v2383 = vld [vmem:[%s7 + $0xf0] sm:$0xff]
  %v2384 = vld [vmem:[%s7 + $0xf8] sm:$0xff]
  %v2417 = vunpack.c.l.b16 %v2353
  %v2418 = vunpack.c.h.b16 %v2353
  %v2419 = vunpack.c.l.b16 %v2354
  %v2420 = vunpack.c.h.b16 %v2354
  %v2421 = vunpack.c.l.b16 %v2355
  %v2422 = vunpack.c.h.b16 %v2355
  %v2423 = vunpack.c.l.b16 %v2356
  %v2424 = vunpack.c.h.b16 %v2356
  %v2425 = vunpack.c.l.b16 %v2357
  %v2426 = vunpack.c.h.b16 %v2357
  %v2427 = vunpack.c.l.b16 %v2358
  %v2428 = vunpack.c.h.b16 %v2358
  %v2429 = vunpack.c.l.b16 %v2359
  %v2430 = vunpack.c.h.b16 %v2359
  %v2431 = vunpack.c.l.b16 %v2360
  %v2432 = vunpack.c.h.b16 %v2360
  %v2433 = vunpack.c.l.b16 %v2361
  %v2434 = vunpack.c.h.b16 %v2361
  %v2435 = vunpack.c.l.b16 %v2362
  %v2436 = vunpack.c.h.b16 %v2362
  %v2437 = vunpack.c.l.b16 %v2363
  %v2438 = vunpack.c.h.b16 %v2363
  %v2439 = vunpack.c.l.b16 %v2364
  %v2440 = vunpack.c.h.b16 %v2364
  %v2441 = vunpack.c.l.b16 %v2365
  %v2442 = vunpack.c.h.b16 %v2365
  %v2443 = vunpack.c.l.b16 %v2366
  %v2444 = vunpack.c.h.b16 %v2366
  %v2445 = vunpack.c.l.b16 %v2367
  %v2446 = vunpack.c.h.b16 %v2367
  %v2447 = vunpack.c.l.b16 %v2368
  %v2448 = vunpack.c.h.b16 %v2368
  %v2449 = vunpack.c.l.b16 %v2369
  %v2450 = vunpack.c.h.b16 %v2369
  %v2451 = vunpack.c.l.b16 %v2370
  %v2452 = vunpack.c.h.b16 %v2370
  %v2453 = vunpack.c.l.b16 %v2371
  %v2454 = vunpack.c.h.b16 %v2371
  %v2455 = vunpack.c.l.b16 %v2372
  %v2456 = vunpack.c.h.b16 %v2372
  %v2457 = vunpack.c.l.b16 %v2373
  %v2458 = vunpack.c.h.b16 %v2373
  %v2459 = vunpack.c.l.b16 %v2374
  %v2460 = vunpack.c.h.b16 %v2374
  %v2461 = vunpack.c.l.b16 %v2375
  %v2462 = vunpack.c.h.b16 %v2375
  %v2463 = vunpack.c.l.b16 %v2376
  %v2464 = vunpack.c.h.b16 %v2376
  %v2465 = vunpack.c.l.b16 %v2377
  %v2466 = vunpack.c.h.b16 %v2377
  %v2467 = vunpack.c.l.b16 %v2378
  %v2468 = vunpack.c.h.b16 %v2378
  %v2469 = vunpack.c.l.b16 %v2379
  %v2470 = vunpack.c.h.b16 %v2379
  %v2471 = vunpack.c.l.b16 %v2380
  %v2472 = vunpack.c.h.b16 %v2380
  %v2473 = vunpack.c.l.b16 %v2381
  %v2474 = vunpack.c.h.b16 %v2381
  %v2475 = vunpack.c.l.b16 %v2382
  %v2476 = vunpack.c.h.b16 %v2382
  %v2477 = vunpack.c.l.b16 %v2383
  %v2478 = vunpack.c.h.b16 %v2383
  %v2479 = vunpack.c.l.b16 %v2384
  %v2480 = vunpack.c.h.b16 %v2384
  %v2481 = vpack.c.b16 %v2421, %v2417
  %v2482 = vpack.c.b16 %v2422, %v2418
  %v2483 = vpack.c.b16 %v2423, %v2419
  %v2484 = vpack.c.b16 %v2424, %v2420
  %v2485 = vpack.c.b16 %v2429, %v2425
  %v2486 = vpack.c.b16 %v2430, %v2426
  %v2487 = vpack.c.b16 %v2431, %v2427
  %v2488 = vpack.c.b16 %v2432, %v2428
  %v2489 = vpack.c.b16 %v2437, %v2433
  %v2490 = vpack.c.b16 %v2438, %v2434
  %v2491 = vpack.c.b16 %v2439, %v2435
  %v2492 = vpack.c.b16 %v2440, %v2436
  %v2493 = vpack.c.b16 %v2445, %v2441
  %v2494 = vpack.c.b16 %v2446, %v2442
  %v2495 = vpack.c.b16 %v2447, %v2443
  %v2496 = vpack.c.b16 %v2448, %v2444
  %v2497 = vpack.c.b16 %v2453, %v2449
  %v2498 = vpack.c.b16 %v2454, %v2450
  %v2499 = vpack.c.b16 %v2455, %v2451
  %v2500 = vpack.c.b16 %v2456, %v2452
  %v2501 = vpack.c.b16 %v2461, %v2457
  %v2502 = vpack.c.b16 %v2462, %v2458
  %v2503 = vpack.c.b16 %v2463, %v2459
  %v2504 = vpack.c.b16 %v2464, %v2460
  %v2505 = vpack.c.b16 %v2469, %v2465
  %v2506 = vpack.c.b16 %v2470, %v2466
  %v2507 = vpack.c.b16 %v2471, %v2467
  %v2508 = vpack.c.b16 %v2472, %v2468
  %v2509 = vpack.c.b16 %v2477, %v2473
  %v2510 = vpack.c.b16 %v2478, %v2474
  %v2511 = vpack.c.b16 %v2479, %v2475
  %v2512 = vpack.c.b16 %v2480, %v2476
  %2545 = vmatprep.subr.bf16.mxu0 %v2510
  %2546 = vmatpush1.bf16.msra.mxu0 %v2509
  %2547 = vmatprep.subr.bf16.mxu0 %v2506
  %2548 = vmatpush1.bf16.msra.mxu0 %v2505
  %2549 = vmatprep.subr.bf16.mxu0 %v2502
  %2550 = vmatpush1.bf16.msra.mxu0 %v2501
  %2551 = vmatprep.subr.bf16.mxu0 %v2498
  %2552 = vmatpush1.bf16.msra.mxu0 %v2497
  %2553 = vmatprep.subr.bf16.mxu0 %v2494
  %2554 = vmatpush1.bf16.msra.mxu0 %v2493
  %2555 = vmatprep.subr.bf16.mxu0 %v2490
  %2556 = vmatpush1.bf16.msra.mxu0 %v2489
  %2557 = vmatprep.subr.bf16.mxu0 %v2486
  %2558 = vmatpush1.bf16.msra.mxu0 %v2485
  %2559 = vmatprep.subr.bf16.mxu0 %v2482
  %2560 = vmatpush1.bf16.msra.mxu0 %v2481
  %2561 = vmatprep.subr.bf16.mxu0 0
  %2562 = vmatpush2.bf16.msra.mxu0 0
  %2563 = vmatprep.subr.bf16.mxu0 0
  %2564 = vmatpush2.bf16.msra.mxu0 0
  %2565 = vmatprep.subr.bf16.mxu0 0
  %2566 = vmatpush2.bf16.msra.mxu0 0
  %2567 = vmatprep.subr.bf16.mxu0 0
  %2568 = vmatpush2.bf16.msra.mxu0 0
  %2569 = vmatprep.subr.bf16.mxu0 0
  %2570 = vmatpush2.bf16.msra.mxu0 0
  %2571 = vmatprep.subr.bf16.mxu0 0
  %2572 = vmatpush2.bf16.msra.mxu0 0
  %2573 = vmatprep.subr.bf16.mxu0 0
  %2574 = vmatpush2.bf16.msra.mxu0 0
  %2575 = vmatprep.subr.bf16.mxu0 0
  %2576 = vmatpush2.bf16.msra.mxu0 0
  %2577 = vmatprep.mubr.bf16.mxu0 0
  %2578 = vmatmul.mubr.bf16.gmra.mxu0 %v2352
  %v2579 = vpop.f32.mrf.mxu0
  %v2580 = vadd.f32 0.0, %v2579
  %v2581 = vpop.f32.mrf.mxu0
  %v2582 = vadd.f32 0.0, %v2581
  %v2583 = vpop.f32.mrf.mxu0
  %v2584 = vadd.f32 0.0, %v2583
  %v2585 = vpop.f32.mrf.mxu0
  %v2586 = vadd.f32 0.0, %v2585
  %2587 = vdwg.mxu0
  %2588 = vmatprep.subr.bf16.mxu0 %v2512
  %2589 = vmatpush1.bf16.msra.mxu0 %v2511
  %2590 = vmatprep.subr.bf16.mxu0 %v2508
  %2591 = vmatpush1.bf16.msra.mxu0 %v2507
  %2592 = vmatprep.subr.bf16.mxu0 %v2504
  %2593 = vmatpush1.bf16.msra.mxu0 %v2503
  %2594 = vmatprep.subr.bf16.mxu0 %v2500
  %2595 = vmatpush1.bf16.msra.mxu0 %v2499
  %2596 = vmatprep.subr.bf16.mxu0 %v2496
  %2597 = vmatpush1.bf16.msra.mxu0 %v2495
  %2598 = vmatprep.subr.bf16.mxu0 %v2492
  %2599 = vmatpush1.bf16.msra.mxu0 %v2491
  %2600 = vmatprep.subr.bf16.mxu0 %v2488
  %2601 = vmatpush1.bf16.msra.mxu0 %v2487
  %2602 = vmatprep.subr.bf16.mxu0 %v2484
  %2603 = vmatpush1.bf16.msra.mxu0 %v2483
  %2604 = vmatprep.subr.bf16.mxu0 0
  %2605 = vmatpush2.bf16.msra.mxu0 0
  %2606 = vmatprep.subr.bf16.mxu0 0
  %2607 = vmatpush2.bf16.msra.mxu0 0
  %2608 = vmatprep.subr.bf16.mxu0 0
  %2609 = vmatpush2.bf16.msra.mxu0 0
  %2610 = vmatprep.subr.bf16.mxu0 0
  %2611 = vmatpush2.bf16.msra.mxu0 0
  %2612 = vmatprep.subr.bf16.mxu0 0
  %2613 = vmatpush2.bf16.msra.mxu0 0
  %2614 = vmatprep.subr.bf16.mxu0 0
  %2615 = vmatpush2.bf16.msra.mxu0 0
  %2616 = vmatprep.subr.bf16.mxu0 0
  %2617 = vmatpush2.bf16.msra.mxu0 0
  %2618 = vmatprep.subr.bf16.mxu0 0
  %2619 = vmatpush2.bf16.msra.mxu0 0
  %2620 = vmatprep.mubr.bf16.mxu0 0
  %2621 = vmatmul.mubr.bf16.gmra.mxu0 %v2352
  %v2622 = vpop.f32.mrf.mxu0
  %v2623 = vadd.f32 0.0, %v2622
  %v2624 = vpop.f32.mrf.mxu0
  %v2625 = vadd.f32 0.0, %v2624
  %v2626 = vpop.f32.mrf.mxu0
  %v2627 = vadd.f32 0.0, %v2626
  %v2628 = vpop.f32.mrf.mxu0
  %v2629 = vadd.f32 0.0, %v2628
  %2630 = vdwg.mxu0
  %2631 = vrot.lane.b32.xlu0 %v2580, 17
  %v2632 = vpop.permute.xlu0 %2631
  %2633 = vrot.lane.b32.xlu0 %v2584, 17
  %v2634 = vpop.permute.xlu0 %2633
  %2635 = vrot.lane.b32.xlu0 %v2582, 17
  %v2636 = vpop.permute.xlu0 %2635
  %2637 = vrot.lane.b32.xlu0 %v2586, 17
  %v2638 = vpop.permute.xlu0 %2637
  %2639 = vrot.lane.b32.xlu0 %v2623, 17
  %v2640 = vpop.permute.xlu0 %2639
  %2641 = vrot.lane.b32.xlu0 %v2627, 17
  %v2642 = vpop.permute.xlu0 %2641
  %2643 = vrot.lane.b32.xlu0 %v2625, 17
  %v2644 = vpop.permute.xlu0 %2643
  %2645 = vrot.lane.b32.xlu0 %v2629, 17
  %v2646 = vpop.permute.xlu0 %2645
  %v2647 = vsel %vm62, %v2640, %v2644
  %v2648 = vsel %vm62, %v2642, %v2646
  %v2649 = vsel %vm62, %v2636, %v2640
  %v2650 = vsel %vm62, %v2638, %v2642
  %v2651 = vsel %vm62, %v2632, %v2636
  %v2652 = vsel %vm62, %v2634, %v2638
  %v2653 = vsel %vm62, %v2644, %v2632
  %v2654 = vsel %vm62, %v2646, %v2634
  %v2655 = vmul.f32 %v2653, %v70
  %v2656 = vmul.f32 %v2651, %v74
  %v2657 = vmul.f32 %v2649, %v78
  %v2658 = vmul.f32 %v2647, %v82
  %v2659 = vmul.f32 %v2654, %v70
  %v2660 = vmul.f32 %v2652, %v74
  %v2661 = vmul.f32 %v2650, %v78
  %v2662 = vmul.f32 %v2648, %v82
  %2663 = vrot.lane.b32.xlu0 %v2580, 16
  %v2664 = vpop.permute.xlu0 %2663
  %2665 = vrot.lane.b32.xlu0 %v2584, 16
  %v2666 = vpop.permute.xlu0 %2665
  %2667 = vrot.lane.b32.xlu0 %v2582, 16
  %v2668 = vpop.permute.xlu0 %2667
  %2669 = vrot.lane.b32.xlu0 %v2586, 16
  %v2670 = vpop.permute.xlu0 %2669
  %2671 = vrot.lane.b32.xlu0 %v2623, 16
  %v2672 = vpop.permute.xlu0 %2671
  %2673 = vrot.lane.b32.xlu0 %v2627, 16
  %v2674 = vpop.permute.xlu0 %2673
  %2675 = vrot.lane.b32.xlu0 %v2625, 16
  %v2676 = vpop.permute.xlu0 %2675
  %2677 = vrot.lane.b32.xlu0 %v2629, 16
  %v2678 = vpop.permute.xlu0 %2677
  %v2679 = vsel %vm95, %v2672, %v2676
  %v2680 = vsel %vm95, %v2674, %v2678
  %v2681 = vsel %vm95, %v2668, %v2672
  %v2682 = vsel %vm95, %v2670, %v2674
  %v2683 = vsel %vm95, %v2664, %v2668
  %v2684 = vsel %vm95, %v2666, %v2670
  %v2685 = vsel %vm95, %v2676, %v2664
  %v2686 = vsel %vm95, %v2678, %v2666
  %v2687 = vmul.f32 %v2685, %v103
  %v2688 = vmul.f32 %v2683, %v107
  %v2689 = vmul.f32 %v2681, %v111
  %v2690 = vmul.f32 %v2679, %v115
  %v2691 = vmul.f32 %v2686, %v103
  %v2692 = vmul.f32 %v2684, %v107
  %v2693 = vmul.f32 %v2682, %v111
  %v2694 = vmul.f32 %v2680, %v115
  %2695 = vrot.lane.b32.xlu0 %v2580, 15
  %v2696 = vpop.permute.xlu0 %2695
  %2697 = vrot.lane.b32.xlu0 %v2584, 15
  %v2698 = vpop.permute.xlu0 %2697
  %2699 = vrot.lane.b32.xlu0 %v2582, 15
  %v2700 = vpop.permute.xlu0 %2699
  %2701 = vrot.lane.b32.xlu0 %v2586, 15
  %v2702 = vpop.permute.xlu0 %2701
  %2703 = vrot.lane.b32.xlu0 %v2623, 15
  %v2704 = vpop.permute.xlu0 %2703
  %2705 = vrot.lane.b32.xlu0 %v2627, 15
  %v2706 = vpop.permute.xlu0 %2705
  %2707 = vrot.lane.b32.xlu0 %v2625, 15
  %v2708 = vpop.permute.xlu0 %2707
  %2709 = vrot.lane.b32.xlu0 %v2629, 15
  %v2710 = vpop.permute.xlu0 %2709
  %v2711 = vsel %vm128, %v2704, %v2708
  %v2712 = vsel %vm128, %v2706, %v2710
  %v2713 = vsel %vm128, %v2700, %v2704
  %v2714 = vsel %vm128, %v2702, %v2706
  %v2715 = vsel %vm128, %v2696, %v2700
  %v2716 = vsel %vm128, %v2698, %v2702
  %v2717 = vsel %vm128, %v2708, %v2696
  %v2718 = vsel %vm128, %v2710, %v2698
  %v2719 = vmul.f32 %v2717, %v136
  %v2720 = vmul.f32 %v2715, %v140
  %v2721 = vmul.f32 %v2713, %v144
  %v2722 = vmul.f32 %v2711, %v148
  %v2723 = vmul.f32 %v2718, %v136
  %v2724 = vmul.f32 %v2716, %v140
  %v2725 = vmul.f32 %v2714, %v144
  %v2726 = vmul.f32 %v2712, %v148
  %2727 = vrot.lane.b32.xlu0 %v2580, 1
  %v2728 = vpop.permute.xlu0 %2727
  %2729 = vrot.lane.b32.xlu0 %v2584, 1
  %v2730 = vpop.permute.xlu0 %2729
  %2731 = vrot.lane.b32.xlu0 %v2582, 1
  %v2732 = vpop.permute.xlu0 %2731
  %2733 = vrot.lane.b32.xlu0 %v2586, 1
  %v2734 = vpop.permute.xlu0 %2733
  %2735 = vrot.lane.b32.xlu0 %v2623, 1
  %v2736 = vpop.permute.xlu0 %2735
  %2737 = vrot.lane.b32.xlu0 %v2627, 1
  %v2738 = vpop.permute.xlu0 %2737
  %2739 = vrot.lane.b32.xlu0 %v2625, 1
  %v2740 = vpop.permute.xlu0 %2739
  %2741 = vrot.lane.b32.xlu0 %v2629, 1
  %v2742 = vpop.permute.xlu0 %2741
  %v2743 = vsel %vm161, %v2736, %v2740
  %v2744 = vsel %vm161, %v2738, %v2742
  %v2745 = vsel %vm161, %v2732, %v2736
  %v2746 = vsel %vm161, %v2734, %v2738
  %v2747 = vsel %vm161, %v2728, %v2732
  %v2748 = vsel %vm161, %v2730, %v2734
  %v2749 = vsel %vm161, %v2740, %v2728
  %v2750 = vsel %vm161, %v2742, %v2730
  %v2751 = vmul.f32 %v2749, %v169
  %v2752 = vmul.f32 %v2747, %v173
  %v2753 = vmul.f32 %v2745, %v177
  %v2754 = vmul.f32 %v2743, %v181
  %v2755 = vmul.f32 %v2750, %v169
  %v2756 = vmul.f32 %v2748, %v173
  %v2757 = vmul.f32 %v2746, %v177
  %v2758 = vmul.f32 %v2744, %v181
  %2759 = vrot.lane.b32.xlu0 %v2580, 127
  %v2760 = vpop.permute.xlu0 %2759
  %2761 = vrot.lane.b32.xlu0 %v2584, 127
  %v2762 = vpop.permute.xlu0 %2761
  %2763 = vrot.lane.b32.xlu0 %v2582, 127
  %v2764 = vpop.permute.xlu0 %2763
  %2765 = vrot.lane.b32.xlu0 %v2586, 127
  %v2766 = vpop.permute.xlu0 %2765
  %2767 = vrot.lane.b32.xlu0 %v2623, 127
  %v2768 = vpop.permute.xlu0 %2767
  %2769 = vrot.lane.b32.xlu0 %v2627, 127
  %v2770 = vpop.permute.xlu0 %2769
  %2771 = vrot.lane.b32.xlu0 %v2625, 127
  %v2772 = vpop.permute.xlu0 %2771
  %2773 = vrot.lane.b32.xlu0 %v2629, 127
  %v2774 = vpop.permute.xlu0 %2773
  %v2775 = vsel %vm194, %v2768, %v2772
  %v2776 = vsel %vm194, %v2770, %v2774
  %v2777 = vsel %vm194, %v2764, %v2768
  %v2778 = vsel %vm194, %v2766, %v2770
  %v2779 = vsel %vm194, %v2760, %v2764
  %v2780 = vsel %vm194, %v2762, %v2766
  %v2781 = vsel %vm194, %v2772, %v2760
  %v2782 = vsel %vm194, %v2774, %v2762
  %v2783 = vmul.f32 %v2779, %v202
  %v2784 = vmul.f32 %v2777, %v206
  %v2785 = vmul.f32 %v2775, %v210
  %v2786 = vmul.f32 %v2781, %v214
  %v2787 = vmul.f32 %v2780, %v202
  %v2788 = vmul.f32 %v2778, %v206
  %v2789 = vmul.f32 %v2776, %v210
  %v2790 = vmul.f32 %v2782, %v214
  %2791 = vrot.lane.b32.xlu0 %v2580, 113
  %v2792 = vpop.permute.xlu0 %2791
  %2793 = vrot.lane.b32.xlu0 %v2584, 113
  %v2794 = vpop.permute.xlu0 %2793
  %2795 = vrot.lane.b32.xlu0 %v2582, 113
  %v2796 = vpop.permute.xlu0 %2795
  %2797 = vrot.lane.b32.xlu0 %v2586, 113
  %v2798 = vpop.permute.xlu0 %2797
  %2799 = vrot.lane.b32.xlu0 %v2623, 113
  %v2800 = vpop.permute.xlu0 %2799
  %2801 = vrot.lane.b32.xlu0 %v2627, 113
  %v2802 = vpop.permute.xlu0 %2801
  %2803 = vrot.lane.b32.xlu0 %v2625, 113
  %v2804 = vpop.permute.xlu0 %2803
  %2805 = vrot.lane.b32.xlu0 %v2629, 113
  %v2806 = vpop.permute.xlu0 %2805
  %v2807 = vsel %vm227, %v2800, %v2804
  %v2808 = vsel %vm227, %v2802, %v2806
  %v2809 = vsel %vm227, %v2796, %v2800
  %v2810 = vsel %vm227, %v2798, %v2802
  %v2811 = vsel %vm227, %v2792, %v2796
  %v2812 = vsel %vm227, %v2794, %v2798
  %v2813 = vsel %vm227, %v2804, %v2792
  %v2814 = vsel %vm227, %v2806, %v2794
  %v2815 = vmul.f32 %v2811, %v235
  %v2816 = vmul.f32 %v2809, %v239
  %v2817 = vmul.f32 %v2807, %v243
  %v2818 = vmul.f32 %v2813, %v247
  %v2819 = vmul.f32 %v2812, %v235
  %v2820 = vmul.f32 %v2810, %v239
  %v2821 = vmul.f32 %v2808, %v243
  %v2822 = vmul.f32 %v2814, %v247
  %2823 = vrot.lane.b32.xlu0 %v2580, 112
  %v2824 = vpop.permute.xlu0 %2823
  %2825 = vrot.lane.b32.xlu0 %v2584, 112
  %v2826 = vpop.permute.xlu0 %2825
  %2827 = vrot.lane.b32.xlu0 %v2582, 112
  %v2828 = vpop.permute.xlu0 %2827
  %2829 = vrot.lane.b32.xlu0 %v2586, 112
  %v2830 = vpop.permute.xlu0 %2829
  %2831 = vrot.lane.b32.xlu0 %v2623, 112
  %v2832 = vpop.permute.xlu0 %2831
  %2833 = vrot.lane.b32.xlu0 %v2627, 112
  %v2834 = vpop.permute.xlu0 %2833
  %2835 = vrot.lane.b32.xlu0 %v2625, 112
  %v2836 = vpop.permute.xlu0 %2835
  %2837 = vrot.lane.b32.xlu0 %v2629, 112
  %v2838 = vpop.permute.xlu0 %2837
  %v2839 = vsel %vm260, %v2832, %v2836
  %v2840 = vsel %vm260, %v2834, %v2838
  %v2841 = vsel %vm260, %v2828, %v2832
  %v2842 = vsel %vm260, %v2830, %v2834
  %v2843 = vsel %vm260, %v2824, %v2828
  %v2844 = vsel %vm260, %v2826, %v2830
  %v2845 = vsel %vm260, %v2836, %v2824
  %v2846 = vsel %vm260, %v2838, %v2826
  %v2847 = vmul.f32 %v2843, %v268
  %v2848 = vmul.f32 %v2841, %v272
  %v2849 = vmul.f32 %v2839, %v276
  %v2850 = vmul.f32 %v2845, %v280
  %v2851 = vmul.f32 %v2844, %v268
  %v2852 = vmul.f32 %v2842, %v272
  %v2853 = vmul.f32 %v2840, %v276
  %v2854 = vmul.f32 %v2846, %v280
  %2855 = vrot.lane.b32.xlu0 %v2580, 111
  %v2856 = vpop.permute.xlu0 %2855
  %2857 = vrot.lane.b32.xlu0 %v2584, 111
  %v2858 = vpop.permute.xlu0 %2857
  %2859 = vrot.lane.b32.xlu0 %v2582, 111
  %v2860 = vpop.permute.xlu0 %2859
  %2861 = vrot.lane.b32.xlu0 %v2586, 111
  %v2862 = vpop.permute.xlu0 %2861
  %2863 = vrot.lane.b32.xlu0 %v2623, 111
  %v2864 = vpop.permute.xlu0 %2863
  %2865 = vrot.lane.b32.xlu0 %v2627, 111
  %v2866 = vpop.permute.xlu0 %2865
  %2867 = vrot.lane.b32.xlu0 %v2625, 111
  %v2868 = vpop.permute.xlu0 %2867
  %2869 = vrot.lane.b32.xlu0 %v2629, 111
  %v2870 = vpop.permute.xlu0 %2869
  %v2871 = vsel %vm293, %v2864, %v2868
  %v2872 = vsel %vm293, %v2866, %v2870
  %v2873 = vsel %vm293, %v2860, %v2864
  %v2874 = vsel %vm293, %v2862, %v2866
  %v2875 = vsel %vm293, %v2856, %v2860
  %v2876 = vsel %vm293, %v2858, %v2862
  %v2877 = vsel %vm293, %v2868, %v2856
  %v2878 = vsel %vm293, %v2870, %v2858
  %v2879 = vmul.f32 %v2875, %v301
  %v2880 = vmul.f32 %v2873, %v305
  %v2881 = vmul.f32 %v2871, %v309
  %v2882 = vmul.f32 %v2877, %v313
  %v2883 = vmul.f32 %v2876, %v301
  %v2884 = vmul.f32 %v2874, %v305
  %v2885 = vmul.f32 %v2872, %v309
  %v2886 = vmul.f32 %v2878, %v313
  %v2887 = vpack.c.bf16 %v2659, %v2655
  %v2888 = vpack.c.bf16 %v2660, %v2656
  %v2889 = vpack.c.bf16 %v2661, %v2657
  %v2890 = vpack.c.bf16 %v2662, %v2658
  %v2891 = vpack.c.bf16 %v2691, %v2687
  %v2892 = vpack.c.bf16 %v2692, %v2688
  %v2893 = vpack.c.bf16 %v2693, %v2689
  %v2894 = vpack.c.bf16 %v2694, %v2690
  %v2895 = vpack.c.bf16 %v2723, %v2719
  %v2896 = vpack.c.bf16 %v2724, %v2720
  %v2897 = vpack.c.bf16 %v2725, %v2721
  %v2898 = vpack.c.bf16 %v2726, %v2722
  %v2899 = vpack.c.bf16 %v2755, %v2751
  %v2900 = vpack.c.bf16 %v2756, %v2752
  %v2901 = vpack.c.bf16 %v2757, %v2753
  %v2902 = vpack.c.bf16 %v2758, %v2754
  %v2903 = vpack.c.bf16 %v2584, %v2580
  %v2904 = vpack.c.bf16 %v2586, %v2582
  %v2905 = vpack.c.bf16 %v2627, %v2623
  %v2906 = vpack.c.bf16 %v2629, %v2625
  %v2907 = vpack.c.bf16 %v2787, %v2783
  %v2908 = vpack.c.bf16 %v2788, %v2784
  %v2909 = vpack.c.bf16 %v2789, %v2785
  %v2910 = vpack.c.bf16 %v2790, %v2786
  %v2911 = vpack.c.bf16 %v2819, %v2815
  %v2912 = vpack.c.bf16 %v2820, %v2816
  %v2913 = vpack.c.bf16 %v2821, %v2817
  %v2914 = vpack.c.bf16 %v2822, %v2818
  %v2915 = vpack.c.bf16 %v2851, %v2847
  %v2916 = vpack.c.bf16 %v2852, %v2848
  %v2917 = vpack.c.bf16 %v2853, %v2849
  %v2918 = vpack.c.bf16 %v2854, %v2850
  %v2919 = vpack.c.bf16 %v2883, %v2879
  %v2920 = vpack.c.bf16 %v2884, %v2880
  %v2921 = vpack.c.bf16 %v2885, %v2881
  %v2922 = vpack.c.bf16 %v2886, %v2882
  %v2923 = vld [vmem:[%s8 + $0xa8] sm:$0xff]
  %v2924 = vld [vmem:[%s8 + $0xc0] sm:$0xf]
  %v2926 = vsel %vm345, %v2924, 0
  %2928 = vmatprep.subr.bf16.mxu0 0
  %2929 = vmatpush1.bf16.msra.mxu0 0
  %2930 = vmatprep.subr.bf16.mxu0 0
  %2931 = vmatpush1.bf16.msra.mxu0 0
  %2932 = vmatprep.subr.bf16.mxu0 0
  %2933 = vmatpush1.bf16.msra.mxu0 0
  %2934 = vmatprep.subr.bf16.mxu0 %v610
  %2935 = vmatpush1.bf16.msra.mxu0 %v607
  %2936 = vmatprep.subr.bf16.mxu0 %v589
  %2937 = vmatpush1.bf16.msra.mxu0 %v588
  %2938 = vmatprep.subr.bf16.mxu0 %v585
  %2939 = vmatpush1.bf16.msra.mxu0 %v584
  %2940 = vmatprep.subr.bf16.mxu0 %v581
  %2941 = vmatpush1.bf16.msra.mxu0 %v580
  %2942 = vmatprep.subr.bf16.mxu0 %v577
  %2943 = vmatpush1.bf16.msra.mxu0 %v576
  %2944 = vmatprep.subr.bf16.mxu0 0
  %2945 = vmatpush2.bf16.msra.mxu0 0
  %2946 = vmatprep.subr.bf16.mxu0 0
  %2947 = vmatpush2.bf16.msra.mxu0 0
  %2948 = vmatprep.subr.bf16.mxu0 0
  %2949 = vmatpush2.bf16.msra.mxu0 0
  %2950 = vmatprep.subr.bf16.mxu0 0
  %2951 = vmatpush2.bf16.msra.mxu0 0
  %2952 = vmatprep.subr.bf16.mxu0 0
  %2953 = vmatpush2.bf16.msra.mxu0 0
  %2954 = vmatprep.subr.bf16.mxu0 0
  %2955 = vmatpush2.bf16.msra.mxu0 0
  %2956 = vmatprep.subr.bf16.mxu0 0
  %2957 = vmatpush2.bf16.msra.mxu0 0
  %2958 = vmatprep.subr.bf16.mxu0 0
  %2959 = vmatpush2.bf16.msra.mxu0 0
  %2960 = vmatprep.mubr.bf16.mxu0 0
  %2961 = vmatmul.mubr.bf16.gmra.mxu0 %v2926
  %v2962 = vpop.f32.mrf.mxu0
  %v2963 = vadd.f32 0.0, %v2962
  %v2964 = vpop.f32.mrf.mxu0
  %v2965 = vadd.f32 0.0, %v2964
  %v2966 = vpop.f32.mrf.mxu0
  %v2967 = vpop.f32.mrf.mxu0
  %2968 = vdwg.mxu0
  %2969 = vmatprep.subr.bf16.mxu0 0
  %2970 = vmatpush1.bf16.msra.mxu0 0
  %2971 = vmatprep.subr.bf16.mxu0 0
  %2972 = vmatpush1.bf16.msra.mxu0 0
  %2973 = vmatprep.subr.bf16.mxu0 0
  %2974 = vmatpush1.bf16.msra.mxu0 0
  %2975 = vmatprep.subr.bf16.mxu0 %v616
  %2976 = vmatpush1.bf16.msra.mxu0 %v613
  %2977 = vmatprep.subr.bf16.mxu0 %v591
  %2978 = vmatpush1.bf16.msra.mxu0 %v590
  %2979 = vmatprep.subr.bf16.mxu0 %v587
  %2980 = vmatpush1.bf16.msra.mxu0 %v586
  %2981 = vmatprep.subr.bf16.mxu0 %v583
  %2982 = vmatpush1.bf16.msra.mxu0 %v582
  %2983 = vmatprep.subr.bf16.mxu0 %v579
  %2984 = vmatpush1.bf16.msra.mxu0 %v578
  %2985 = vmatprep.subr.bf16.mxu0 0
  %2986 = vmatpush2.bf16.msra.mxu0 0
  %2987 = vmatprep.subr.bf16.mxu0 0
  %2988 = vmatpush2.bf16.msra.mxu0 0
  %2989 = vmatprep.subr.bf16.mxu0 0
  %2990 = vmatpush2.bf16.msra.mxu0 0
  %2991 = vmatprep.subr.bf16.mxu0 0
  %2992 = vmatpush2.bf16.msra.mxu0 0
  %2993 = vmatprep.subr.bf16.mxu0 0
  %2994 = vmatpush2.bf16.msra.mxu0 0
  %2995 = vmatprep.subr.bf16.mxu0 0
  %2996 = vmatpush2.bf16.msra.mxu0 0
  %2997 = vmatprep.subr.bf16.mxu0 0
  %2998 = vmatpush2.bf16.msra.mxu0 0
  %2999 = vmatprep.subr.bf16.mxu0 0
  %3000 = vmatpush2.bf16.msra.mxu0 0
  %3001 = vmatprep.mubr.bf16.mxu0 0
  %3002 = vmatmul.mubr.bf16.gmra.mxu0 %v2926
  %v3003 = vpop.f32.mrf.mxu0
  %v3004 = vadd.f32 0.0, %v3003
  %v3005 = vpop.f32.mrf.mxu0
  %v3006 = vadd.f32 0.0, %v3005
  %v3007 = vpop.f32.mrf.mxu0
  %v3008 = vpop.f32.mrf.mxu0
  %3009 = vdwg.mxu0
  %v3011 = vunpack.c.l.b16 %v2923
  %v3012 = vunpack.c.h.b16 %v2923
  %v3013 = vpack.c.b16 %v3011, %v3011
  %v3014 = vpack.c.b16 %v3012, %v3012
  %v3017 = vsel %vm1171, %v3014, 0
  %3019 = vmatprep.subr.bf16.mxu0 %v2916
  %3020 = vmatpush1.bf16.msra.mxu0 %v2915
  %3021 = vmatprep.subr.bf16.mxu0 %v2912
  %3022 = vmatpush1.bf16.msra.mxu0 %v2911
  %3023 = vmatprep.subr.bf16.mxu0 %v2908
  %3024 = vmatpush1.bf16.msra.mxu0 %v2907
  %3025 = vmatprep.subr.bf16.mxu0 %v2904
  %3026 = vmatpush1.bf16.msra.mxu0 %v2903
  %3027 = vmatprep.subr.bf16.mxu0 %v2900
  %3028 = vmatpush1.bf16.msra.mxu0 %v2899
  %3029 = vmatprep.subr.bf16.mxu0 %v2896
  %3030 = vmatpush1.bf16.msra.mxu0 %v2895
  %3031 = vmatprep.subr.bf16.mxu0 %v2892
  %3032 = vmatpush1.bf16.msra.mxu0 %v2891
  %3033 = vmatprep.subr.bf16.mxu0 %v2888
  %3034 = vmatpush1.bf16.msra.mxu0 %v2887
  %3035 = vmatprep.subr.bf16.mxu0 0
  %3036 = vmatpush2.bf16.msra.mxu0 0
  %3037 = vmatprep.subr.bf16.mxu0 0
  %3038 = vmatpush2.bf16.msra.mxu0 0
  %3039 = vmatprep.subr.bf16.mxu0 0
  %3040 = vmatpush2.bf16.msra.mxu0 0
  %3041 = vmatprep.subr.bf16.mxu0 0
  %3042 = vmatpush2.bf16.msra.mxu0 0
  %3043 = vmatprep.subr.bf16.mxu0 0
  %3044 = vmatpush2.bf16.msra.mxu0 0
  %3045 = vmatprep.subr.bf16.mxu0 0
  %3046 = vmatpush2.bf16.msra.mxu0 0
  %3047 = vmatprep.subr.bf16.mxu0 0
  %3048 = vmatpush2.bf16.msra.mxu0 0
  %3049 = vmatprep.subr.bf16.mxu0 %v2920
  %3050 = vmatpush2.bf16.msra.mxu0 %v2919
  %3051 = vmatprep.mubr.bf16.mxu0 %v3017
  %3052 = vmatmul.mubr.bf16.gmra.mxu0 %v3013
  %v3053 = vpop.f32.mrf.mxu0
  %v3054 = vadd.f32 %v2963, %v3053
  %v3055 = vpop.f32.mrf.mxu0
  %v3056 = vadd.f32 %v2965, %v3055
  %v3057 = vpop.f32.mrf.mxu0
  %v3058 = vpop.f32.mrf.mxu0
  %3059 = vdwg.mxu0
  %3060 = vmatprep.subr.bf16.mxu0 %v2918
  %3061 = vmatpush1.bf16.msra.mxu0 %v2917
  %3062 = vmatprep.subr.bf16.mxu0 %v2914
  %3063 = vmatpush1.bf16.msra.mxu0 %v2913
  %3064 = vmatprep.subr.bf16.mxu0 %v2910
  %3065 = vmatpush1.bf16.msra.mxu0 %v2909
  %3066 = vmatprep.subr.bf16.mxu0 %v2906
  %3067 = vmatpush1.bf16.msra.mxu0 %v2905
  %3068 = vmatprep.subr.bf16.mxu0 %v2902
  %3069 = vmatpush1.bf16.msra.mxu0 %v2901
  %3070 = vmatprep.subr.bf16.mxu0 %v2898
  %3071 = vmatpush1.bf16.msra.mxu0 %v2897
  %3072 = vmatprep.subr.bf16.mxu0 %v2894
  %3073 = vmatpush1.bf16.msra.mxu0 %v2893
  %3074 = vmatprep.subr.bf16.mxu0 %v2890
  %3075 = vmatpush1.bf16.msra.mxu0 %v2889
  %3076 = vmatprep.subr.bf16.mxu0 0
  %3077 = vmatpush2.bf16.msra.mxu0 0
  %3078 = vmatprep.subr.bf16.mxu0 0
  %3079 = vmatpush2.bf16.msra.mxu0 0
  %3080 = vmatprep.subr.bf16.mxu0 0
  %3081 = vmatpush2.bf16.msra.mxu0 0
  %3082 = vmatprep.subr.bf16.mxu0 0
  %3083 = vmatpush2.bf16.msra.mxu0 0
  %3084 = vmatprep.subr.bf16.mxu0 0
  %3085 = vmatpush2.bf16.msra.mxu0 0
  %3086 = vmatprep.subr.bf16.mxu0 0
  %3087 = vmatpush2.bf16.msra.mxu0 0
  %3088 = vmatprep.subr.bf16.mxu0 0
  %3089 = vmatpush2.bf16.msra.mxu0 0
  %3090 = vmatprep.subr.bf16.mxu0 %v2922
  %3091 = vmatpush2.bf16.msra.mxu0 %v2921
  %3092 = vmatprep.mubr.bf16.mxu0 %v3017
  %3093 = vmatmul.mubr.bf16.gmra.mxu0 %v3013
  %v3094 = vpop.f32.mrf.mxu0
  %v3095 = vadd.f32 %v3004, %v3094
  %v3096 = vpop.f32.mrf.mxu0
  %v3097 = vadd.f32 %v3006, %v3096
  %v3098 = vpop.f32.mrf.mxu0
  %v3099 = vpop.f32.mrf.mxu0
  %3100 = vdwg.mxu0
  %v3101 = vld [vmem:[%s9 + $0x70] sm:$0xff]
  %3103 = vset.pattern.permute.xlu0 0
  %3104 = vperm.xlu0 %3103, %v3101
  %v3105 = vpop.permute.xlu0 %3104
  %v3107 = vadd.f32 %v3054, %v3105
  %v3108 = vadd.f32 %v3056, %v3105
  %v3109 = vadd.f32 %v3095, %v3105
  %v3110 = vadd.f32 %v3097, %v3105
  %v3111 = vmax.f32 %v3107, 0.0
  %v3112 = vmax.f32 %v3108, 0.0
  %v3113 = vmax.f32 %v3109, 0.0
  %v3114 = vmax.f32 %v3110, 0.0
  %3115 = vmatprep.subr.bf16.mxu0 0
  %3116 = vmatpush1.bf16.msra.mxu0 0
  %3117 = vmatprep.subr.bf16.mxu0 0
  %3118 = vmatpush1.bf16.msra.mxu0 0
  %3119 = vmatprep.subr.bf16.mxu0 0
  %3120 = vmatpush1.bf16.msra.mxu0 0
  %3121 = vmatprep.subr.bf16.mxu0 0
  %3122 = vmatpush1.bf16.msra.mxu0 0
  %3123 = vmatprep.subr.bf16.mxu0 0
  %3124 = vmatpush1.bf16.msra.mxu0 0
  %3125 = vmatprep.subr.bf16.mxu0 0
  %3126 = vmatpush1.bf16.msra.mxu0 0
  %3127 = vmatprep.subr.bf16.mxu0 0
  %3128 = vmatpush1.bf16.msra.mxu0 %v1385
  %3129 = vmatprep.subr.bf16.mxu0 0
  %3130 = vmatpush1.bf16.msra.mxu0 %v1384
  %3131 = vmatprep.subr.bf16.mxu0 0
  %3132 = vmatpush2.bf16.msra.mxu0 0
  %3133 = vmatprep.subr.bf16.mxu0 0
  %3134 = vmatpush2.bf16.msra.mxu0 0
  %3135 = vmatprep.subr.bf16.mxu0 0
  %3136 = vmatpush2.bf16.msra.mxu0 0
  %3137 = vmatprep.subr.bf16.mxu0 0
  %3138 = vmatpush2.bf16.msra.mxu0 0
  %3139 = vmatprep.subr.bf16.mxu0 0
  %3140 = vmatpush2.bf16.msra.mxu0 0
  %3141 = vmatprep.subr.bf16.mxu0 0
  %3142 = vmatpush2.bf16.msra.mxu0 0
  %3143 = vmatprep.subr.bf16.mxu0 0
  %3144 = vmatpush2.bf16.msra.mxu0 0
  %3145 = vmatprep.subr.bf16.mxu0 0
  %3146 = vmatpush2.bf16.msra.mxu0 0
  %3147 = vmatprep.mubr.bf16.mxu0 0
  %3148 = vmatmul.mubr.bf16.gmra.mxu0 %v2126
  %v3149 = vpop.f32.mrf.mxu0
  %v3150 = vadd.f32 0.0, %v3149
  %v3151 = vpop.f32.mrf.mxu0
  %v3152 = vpop.f32.mrf.mxu0
  %v3153 = vadd.f32 0.0, %v3152
  %v3154 = vpop.f32.mrf.mxu0
  %3155 = vdwg.mxu0
  %3156 = vmatprep.subr.bf16.mxu0 0
  %3157 = vmatpush1.bf16.msra.mxu0 0
  %3158 = vmatprep.subr.bf16.mxu0 0
  %3159 = vmatpush1.bf16.msra.mxu0 0
  %3160 = vmatprep.subr.bf16.mxu0 0
  %3161 = vmatpush1.bf16.msra.mxu0 0
  %3162 = vmatprep.subr.bf16.mxu0 0
  %3163 = vmatpush1.bf16.msra.mxu0 0
  %3164 = vmatprep.subr.bf16.mxu0 0
  %3165 = vmatpush1.bf16.msra.mxu0 0
  %3166 = vmatprep.subr.bf16.mxu0 0
  %3167 = vmatpush1.bf16.msra.mxu0 0
  %3168 = vmatprep.subr.bf16.mxu0 0
  %3169 = vmatpush1.bf16.msra.mxu0 %v1458
  %3170 = vmatprep.subr.bf16.mxu0 0
  %3171 = vmatpush1.bf16.msra.mxu0 %v1457
  %3172 = vmatprep.subr.bf16.mxu0 0
  %3173 = vmatpush2.bf16.msra.mxu0 0
  %3174 = vmatprep.subr.bf16.mxu0 0
  %3175 = vmatpush2.bf16.msra.mxu0 0
  %3176 = vmatprep.subr.bf16.mxu0 0
  %3177 = vmatpush2.bf16.msra.mxu0 0
  %3178 = vmatprep.subr.bf16.mxu0 0
  %3179 = vmatpush2.bf16.msra.mxu0 0
  %3180 = vmatprep.subr.bf16.mxu0 0
  %3181 = vmatpush2.bf16.msra.mxu0 0
  %3182 = vmatprep.subr.bf16.mxu0 0
  %3183 = vmatpush2.bf16.msra.mxu0 0
  %3184 = vmatprep.subr.bf16.mxu0 0
  %3185 = vmatpush2.bf16.msra.mxu0 0
  %3186 = vmatprep.subr.bf16.mxu0 0
  %3187 = vmatpush2.bf16.msra.mxu0 0
  %3188 = vmatprep.mubr.bf16.mxu0 0
  %3189 = vmatmul.mubr.bf16.gmra.mxu0 %v2126
  %v3190 = vpop.f32.mrf.mxu0
  %v3191 = vadd.f32 0.0, %v3190
  %v3192 = vpop.f32.mrf.mxu0
  %v3193 = vpop.f32.mrf.mxu0
  %v3194 = vadd.f32 0.0, %v3193
  %v3195 = vpop.f32.mrf.mxu0
  %3196 = vdwg.mxu0
  %3197 = vmatprep.subr.bf16.mxu0 0
  %3198 = vmatpush1.bf16.msra.mxu0 0
  %3199 = vmatprep.subr.bf16.mxu0 0
  %3200 = vmatpush1.bf16.msra.mxu0 0
  %3201 = vmatprep.subr.bf16.mxu0 0
  %3202 = vmatpush1.bf16.msra.mxu0 0
  %3203 = vmatprep.subr.bf16.mxu0 0
  %3204 = vmatpush1.bf16.msra.mxu0 0
  %3205 = vmatprep.subr.bf16.mxu0 0
  %3206 = vmatpush1.bf16.msra.mxu0 0
  %3207 = vmatprep.subr.bf16.mxu0 0
  %3208 = vmatpush1.bf16.msra.mxu0 0
  %3209 = vmatprep.subr.bf16.mxu0 0
  %3210 = vmatpush1.bf16.msra.mxu0 %v1524
  %3211 = vmatprep.subr.bf16.mxu0 0
  %3212 = vmatpush1.bf16.msra.mxu0 %v1523
  %3213 = vmatprep.subr.bf16.mxu0 0
  %3214 = vmatpush2.bf16.msra.mxu0 0
  %3215 = vmatprep.subr.bf16.mxu0 0
  %3216 = vmatpush2.bf16.msra.mxu0 0
  %3217 = vmatprep.subr.bf16.mxu0 0
  %3218 = vmatpush2.bf16.msra.mxu0 0
  %3219 = vmatprep.subr.bf16.mxu0 0
  %3220 = vmatpush2.bf16.msra.mxu0 0
  %3221 = vmatprep.subr.bf16.mxu0 0
  %3222 = vmatpush2.bf16.msra.mxu0 0
  %3223 = vmatprep.subr.bf16.mxu0 0
  %3224 = vmatpush2.bf16.msra.mxu0 0
  %3225 = vmatprep.subr.bf16.mxu0 0
  %3226 = vmatpush2.bf16.msra.mxu0 0
  %3227 = vmatprep.subr.bf16.mxu0 0
  %3228 = vmatpush2.bf16.msra.mxu0 0
  %3229 = vmatprep.mubr.bf16.mxu0 0
  %3230 = vmatmul.mubr.bf16.gmra.mxu0 %v2126
  %v3231 = vpop.f32.mrf.mxu0
  %v3232 = vadd.f32 0.0, %v3231
  %v3233 = vpop.f32.mrf.mxu0
  %v3234 = vpop.f32.mrf.mxu0
  %v3235 = vadd.f32 0.0, %v3234
  %v3236 = vpop.f32.mrf.mxu0
  %3237 = vdwg.mxu0
  %3238 = vmatprep.subr.bf16.mxu0 0
  %3239 = vmatpush1.bf16.msra.mxu0 0
  %3240 = vmatprep.subr.bf16.mxu0 0
  %3241 = vmatpush1.bf16.msra.mxu0 0
  %3242 = vmatprep.subr.bf16.mxu0 0
  %3243 = vmatpush1.bf16.msra.mxu0 0
  %3244 = vmatprep.subr.bf16.mxu0 0
  %3245 = vmatpush1.bf16.msra.mxu0 0
  %3246 = vmatprep.subr.bf16.mxu0 0
  %3247 = vmatpush1.bf16.msra.mxu0 0
  %3248 = vmatprep.subr.bf16.mxu0 0
  %3249 = vmatpush1.bf16.msra.mxu0 0
  %3250 = vmatprep.subr.bf16.mxu0 0
  %3251 = vmatpush1.bf16.msra.mxu0 %v1590
  %3252 = vmatprep.subr.bf16.mxu0 0
  %3253 = vmatpush1.bf16.msra.mxu0 %v1589
  %3254 = vmatprep.subr.bf16.mxu0 0
  %3255 = vmatpush2.bf16.msra.mxu0 0
  %3256 = vmatprep.subr.bf16.mxu0 0
  %3257 = vmatpush2.bf16.msra.mxu0 0
  %3258 = vmatprep.subr.bf16.mxu0 0
  %3259 = vmatpush2.bf16.msra.mxu0 0
  %3260 = vmatprep.subr.bf16.mxu0 0
  %3261 = vmatpush2.bf16.msra.mxu0 0
  %3262 = vmatprep.subr.bf16.mxu0 0
  %3263 = vmatpush2.bf16.msra.mxu0 0
  %3264 = vmatprep.subr.bf16.mxu0 0
  %3265 = vmatpush2.bf16.msra.mxu0 0
  %3266 = vmatprep.subr.bf16.mxu0 0
  %3267 = vmatpush2.bf16.msra.mxu0 0
  %3268 = vmatprep.subr.bf16.mxu0 0
  %3269 = vmatpush2.bf16.msra.mxu0 0
  %3270 = vmatprep.mubr.bf16.mxu0 0
  %3271 = vmatmul.mubr.bf16.gmra.mxu0 %v2126
  %v3272 = vpop.f32.mrf.mxu0
  %v3273 = vadd.f32 0.0, %v3272
  %v3274 = vpop.f32.mrf.mxu0
  %v3275 = vpop.f32.mrf.mxu0
  %v3276 = vadd.f32 0.0, %v3275
  %v3277 = vpop.f32.mrf.mxu0
  %3278 = vdwg.mxu0
  %3279 = vmatprep.subr.bf16.mxu0 0
  %3280 = vmatpush1.bf16.msra.mxu0 0
  %3281 = vmatprep.subr.bf16.mxu0 0
  %3282 = vmatpush1.bf16.msra.mxu0 0
  %3283 = vmatprep.subr.bf16.mxu0 0
  %3284 = vmatpush1.bf16.msra.mxu0 0
  %3285 = vmatprep.subr.bf16.mxu0 0
  %3286 = vmatpush1.bf16.msra.mxu0 0
  %3287 = vmatprep.subr.bf16.mxu0 0
  %3288 = vmatpush1.bf16.msra.mxu0 0
  %3289 = vmatprep.subr.bf16.mxu0 0
  %3290 = vmatpush1.bf16.msra.mxu0 0
  %3291 = vmatprep.subr.bf16.mxu0 0
  %3292 = vmatpush1.bf16.msra.mxu0 %v1656
  %3293 = vmatprep.subr.bf16.mxu0 0
  %3294 = vmatpush1.bf16.msra.mxu0 %v1655
  %3295 = vmatprep.subr.bf16.mxu0 0
  %3296 = vmatpush2.bf16.msra.mxu0 0
  %3297 = vmatprep.subr.bf16.mxu0 0
  %3298 = vmatpush2.bf16.msra.mxu0 0
  %3299 = vmatprep.subr.bf16.mxu0 0
  %3300 = vmatpush2.bf16.msra.mxu0 0
  %3301 = vmatprep.subr.bf16.mxu0 0
  %3302 = vmatpush2.bf16.msra.mxu0 0
  %3303 = vmatprep.subr.bf16.mxu0 0
  %3304 = vmatpush2.bf16.msra.mxu0 0
  %3305 = vmatprep.subr.bf16.mxu0 0
  %3306 = vmatpush2.bf16.msra.mxu0 0
  %3307 = vmatprep.subr.bf16.mxu0 0
  %3308 = vmatpush2.bf16.msra.mxu0 0
  %3309 = vmatprep.subr.bf16.mxu0 0
  %3310 = vmatpush2.bf16.msra.mxu0 0
  %3311 = vmatprep.mubr.bf16.mxu0 0
  %3312 = vmatmul.mubr.bf16.gmra.mxu0 %v2126
  %v3313 = vpop.f32.mrf.mxu0
  %v3314 = vadd.f32 0.0, %v3313
  %v3315 = vpop.f32.mrf.mxu0
  %v3316 = vpop.f32.mrf.mxu0
  %v3317 = vadd.f32 0.0, %v3316
  %v3318 = vpop.f32.mrf.mxu0
  %3319 = vdwg.mxu0
  %3320 = vmatprep.subr.bf16.mxu0 0
  %3321 = vmatpush1.bf16.msra.mxu0 0
  %3322 = vmatprep.subr.bf16.mxu0 0
  %3323 = vmatpush1.bf16.msra.mxu0 0
  %3324 = vmatprep.subr.bf16.mxu0 0
  %3325 = vmatpush1.bf16.msra.mxu0 0
  %3326 = vmatprep.subr.bf16.mxu0 0
  %3327 = vmatpush1.bf16.msra.mxu0 0
  %3328 = vmatprep.subr.bf16.mxu0 0
  %3329 = vmatpush1.bf16.msra.mxu0 0
  %3330 = vmatprep.subr.bf16.mxu0 0
  %3331 = vmatpush1.bf16.msra.mxu0 0
  %3332 = vmatprep.subr.bf16.mxu0 0
  %3333 = vmatpush1.bf16.msra.mxu0 %v1722
  %3334 = vmatprep.subr.bf16.mxu0 0
  %3335 = vmatpush1.bf16.msra.mxu0 %v1721
  %3336 = vmatprep.subr.bf16.mxu0 0
  %3337 = vmatpush2.bf16.msra.mxu0 0
  %3338 = vmatprep.subr.bf16.mxu0 0
  %3339 = vmatpush2.bf16.msra.mxu0 0
  %3340 = vmatprep.subr.bf16.mxu0 0
  %3341 = vmatpush2.bf16.msra.mxu0 0
  %3342 = vmatprep.subr.bf16.mxu0 0
  %3343 = vmatpush2.bf16.msra.mxu0 0
  %3344 = vmatprep.subr.bf16.mxu0 0
  %3345 = vmatpush2.bf16.msra.mxu0 0
  %3346 = vmatprep.subr.bf16.mxu0 0
  %3347 = vmatpush2.bf16.msra.mxu0 0
  %3348 = vmatprep.subr.bf16.mxu0 0
  %3349 = vmatpush2.bf16.msra.mxu0 0
  %3350 = vmatprep.subr.bf16.mxu0 0
  %3351 = vmatpush2.bf16.msra.mxu0 0
  %3352 = vmatprep.mubr.bf16.mxu0 0
  %3353 = vmatmul.mubr.bf16.gmra.mxu0 %v2126
  %v3354 = vpop.f32.mrf.mxu0
  %v3355 = vadd.f32 0.0, %v3354
  %v3356 = vpop.f32.mrf.mxu0
  %v3357 = vpop.f32.mrf.mxu0
  %v3358 = vadd.f32 0.0, %v3357
  %v3359 = vpop.f32.mrf.mxu0
  %3360 = vdwg.mxu0
  %3361 = vmatprep.subr.bf16.mxu0 0
  %3362 = vmatpush1.bf16.msra.mxu0 0
  %3363 = vmatprep.subr.bf16.mxu0 0
  %3364 = vmatpush1.bf16.msra.mxu0 0
  %3365 = vmatprep.subr.bf16.mxu0 0
  %3366 = vmatpush1.bf16.msra.mxu0 0
  %3367 = vmatprep.subr.bf16.mxu0 0
  %3368 = vmatpush1.bf16.msra.mxu0 0
  %3369 = vmatprep.subr.bf16.mxu0 0
  %3370 = vmatpush1.bf16.msra.mxu0 0
  %3371 = vmatprep.subr.bf16.mxu0 0
  %3372 = vmatpush1.bf16.msra.mxu0 0
  %3373 = vmatprep.subr.bf16.mxu0 0
  %3374 = vmatpush1.bf16.msra.mxu0 %v1788
  %3375 = vmatprep.subr.bf16.mxu0 0
  %3376 = vmatpush1.bf16.msra.mxu0 %v1787
  %3377 = vmatprep.subr.bf16.mxu0 0
  %3378 = vmatpush2.bf16.msra.mxu0 0
  %3379 = vmatprep.subr.bf16.mxu0 0
  %3380 = vmatpush2.bf16.msra.mxu0 0
  %3381 = vmatprep.subr.bf16.mxu0 0
  %3382 = vmatpush2.bf16.msra.mxu0 0
  %3383 = vmatprep.subr.bf16.mxu0 0
  %3384 = vmatpush2.bf16.msra.mxu0 0
  %3385 = vmatprep.subr.bf16.mxu0 0
  %3386 = vmatpush2.bf16.msra.mxu0 0
  %3387 = vmatprep.subr.bf16.mxu0 0
  %3388 = vmatpush2.bf16.msra.mxu0 0
  %3389 = vmatprep.subr.bf16.mxu0 0
  %3390 = vmatpush2.bf16.msra.mxu0 0
  %3391 = vmatprep.subr.bf16.mxu0 0
  %3392 = vmatpush2.bf16.msra.mxu0 0
  %3393 = vmatprep.mubr.bf16.mxu0 0
  %3394 = vmatmul.mubr.bf16.gmra.mxu0 %v2126
  %v3395 = vpop.f32.mrf.mxu0
  %v3396 = vadd.f32 0.0, %v3395
  %v3397 = vpop.f32.mrf.mxu0
  %v3398 = vpop.f32.mrf.mxu0
  %v3399 = vadd.f32 0.0, %v3398
  %v3400 = vpop.f32.mrf.mxu0
  %3401 = vdwg.mxu0
  %3402 = vmatprep.subr.bf16.mxu0 0
  %3403 = vmatpush1.bf16.msra.mxu0 0
  %3404 = vmatprep.subr.bf16.mxu0 0
  %3405 = vmatpush1.bf16.msra.mxu0 0
  %3406 = vmatprep.subr.bf16.mxu0 0
  %3407 = vmatpush1.bf16.msra.mxu0 0
  %3408 = vmatprep.subr.bf16.mxu0 0
  %3409 = vmatpush1.bf16.msra.mxu0 0
  %3410 = vmatprep.subr.bf16.mxu0 0
  %3411 = vmatpush1.bf16.msra.mxu0 0
  %3412 = vmatprep.subr.bf16.mxu0 0
  %3413 = vmatpush1.bf16.msra.mxu0 0
  %3414 = vmatprep.subr.bf16.mxu0 0
  %3415 = vmatpush1.bf16.msra.mxu0 %v1854
  %3416 = vmatprep.subr.bf16.mxu0 0
  %3417 = vmatpush1.bf16.msra.mxu0 %v1853
  %3418 = vmatprep.subr.bf16.mxu0 0
  %3419 = vmatpush2.bf16.msra.mxu0 0
  %3420 = vmatprep.subr.bf16.mxu0 0
  %3421 = vmatpush2.bf16.msra.mxu0 0
  %3422 = vmatprep.subr.bf16.mxu0 0
  %3423 = vmatpush2.bf16.msra.mxu0 0
  %3424 = vmatprep.subr.bf16.mxu0 0
  %3425 = vmatpush2.bf16.msra.mxu0 0
  %3426 = vmatprep.subr.bf16.mxu0 0
  %3427 = vmatpush2.bf16.msra.mxu0 0
  %3428 = vmatprep.subr.bf16.mxu0 0
  %3429 = vmatpush2.bf16.msra.mxu0 0
  %3430 = vmatprep.subr.bf16.mxu0 0
  %3431 = vmatpush2.bf16.msra.mxu0 0
  %3432 = vmatprep.subr.bf16.mxu0 0
  %3433 = vmatpush2.bf16.msra.mxu0 0
  %3434 = vmatprep.mubr.bf16.mxu0 0
  %3435 = vmatmul.mubr.bf16.gmra.mxu0 %v2126
  %v3436 = vpop.f32.mrf.mxu0
  %v3437 = vadd.f32 0.0, %v3436
  %v3438 = vpop.f32.mrf.mxu0
  %v3439 = vpop.f32.mrf.mxu0
  %v3440 = vadd.f32 0.0, %v3439
  %v3441 = vpop.f32.mrf.mxu0
  %3442 = vdwg.mxu0
  %3443 = vmatprep.subr.bf16.mxu0 0
  %3444 = vmatpush1.bf16.msra.mxu0 0
  %3445 = vmatprep.subr.bf16.mxu0 0
  %3446 = vmatpush1.bf16.msra.mxu0 0
  %3447 = vmatprep.subr.bf16.mxu0 0
  %3448 = vmatpush1.bf16.msra.mxu0 0
  %3449 = vmatprep.subr.bf16.mxu0 0
  %3450 = vmatpush1.bf16.msra.mxu0 0
  %3451 = vmatprep.subr.bf16.mxu0 0
  %3452 = vmatpush1.bf16.msra.mxu0 0
  %3453 = vmatprep.subr.bf16.mxu0 0
  %3454 = vmatpush1.bf16.msra.mxu0 0
  %3455 = vmatprep.subr.bf16.mxu0 0
  %3456 = vmatpush1.bf16.msra.mxu0 %v1920
  %3457 = vmatprep.subr.bf16.mxu0 0
  %3458 = vmatpush1.bf16.msra.mxu0 %v1919
  %3459 = vmatprep.subr.bf16.mxu0 0
  %3460 = vmatpush2.bf16.msra.mxu0 0
  %3461 = vmatprep.subr.bf16.mxu0 0
  %3462 = vmatpush2.bf16.msra.mxu0 0
  %3463 = vmatprep.subr.bf16.mxu0 0
  %3464 = vmatpush2.bf16.msra.mxu0 0
  %3465 = vmatprep.subr.bf16.mxu0 0
  %3466 = vmatpush2.bf16.msra.mxu0 0
  %3467 = vmatprep.subr.bf16.mxu0 0
  %3468 = vmatpush2.bf16.msra.mxu0 0
  %3469 = vmatprep.subr.bf16.mxu0 0
  %3470 = vmatpush2.bf16.msra.mxu0 0
  %3471 = vmatprep.subr.bf16.mxu0 0
  %3472 = vmatpush2.bf16.msra.mxu0 0
  %3473 = vmatprep.subr.bf16.mxu0 0
  %3474 = vmatpush2.bf16.msra.mxu0 0
  %3475 = vmatprep.mubr.bf16.mxu0 0
  %3476 = vmatmul.mubr.bf16.gmra.mxu0 %v2126
  %v3477 = vpop.f32.mrf.mxu0
  %v3478 = vadd.f32 0.0, %v3477
  %v3479 = vpop.f32.mrf.mxu0
  %v3480 = vpop.f32.mrf.mxu0
  %v3481 = vadd.f32 0.0, %v3480
  %v3482 = vpop.f32.mrf.mxu0
  %3483 = vdwg.mxu0
  %v3484 = vpack.c.bf16 %v3153, %v3150
  %v3485 = vpack.c.bf16 %v3194, %v3191
  %v3486 = vpack.c.bf16 %v3235, %v3232
  %v3487 = vpack.c.bf16 %v3276, %v3273
  %v3488 = vpack.c.bf16 %v3317, %v3314
  %v3489 = vpack.c.bf16 %v3358, %v3355
  %v3490 = vpack.c.bf16 %v3399, %v3396
  %v3491 = vpack.c.bf16 %v3440, %v3437
  %v3492 = vpack.c.bf16 %v3481, %v3478
  %v3493 = vld [vmem:[%s8 + $0xd8] sm:$0xff]
  %v3494 = vld [vmem:[%s8 + $0xe4] sm:$0xff]
  %v3495 = vld [vmem:[%s9 + $0x90] sm:$0xff]
  %v3496 = vld [vmem:[%s9 + $0x98] sm:$0xff]
  %3498 = vset.pattern.permute.xlu0 0
  %3499 = vperm.xlu0 %3498, %v3495
  %v3500 = vpop.permute.xlu0 %3499
  %3503 = vset.pattern.permute.xlu0 0
  %3504 = vperm.xlu0 %3503, %v3496
  %v3505 = vpop.permute.xlu0 %3504
  %v3509 = vunpack.c.l.b16 %v3493
  %v3510 = vunpack.c.h.b16 %v3493
  %v3511 = vunpack.c.l.b16 %v3494
  %v3512 = vunpack.c.h.b16 %v3494
  %v3513 = vpack.c.b16 %v3511, %v3509
  %v3514 = vpack.c.b16 %v3512, %v3510
  %v3517 = vsel %vm1171, %v3514, 0
  %3519 = vmatprep.subr.bf16.mxu0 0
  %3520 = vmatpush1.bf16.msra.mxu0 %v3491
  %3521 = vmatprep.subr.bf16.mxu0 0
  %3522 = vmatpush1.bf16.msra.mxu0 %v3490
  %3523 = vmatprep.subr.bf16.mxu0 0
  %3524 = vmatpush1.bf16.msra.mxu0 %v3489
  %3525 = vmatprep.subr.bf16.mxu0 0
  %3526 = vmatpush1.bf16.msra.mxu0 %v3488
  %3527 = vmatprep.subr.bf16.mxu0 0
  %3528 = vmatpush1.bf16.msra.mxu0 %v3487
  %3529 = vmatprep.subr.bf16.mxu0 0
  %3530 = vmatpush1.bf16.msra.mxu0 %v3486
  %3531 = vmatprep.subr.bf16.mxu0 0
  %3532 = vmatpush1.bf16.msra.mxu0 %v3485
  %3533 = vmatprep.subr.bf16.mxu0 0
  %3534 = vmatpush1.bf16.msra.mxu0 %v3484
  %3535 = vmatprep.subr.bf16.mxu0 0
  %3536 = vmatpush2.bf16.msra.mxu0 0
  %3537 = vmatprep.subr.bf16.mxu0 0
  %3538 = vmatpush2.bf16.msra.mxu0 0
  %3539 = vmatprep.subr.bf16.mxu0 0
  %3540 = vmatpush2.bf16.msra.mxu0 0
  %3541 = vmatprep.subr.bf16.mxu0 0
  %3542 = vmatpush2.bf16.msra.mxu0 0
  %3543 = vmatprep.subr.bf16.mxu0 0
  %3544 = vmatpush2.bf16.msra.mxu0 0
  %3545 = vmatprep.subr.bf16.mxu0 0
  %3546 = vmatpush2.bf16.msra.mxu0 0
  %3547 = vmatprep.subr.bf16.mxu0 0
  %3548 = vmatpush2.bf16.msra.mxu0 0
  %3549 = vmatprep.subr.bf16.mxu0 0
  %3550 = vmatpush2.bf16.msra.mxu0 %v3492
  %3551 = vmatprep.mubr.bf16.mxu0 %v3517
  %3552 = vmatmul.mubr.bf16.gmra.mxu0 %v3513
  %v3553 = vpop.f32.mrf.mxu0
  %v3554 = vadd.f32 %v3500, %v3553
  %v3555 = vpop.f32.mrf.mxu0
  %v3556 = vpop.f32.mrf.mxu0
  %v3557 = vadd.f32 %v3505, %v3556
  %v3558 = vpop.f32.mrf.mxu0
  %3559 = vdwg.mxu0
  %v3560 = vmax.f32 %v3554, 0.0
  %v3561 = vmax.f32 %v3557, 0.0
  %v3562 = vpack.c.bf16 %v3561, %v3560
  %v3564 = vsel %vm1388, %v3562, 0
  %3566 = vmatprep.subr.bf16.mxu0 0
  %3567 = vmatpush1.bf16.msra.mxu0 0
  %3568 = vmatprep.subr.bf16.mxu0 0
  %3569 = vmatpush1.bf16.msra.mxu0 0
  %3570 = vmatprep.subr.bf16.mxu0 0
  %3571 = vmatpush1.bf16.msra.mxu0 0
  %3572 = vmatprep.subr.bf16.mxu0 0
  %3573 = vmatpush1.bf16.msra.mxu0 0
  %3574 = vmatprep.subr.bf16.mxu0 0
  %3575 = vmatpush1.bf16.msra.mxu0 0
  %3576 = vmatprep.subr.bf16.mxu0 0
  %3577 = vmatpush1.bf16.msra.mxu0 0
  %3578 = vmatprep.subr.bf16.mxu0 0
  %3579 = vmatpush1.bf16.msra.mxu0 %v2122
  %3580 = vmatprep.subr.bf16.mxu0 0
  %3581 = vmatpush1.bf16.msra.mxu0 %v2121
  %3582 = vmatprep.subr.bf16.mxu0 0
  %3583 = vmatpush2.bf16.msra.mxu0 0
  %3584 = vmatprep.subr.bf16.mxu0 0
  %3585 = vmatpush2.bf16.msra.mxu0 0
  %3586 = vmatprep.subr.bf16.mxu0 0
  %3587 = vmatpush2.bf16.msra.mxu0 0
  %3588 = vmatprep.subr.bf16.mxu0 0
  %3589 = vmatpush2.bf16.msra.mxu0 0
  %3590 = vmatprep.subr.bf16.mxu0 0
  %3591 = vmatpush2.bf16.msra.mxu0 0
  %3592 = vmatprep.subr.bf16.mxu0 0
  %3593 = vmatpush2.bf16.msra.mxu0 0
  %3594 = vmatprep.subr.bf16.mxu0 0
  %3595 = vmatpush2.bf16.msra.mxu0 0
  %3596 = vmatprep.subr.bf16.mxu0 0
  %3597 = vmatpush2.bf16.msra.mxu0 0
  %3598 = vmatprep.mubr.bf16.mxu0 0
  %3599 = vmatmul.mubr.bf16.gmra.mxu0 %v3564
  %v3600 = vpop.f32.mrf.mxu0
  %v3601 = vadd.f32 0.0, %v3600
  %v3602 = vpop.f32.mrf.mxu0
  %v3603 = vpop.f32.mrf.mxu0
  %v3604 = vadd.f32 0.0, %v3603
  %v3605 = vpop.f32.mrf.mxu0
  %3606 = vdwg.mxu0
  %3607 = vrot.lane.b32.xlu0 %v3601, 9
  %v3608 = vpop.permute.xlu0 %3607
  %3609 = vrot.lane.b32.xlu0 %v3604, 9
  %v3610 = vpop.permute.xlu0 %3609
  %v3611 = vmul.f32 %v3608, %v1067
  %v3612 = vmul.f32 %v3610, %v1067
  %3613 = vrot.lane.b32.xlu0 %v3601, 8
  %v3614 = vpop.permute.xlu0 %3613
  %3615 = vrot.lane.b32.xlu0 %v3604, 8
  %v3616 = vpop.permute.xlu0 %3615
  %v3617 = vmul.f32 %v3614, %v1077
  %v3618 = vmul.f32 %v3616, %v1077
  %3619 = vrot.lane.b32.xlu0 %v3601, 7
  %v3620 = vpop.permute.xlu0 %3619
  %3621 = vrot.lane.b32.xlu0 %v3604, 7
  %v3622 = vpop.permute.xlu0 %3621
  %v3623 = vmul.f32 %v3620, %v1087
  %v3624 = vmul.f32 %v3622, %v1087
  %3625 = vrot.lane.b32.xlu0 %v3601, 1
  %v3626 = vpop.permute.xlu0 %3625
  %3627 = vrot.lane.b32.xlu0 %v3604, 1
  %v3628 = vpop.permute.xlu0 %3627
  %v3629 = vmul.f32 %v3626, %v1097
  %v3630 = vmul.f32 %v3628, %v1097
  %3631 = vrot.lane.b32.xlu0 %v3601, 127
  %v3632 = vpop.permute.xlu0 %3631
  %3633 = vrot.lane.b32.xlu0 %v3604, 127
  %v3634 = vpop.permute.xlu0 %3633
  %v3635 = vmul.f32 %v3632, %v1107
  %v3636 = vmul.f32 %v3634, %v1107
  %3637 = vrot.lane.b32.xlu0 %v3601, 121
  %v3638 = vpop.permute.xlu0 %3637
  %3639 = vrot.lane.b32.xlu0 %v3604, 121
  %v3640 = vpop.permute.xlu0 %3639
  %v3641 = vmul.f32 %v3638, %v1117
  %v3642 = vmul.f32 %v3640, %v1117
  %3643 = vrot.lane.b32.xlu0 %v3601, 120
  %v3644 = vpop.permute.xlu0 %3643
  %3645 = vrot.lane.b32.xlu0 %v3604, 120
  %v3646 = vpop.permute.xlu0 %3645
  %v3647 = vmul.f32 %v3644, %v1127
  %v3648 = vmul.f32 %v3646, %v1127
  %3649 = vrot.lane.b32.xlu0 %v3601, 119
  %v3650 = vpop.permute.xlu0 %3649
  %3651 = vrot.lane.b32.xlu0 %v3604, 119
  %v3652 = vpop.permute.xlu0 %3651
  %v3653 = vmul.f32 %v3650, %v1137
  %v3654 = vmul.f32 %v3652, %v1137
  %v3655 = vpack.c.bf16 %v3612, %v3611
  %v3656 = vpack.c.bf16 %v3618, %v3617
  %v3657 = vpack.c.bf16 %v3624, %v3623
  %v3658 = vpack.c.bf16 %v3630, %v3629
  %v3659 = vpack.c.bf16 %v3604, %v3601
  %v3660 = vpack.c.bf16 %v3636, %v3635
  %v3661 = vpack.c.bf16 %v3642, %v3641
  %v3662 = vpack.c.bf16 %v3648, %v3647
  %v3663 = vpack.c.bf16 %v3654, %v3653
  %v3664 = vld [vmem:[%s8 + $0xf0] sm:$0xff]
  %3665 = vrot.lane.b32.xlu0 %v2350, 9
  %v3666 = vpop.permute.xlu0 %3665
  %3667 = vrot.lane.b32.xlu0 %v2351, 9
  %v3668 = vpop.permute.xlu0 %3667
  %v3669 = vmul.f32 %v3666, %v1067
  %v3670 = vmul.f32 %v3668, %v1067
  %3671 = vrot.lane.b32.xlu0 %v2350, 8
  %v3672 = vpop.permute.xlu0 %3671
  %3673 = vrot.lane.b32.xlu0 %v2351, 8
  %v3674 = vpop.permute.xlu0 %3673
  %v3675 = vmul.f32 %v3672, %v1077
  %v3676 = vmul.f32 %v3674, %v1077
  %3677 = vrot.lane.b32.xlu0 %v2350, 7
  %v3678 = vpop.permute.xlu0 %3677
  %3679 = vrot.lane.b32.xlu0 %v2351, 7
  %v3680 = vpop.permute.xlu0 %3679
  %v3681 = vmul.f32 %v3678, %v1087
  %v3682 = vmul.f32 %v3680, %v1087
  %3683 = vrot.lane.b32.xlu0 %v2350, 1
  %v3684 = vpop.permute.xlu0 %3683
  %3685 = vrot.lane.b32.xlu0 %v2351, 1
  %v3686 = vpop.permute.xlu0 %3685
  %v3687 = vmul.f32 %v3684, %v1097
  %v3688 = vmul.f32 %v3686, %v1097
  %3689 = vrot.lane.b32.xlu0 %v2350, 127
  %v3690 = vpop.permute.xlu0 %3689
  %3691 = vrot.lane.b32.xlu0 %v2351, 127
  %v3692 = vpop.permute.xlu0 %3691
  %v3693 = vmul.f32 %v3690, %v1107
  %v3694 = vmul.f32 %v3692, %v1107
  %3695 = vrot.lane.b32.xlu0 %v2350, 121
  %v3696 = vpop.permute.xlu0 %3695
  %3697 = vrot.lane.b32.xlu0 %v2351, 121
  %v3698 = vpop.permute.xlu0 %3697
  %v3699 = vmul.f32 %v3696, %v1117
  %v3700 = vmul.f32 %v3698, %v1117
  %3701 = vrot.lane.b32.xlu0 %v2350, 120
  %v3702 = vpop.permute.xlu0 %3701
  %3703 = vrot.lane.b32.xlu0 %v2351, 120
  %v3704 = vpop.permute.xlu0 %3703
  %v3705 = vmul.f32 %v3702, %v1127
  %v3706 = vmul.f32 %v3704, %v1127
  %3707 = vrot.lane.b32.xlu0 %v2350, 119
  %v3708 = vpop.permute.xlu0 %3707
  %3709 = vrot.lane.b32.xlu0 %v2351, 119
  %v3710 = vpop.permute.xlu0 %3709
  %v3711 = vmul.f32 %v3708, %v1137
  %v3712 = vmul.f32 %v3710, %v1137
  %v3713 = vpack.c.bf16 %v3670, %v3669
  %v3714 = vpack.c.bf16 %v3676, %v3675
  %v3715 = vpack.c.bf16 %v3682, %v3681
  %v3716 = vpack.c.bf16 %v3688, %v3687
  %v3717 = vpack.c.bf16 %v3694, %v3693
  %v3718 = vpack.c.bf16 %v3700, %v3699
  %v3719 = vpack.c.bf16 %v3706, %v3705
  %v3720 = vpack.c.bf16 %v3712, %v3711
  %v3721 = vld [vmem:[%s8 + $0x108] sm:$0xff]
  %v3723 = vunpack.c.l.b16 %v3721
  %v3724 = vunpack.c.h.b16 %v3721
  %v3725 = vpack.c.b16 %v3723, %v3723
  %v3726 = vpack.c.b16 %v3724, %v3724
  %v3729 = vsel %vm1171, %v3726, 0
  %3731 = vmatprep.subr.bf16.mxu0 0
  %3732 = vmatpush1.bf16.msra.mxu0 %v3719
  %3733 = vmatprep.subr.bf16.mxu0 0
  %3734 = vmatpush1.bf16.msra.mxu0 %v3718
  %3735 = vmatprep.subr.bf16.mxu0 0
  %3736 = vmatpush1.bf16.msra.mxu0 %v3717
  %3737 = vmatprep.subr.bf16.mxu0 0
  %3738 = vmatpush1.bf16.msra.mxu0 %v2352
  %3739 = vmatprep.subr.bf16.mxu0 0
  %3740 = vmatpush1.bf16.msra.mxu0 %v3716
  %3741 = vmatprep.subr.bf16.mxu0 0
  %3742 = vmatpush1.bf16.msra.mxu0 %v3715
  %3743 = vmatprep.subr.bf16.mxu0 0
  %3744 = vmatpush1.bf16.msra.mxu0 %v3714
  %3745 = vmatprep.subr.bf16.mxu0 0
  %3746 = vmatpush1.bf16.msra.mxu0 %v3713
  %3747 = vmatprep.subr.bf16.mxu0 0
  %3748 = vmatpush2.bf16.msra.mxu0 0
  %3749 = vmatprep.subr.bf16.mxu0 0
  %3750 = vmatpush2.bf16.msra.mxu0 0
  %3751 = vmatprep.subr.bf16.mxu0 0
  %3752 = vmatpush2.bf16.msra.mxu0 0
  %3753 = vmatprep.subr.bf16.mxu0 0
  %3754 = vmatpush2.bf16.msra.mxu0 0
  %3755 = vmatprep.subr.bf16.mxu0 0
  %3756 = vmatpush2.bf16.msra.mxu0 0
  %3757 = vmatprep.subr.bf16.mxu0 0
  %3758 = vmatpush2.bf16.msra.mxu0 0
  %3759 = vmatprep.subr.bf16.mxu0 0
  %3760 = vmatpush2.bf16.msra.mxu0 0
  %3761 = vmatprep.subr.bf16.mxu0 0
  %3762 = vmatpush2.bf16.msra.mxu0 %v3720
  %3763 = vmatprep.mubr.bf16.mxu0 %v3729
  %3764 = vmatmul.mubr.bf16.gmra.mxu0 %v3725
  %v3765 = vpop.f32.mrf.mxu0
  %v3766 = vadd.f32 0.0, %v3765
  %v3767 = vpop.f32.mrf.mxu0
  %v3768 = vpop.f32.mrf.mxu0
  %v3769 = vpop.f32.mrf.mxu0
  %3770 = vdwg.mxu0
  %v3772 = vunpack.c.l.b16 %v3664
  %v3773 = vunpack.c.h.b16 %v3664
  %v3774 = vpack.c.b16 %v3772, %v3772
  %v3775 = vpack.c.b16 %v3773, %v3773
  %v3778 = vsel %vm1171, %v3775, 0
  %3780 = vmatprep.subr.bf16.mxu0 0
  %3781 = vmatpush1.bf16.msra.mxu0 %v3662
  %3782 = vmatprep.subr.bf16.mxu0 0
  %3783 = vmatpush1.bf16.msra.mxu0 %v3661
  %3784 = vmatprep.subr.bf16.mxu0 0
  %3785 = vmatpush1.bf16.msra.mxu0 %v3660
  %3786 = vmatprep.subr.bf16.mxu0 0
  %3787 = vmatpush1.bf16.msra.mxu0 %v3659
  %3788 = vmatprep.subr.bf16.mxu0 0
  %3789 = vmatpush1.bf16.msra.mxu0 %v3658
  %3790 = vmatprep.subr.bf16.mxu0 0
  %3791 = vmatpush1.bf16.msra.mxu0 %v3657
  %3792 = vmatprep.subr.bf16.mxu0 0
  %3793 = vmatpush1.bf16.msra.mxu0 %v3656
  %3794 = vmatprep.subr.bf16.mxu0 0
  %3795 = vmatpush1.bf16.msra.mxu0 %v3655
  %3796 = vmatprep.subr.bf16.mxu0 0
  %3797 = vmatpush2.bf16.msra.mxu0 0
  %3798 = vmatprep.subr.bf16.mxu0 0
  %3799 = vmatpush2.bf16.msra.mxu0 0
  %3800 = vmatprep.subr.bf16.mxu0 0
  %3801 = vmatpush2.bf16.msra.mxu0 0
  %3802 = vmatprep.subr.bf16.mxu0 0
  %3803 = vmatpush2.bf16.msra.mxu0 0
  %3804 = vmatprep.subr.bf16.mxu0 0
  %3805 = vmatpush2.bf16.msra.mxu0 0
  %3806 = vmatprep.subr.bf16.mxu0 0
  %3807 = vmatpush2.bf16.msra.mxu0 0
  %3808 = vmatprep.subr.bf16.mxu0 0
  %3809 = vmatpush2.bf16.msra.mxu0 0
  %3810 = vmatprep.subr.bf16.mxu0 0
  %3811 = vmatpush2.bf16.msra.mxu0 %v3663
  %3812 = vmatprep.mubr.bf16.mxu0 %v3778
  %3813 = vmatmul.mubr.bf16.gmra.mxu0 %v3774
  %v3814 = vpop.f32.mrf.mxu0
  %v3815 = vadd.f32 %v3766, %v3814
  %v3816 = vpop.f32.mrf.mxu0
  %v3817 = vpop.f32.mrf.mxu0
  %v3818 = vpop.f32.mrf.mxu0
  %3819 = vdwg.mxu0
  %v3820 = vld [vmem:[%s9 + $0xa0] sm:$0xff]
  %3822 = vset.pattern.permute.xlu0 0
  %3823 = vperm.xlu0 %3822, %v3820
  %v3824 = vpop.permute.xlu0 %3823
  %v3826 = vadd.f32 %v3815, %v3824
  %v3827 = vmax.f32 %v3826, 0.0
  %v3828 = vpack.c.bf16 %v3827, %v3827
  %3829 = vmatprep.subr.bf16.mxu0 %v2510
  %3830 = vmatpush1.bf16.msra.mxu0 %v2509
  %3831 = vmatprep.subr.bf16.mxu0 %v2506
  %3832 = vmatpush1.bf16.msra.mxu0 %v2505
  %3833 = vmatprep.subr.bf16.mxu0 %v2502
  %3834 = vmatpush1.bf16.msra.mxu0 %v2501
  %3835 = vmatprep.subr.bf16.mxu0 %v2498
  %3836 = vmatpush1.bf16.msra.mxu0 %v2497
  %3837 = vmatprep.subr.bf16.mxu0 %v2494
  %3838 = vmatpush1.bf16.msra.mxu0 %v2493
  %3839 = vmatprep.subr.bf16.mxu0 %v2490
  %3840 = vmatpush1.bf16.msra.mxu0 %v2489
  %3841 = vmatprep.subr.bf16.mxu0 %v2486
  %3842 = vmatpush1.bf16.msra.mxu0 %v2485
  %3843 = vmatprep.subr.bf16.mxu0 %v2482
  %3844 = vmatpush1.bf16.msra.mxu0 %v2481
  %3845 = vmatprep.subr.bf16.mxu0 0
  %3846 = vmatpush2.bf16.msra.mxu0 0
  %3847 = vmatprep.subr.bf16.mxu0 0
  %3848 = vmatpush2.bf16.msra.mxu0 0
  %3849 = vmatprep.subr.bf16.mxu0 0
  %3850 = vmatpush2.bf16.msra.mxu0 0
  %3851 = vmatprep.subr.bf16.mxu0 0
  %3852 = vmatpush2.bf16.msra.mxu0 0
  %3853 = vmatprep.subr.bf16.mxu0 0
  %3854 = vmatpush2.bf16.msra.mxu0 0
  %3855 = vmatprep.subr.bf16.mxu0 0
  %3856 = vmatpush2.bf16.msra.mxu0 0
  %3857 = vmatprep.subr.bf16.mxu0 0
  %3858 = vmatpush2.bf16.msra.mxu0 0
  %3859 = vmatprep.subr.bf16.mxu0 0
  %3860 = vmatpush2.bf16.msra.mxu0 0
  %3861 = vmatprep.mubr.bf16.mxu0 0
  %3862 = vmatmul.mubr.bf16.gmra.mxu0 %v3828
  %v3863 = vpop.f32.mrf.mxu0
  %v3864 = vadd.f32 0.0, %v3863
  %v3865 = vpop.f32.mrf.mxu0
  %v3866 = vadd.f32 0.0, %v3865
  %v3867 = vpop.f32.mrf.mxu0
  %v3868 = vpop.f32.mrf.mxu0
  %3869 = vdwg.mxu0
  %3870 = vmatprep.subr.bf16.mxu0 %v2512
  %3871 = vmatpush1.bf16.msra.mxu0 %v2511
  %3872 = vmatprep.subr.bf16.mxu0 %v2508
  %3873 = vmatpush1.bf16.msra.mxu0 %v2507
  %3874 = vmatprep.subr.bf16.mxu0 %v2504
  %3875 = vmatpush1.bf16.msra.mxu0 %v2503
  %3876 = vmatprep.subr.bf16.mxu0 %v2500
  %3877 = vmatpush1.bf16.msra.mxu0 %v2499
  %3878 = vmatprep.subr.bf16.mxu0 %v2496
  %3879 = vmatpush1.bf16.msra.mxu0 %v2495
  %3880 = vmatprep.subr.bf16.mxu0 %v2492
  %3881 = vmatpush1.bf16.msra.mxu0 %v2491
  %3882 = vmatprep.subr.bf16.mxu0 %v2488
  %3883 = vmatpush1.bf16.msra.mxu0 %v2487
  %3884 = vmatprep.subr.bf16.mxu0 %v2484
  %3885 = vmatpush1.bf16.msra.mxu0 %v2483
  %3886 = vmatprep.subr.bf16.mxu0 0
  %3887 = vmatpush2.bf16.msra.mxu0 0
  %3888 = vmatprep.subr.bf16.mxu0 0
  %3889 = vmatpush2.bf16.msra.mxu0 0
  %3890 = vmatprep.subr.bf16.mxu0 0
  %3891 = vmatpush2.bf16.msra.mxu0 0
  %3892 = vmatprep.subr.bf16.mxu0 0
  %3893 = vmatpush2.bf16.msra.mxu0 0
  %3894 = vmatprep.subr.bf16.mxu0 0
  %3895 = vmatpush2.bf16.msra.mxu0 0
  %3896 = vmatprep.subr.bf16.mxu0 0
  %3897 = vmatpush2.bf16.msra.mxu0 0
  %3898 = vmatprep.subr.bf16.mxu0 0
  %3899 = vmatpush2.bf16.msra.mxu0 0
  %3900 = vmatprep.subr.bf16.mxu0 0
  %3901 = vmatpush2.bf16.msra.mxu0 0
  %3902 = vmatprep.mubr.bf16.mxu0 0
  %3903 = vmatmul.mubr.bf16.gmra.mxu0 %v3828
  %v3904 = vpop.f32.mrf.mxu0
  %v3905 = vadd.f32 0.0, %v3904
  %v3906 = vpop.f32.mrf.mxu0
  %v3907 = vadd.f32 0.0, %v3906
  %v3908 = vpop.f32.mrf.mxu0
  %v3909 = vpop.f32.mrf.mxu0
  %3910 = vdwg.mxu0
  %3911 = vrot.lane.b32.xlu0 %v3864, 17
  %v3912 = vpop.permute.xlu0 %3911
  %3913 = vrot.lane.b32.xlu0 %v3866, 17
  %v3914 = vpop.permute.xlu0 %3913
  %3915 = vrot.lane.b32.xlu0 %v3905, 17
  %v3916 = vpop.permute.xlu0 %3915
  %3917 = vrot.lane.b32.xlu0 %v3907, 17
  %v3918 = vpop.permute.xlu0 %3917
  %v3919 = vsel %vm62, %v3916, %v3918
  %v3920 = vsel %vm62, %v3914, %v3916
  %v3921 = vsel %vm62, %v3912, %v3914
  %v3922 = vsel %vm62, %v3918, %v3912
  %v3923 = vmul.f32 %v3922, %v70
  %v3924 = vmul.f32 %v3921, %v74
  %v3925 = vmul.f32 %v3920, %v78
  %v3926 = vmul.f32 %v3919, %v82
  %3927 = vrot.lane.b32.xlu0 %v3864, 16
  %v3928 = vpop.permute.xlu0 %3927
  %3929 = vrot.lane.b32.xlu0 %v3866, 16
  %v3930 = vpop.permute.xlu0 %3929
  %3931 = vrot.lane.b32.xlu0 %v3905, 16
  %v3932 = vpop.permute.xlu0 %3931
  %3933 = vrot.lane.b32.xlu0 %v3907, 16
  %v3934 = vpop.permute.xlu0 %3933
  %v3935 = vsel %vm95, %v3932, %v3934
  %v3936 = vsel %vm95, %v3930, %v3932
  %v3937 = vsel %vm95, %v3928, %v3930
  %v3938 = vsel %vm95, %v3934, %v3928
  %v3939 = vmul.f32 %v3938, %v103
  %v3940 = vmul.f32 %v3937, %v107
  %v3941 = vmul.f32 %v3936, %v111
  %v3942 = vmul.f32 %v3935, %v115
  %3943 = vrot.lane.b32.xlu0 %v3864, 15
  %v3944 = vpop.permute.xlu0 %3943
  %3945 = vrot.lane.b32.xlu0 %v3866, 15
  %v3946 = vpop.permute.xlu0 %3945
  %3947 = vrot.lane.b32.xlu0 %v3905, 15
  %v3948 = vpop.permute.xlu0 %3947
  %3949 = vrot.lane.b32.xlu0 %v3907, 15
  %v3950 = vpop.permute.xlu0 %3949
  %v3951 = vsel %vm128, %v3948, %v3950
  %v3952 = vsel %vm128, %v3946, %v3948
  %v3953 = vsel %vm128, %v3944, %v3946
  %v3954 = vsel %vm128, %v3950, %v3944
  %v3955 = vmul.f32 %v3954, %v136
  %v3956 = vmul.f32 %v3953, %v140
  %v3957 = vmul.f32 %v3952, %v144
  %v3958 = vmul.f32 %v3951, %v148
  %3959 = vrot.lane.b32.xlu0 %v3864, 1
  %v3960 = vpop.permute.xlu0 %3959
  %3961 = vrot.lane.b32.xlu0 %v3866, 1
  %v3962 = vpop.permute.xlu0 %3961
  %3963 = vrot.lane.b32.xlu0 %v3905, 1
  %v3964 = vpop.permute.xlu0 %3963
  %3965 = vrot.lane.b32.xlu0 %v3907, 1
  %v3966 = vpop.permute.xlu0 %3965
  %v3967 = vsel %vm161, %v3964, %v3966
  %v3968 = vsel %vm161, %v3962, %v3964
  %v3969 = vsel %vm161, %v3960, %v3962
  %v3970 = vsel %vm161, %v3966, %v3960
  %v3971 = vmul.f32 %v3970, %v169
  %v3972 = vmul.f32 %v3969, %v173
  %v3973 = vmul.f32 %v3968, %v177
  %v3974 = vmul.f32 %v3967, %v181
  %3975 = vrot.lane.b32.xlu0 %v3864, 127
  %v3976 = vpop.permute.xlu0 %3975
  %3977 = vrot.lane.b32.xlu0 %v3866, 127
  %v3978 = vpop.permute.xlu0 %3977
  %3979 = vrot.lane.b32.xlu0 %v3905, 127
  %v3980 = vpop.permute.xlu0 %3979
  %3981 = vrot.lane.b32.xlu0 %v3907, 127
  %v3982 = vpop.permute.xlu0 %3981
  %v3983 = vsel %vm194, %v3980, %v3982
  %v3984 = vsel %vm194, %v3978, %v3980
  %v3985 = vsel %vm194, %v3976, %v3978
  %v3986 = vsel %vm194, %v3982, %v3976
  %v3987 = vmul.f32 %v3985, %v202
  %v3988 = vmul.f32 %v3984, %v206
  %v3989 = vmul.f32 %v3983, %v210
  %v3990 = vmul.f32 %v3986, %v214
  %3991 = vrot.lane.b32.xlu0 %v3864, 113
  %v3992 = vpop.permute.xlu0 %3991
  %3993 = vrot.lane.b32.xlu0 %v3866, 113
  %v3994 = vpop.permute.xlu0 %3993
  %3995 = vrot.lane.b32.xlu0 %v3905, 113
  %v3996 = vpop.permute.xlu0 %3995
  %3997 = vrot.lane.b32.xlu0 %v3907, 113
  %v3998 = vpop.permute.xlu0 %3997
  %v3999 = vsel %vm227, %v3996, %v3998
  %v4000 = vsel %vm227, %v3994, %v3996
  %v4001 = vsel %vm227, %v3992, %v3994
  %v4002 = vsel %vm227, %v3998, %v3992
  %v4003 = vmul.f32 %v4001, %v235
  %v4004 = vmul.f32 %v4000, %v239
  %v4005 = vmul.f32 %v3999, %v243
  %v4006 = vmul.f32 %v4002, %v247
  %4007 = vrot.lane.b32.xlu0 %v3864, 112
  %v4008 = vpop.permute.xlu0 %4007
  %4009 = vrot.lane.b32.xlu0 %v3866, 112
  %v4010 = vpop.permute.xlu0 %4009
  %4011 = vrot.lane.b32.xlu0 %v3905, 112
  %v4012 = vpop.permute.xlu0 %4011
  %4013 = vrot.lane.b32.xlu0 %v3907, 112
  %v4014 = vpop.permute.xlu0 %4013
  %v4015 = vsel %vm260, %v4012, %v4014
  %v4016 = vsel %vm260, %v4010, %v4012
  %v4017 = vsel %vm260, %v4008, %v4010
  %v4018 = vsel %vm260, %v4014, %v4008
  %v4019 = vmul.f32 %v4017, %v268
  %v4020 = vmul.f32 %v4016, %v272
  %v4021 = vmul.f32 %v4015, %v276
  %v4022 = vmul.f32 %v4018, %v280
  %4023 = vrot.lane.b32.xlu0 %v3864, 111
  %v4024 = vpop.permute.xlu0 %4023
  %4025 = vrot.lane.b32.xlu0 %v3866, 111
  %v4026 = vpop.permute.xlu0 %4025
  %4027 = vrot.lane.b32.xlu0 %v3905, 111
  %v4028 = vpop.permute.xlu0 %4027
  %4029 = vrot.lane.b32.xlu0 %v3907, 111
  %v4030 = vpop.permute.xlu0 %4029
  %v4031 = vsel %vm293, %v4028, %v4030
  %v4032 = vsel %vm293, %v4026, %v4028
  %v4033 = vsel %vm293, %v4024, %v4026
  %v4034 = vsel %vm293, %v4030, %v4024
  %v4035 = vmul.f32 %v4033, %v301
  %v4036 = vmul.f32 %v4032, %v305
  %v4037 = vmul.f32 %v4031, %v309
  %v4038 = vmul.f32 %v4034, %v313
  %v4039 = vpack.c.bf16 %v3939, %v3923
  %v4040 = vpack.c.bf16 %v3940, %v3924
  %v4041 = vpack.c.bf16 %v3941, %v3925
  %v4042 = vpack.c.bf16 %v3942, %v3926
  %v4043 = vpack.c.bf16 %v3971, %v3955
  %v4044 = vpack.c.bf16 %v3972, %v3956
  %v4045 = vpack.c.bf16 %v3973, %v3957
  %v4046 = vpack.c.bf16 %v3974, %v3958
  %v4047 = vpack.c.bf16 %v3987, %v3864
  %v4048 = vpack.c.bf16 %v3988, %v3866
  %v4049 = vpack.c.bf16 %v3989, %v3905
  %v4050 = vpack.c.bf16 %v3990, %v3907
  %v4051 = vpack.c.bf16 %v4019, %v4003
  %v4052 = vpack.c.bf16 %v4020, %v4004
  %v4053 = vpack.c.bf16 %v4021, %v4005
  %v4054 = vpack.c.bf16 %v4022, %v4006
  %v4055 = vpack.c.bf16 %v4035, %v4035
  %v4056 = vpack.c.bf16 %v4036, %v4036
  %v4057 = vpack.c.bf16 %v4037, %v4037
  %v4058 = vpack.c.bf16 %v4038, %v4038
  %v4059 = vld [vmem:[%s8 + $0x120] sm:$0xf]
  %4060 = vrot.lane.b32.xlu0 %v3111, 17
  %v4061 = vpop.permute.xlu0 %4060
  %4062 = vrot.lane.b32.xlu0 %v3112, 17
  %v4063 = vpop.permute.xlu0 %4062
  %4064 = vrot.lane.b32.xlu0 %v3113, 17
  %v4065 = vpop.permute.xlu0 %4064
  %4066 = vrot.lane.b32.xlu0 %v3114, 17
  %v4067 = vpop.permute.xlu0 %4066
  %v4068 = vsel %vm62, %v4065, %v4067
  %v4069 = vsel %vm62, %v4063, %v4065
  %v4070 = vsel %vm62, %v4061, %v4063
  %v4071 = vsel %vm62, %v4067, %v4061
  %v4072 = vmul.f32 %v4071, %v70
  %v4073 = vmul.f32 %v4070, %v74
  %v4074 = vmul.f32 %v4069, %v78
  %v4075 = vmul.f32 %v4068, %v82
  %4076 = vrot.lane.b32.xlu0 %v3111, 16
  %v4077 = vpop.permute.xlu0 %4076
  %4078 = vrot.lane.b32.xlu0 %v3112, 16
  %v4079 = vpop.permute.xlu0 %4078
  %4080 = vrot.lane.b32.xlu0 %v3113, 16
  %v4081 = vpop.permute.xlu0 %4080
  %4082 = vrot.lane.b32.xlu0 %v3114, 16
  %v4083 = vpop.permute.xlu0 %4082
  %v4084 = vsel %vm95, %v4081, %v4083
  %v4085 = vsel %vm95, %v4079, %v4081
  %v4086 = vsel %vm95, %v4077, %v4079
  %v4087 = vsel %vm95, %v4083, %v4077
  %v4088 = vmul.f32 %v4087, %v103
  %v4089 = vmul.f32 %v4086, %v107
  %v4090 = vmul.f32 %v4085, %v111
  %v4091 = vmul.f32 %v4084, %v115
  %4092 = vrot.lane.b32.xlu0 %v3111, 15
  %v4093 = vpop.permute.xlu0 %4092
  %4094 = vrot.lane.b32.xlu0 %v3112, 15
  %v4095 = vpop.permute.xlu0 %4094
  %4096 = vrot.lane.b32.xlu0 %v3113, 15
  %v4097 = vpop.permute.xlu0 %4096
  %4098 = vrot.lane.b32.xlu0 %v3114, 15
  %v4099 = vpop.permute.xlu0 %4098
  %v4100 = vsel %vm128, %v4097, %v4099
  %v4101 = vsel %vm128, %v4095, %v4097
  %v4102 = vsel %vm128, %v4093, %v4095
  %v4103 = vsel %vm128, %v4099, %v4093
  %v4104 = vmul.f32 %v4103, %v136
  %v4105 = vmul.f32 %v4102, %v140
  %v4106 = vmul.f32 %v4101, %v144
  %v4107 = vmul.f32 %v4100, %v148
  %4108 = vrot.lane.b32.xlu0 %v3111, 1
  %v4109 = vpop.permute.xlu0 %4108
  %4110 = vrot.lane.b32.xlu0 %v3112, 1
  %v4111 = vpop.permute.xlu0 %4110
  %4112 = vrot.lane.b32.xlu0 %v3113, 1
  %v4113 = vpop.permute.xlu0 %4112
  %4114 = vrot.lane.b32.xlu0 %v3114, 1
  %v4115 = vpop.permute.xlu0 %4114
  %v4116 = vsel %vm161, %v4113, %v4115
  %v4117 = vsel %vm161, %v4111, %v4113
  %v4118 = vsel %vm161, %v4109, %v4111
  %v4119 = vsel %vm161, %v4115, %v4109
  %v4120 = vmul.f32 %v4119, %v169
  %v4121 = vmul.f32 %v4118, %v173
  %v4122 = vmul.f32 %v4117, %v177
  %v4123 = vmul.f32 %v4116, %v181
  %4124 = vrot.lane.b32.xlu0 %v3111, 127
  %v4125 = vpop.permute.xlu0 %4124
  %4126 = vrot.lane.b32.xlu0 %v3112, 127
  %v4127 = vpop.permute.xlu0 %4126
  %4128 = vrot.lane.b32.xlu0 %v3113, 127
  %v4129 = vpop.permute.xlu0 %4128
  %4130 = vrot.lane.b32.xlu0 %v3114, 127
  %v4131 = vpop.permute.xlu0 %4130
  %v4132 = vsel %vm194, %v4129, %v4131
  %v4133 = vsel %vm194, %v4127, %v4129
  %v4134 = vsel %vm194, %v4125, %v4127
  %v4135 = vsel %vm194, %v4131, %v4125
  %v4136 = vmul.f32 %v4134, %v202
  %v4137 = vmul.f32 %v4133, %v206
  %v4138 = vmul.f32 %v4132, %v210
  %v4139 = vmul.f32 %v4135, %v214
  %4140 = vrot.lane.b32.xlu0 %v3111, 113
  %v4141 = vpop.permute.xlu0 %4140
  %4142 = vrot.lane.b32.xlu0 %v3112, 113
  %v4143 = vpop.permute.xlu0 %4142
  %4144 = vrot.lane.b32.xlu0 %v3113, 113
  %v4145 = vpop.permute.xlu0 %4144
  %4146 = vrot.lane.b32.xlu0 %v3114, 113
  %v4147 = vpop.permute.xlu0 %4146
  %v4148 = vsel %vm227, %v4145, %v4147
  %v4149 = vsel %vm227, %v4143, %v4145
  %v4150 = vsel %vm227, %v4141, %v4143
  %v4151 = vsel %vm227, %v4147, %v4141
  %v4152 = vmul.f32 %v4150, %v235
  %v4153 = vmul.f32 %v4149, %v239
  %v4154 = vmul.f32 %v4148, %v243
  %v4155 = vmul.f32 %v4151, %v247
  %4156 = vrot.lane.b32.xlu0 %v3111, 112
  %v4157 = vpop.permute.xlu0 %4156
  %4158 = vrot.lane.b32.xlu0 %v3112, 112
  %v4159 = vpop.permute.xlu0 %4158
  %4160 = vrot.lane.b32.xlu0 %v3113, 112
  %v4161 = vpop.permute.xlu0 %4160
  %4162 = vrot.lane.b32.xlu0 %v3114, 112
  %v4163 = vpop.permute.xlu0 %4162
  %v4164 = vsel %vm260, %v4161, %v4163
  %v4165 = vsel %vm260, %v4159, %v4161
  %v4166 = vsel %vm260, %v4157, %v4159
  %v4167 = vsel %vm260, %v4163, %v4157
  %v4168 = vmul.f32 %v4166, %v268
  %v4169 = vmul.f32 %v4165, %v272
  %v4170 = vmul.f32 %v4164, %v276
  %v4171 = vmul.f32 %v4167, %v280
  %4172 = vrot.lane.b32.xlu0 %v3111, 111
  %v4173 = vpop.permute.xlu0 %4172
  %4174 = vrot.lane.b32.xlu0 %v3112, 111
  %v4175 = vpop.permute.xlu0 %4174
  %4176 = vrot.lane.b32.xlu0 %v3113, 111
  %v4177 = vpop.permute.xlu0 %4176
  %4178 = vrot.lane.b32.xlu0 %v3114, 111
  %v4179 = vpop.permute.xlu0 %4178
  %v4180 = vsel %vm293, %v4177, %v4179
  %v4181 = vsel %vm293, %v4175, %v4177
  %v4182 = vsel %vm293, %v4173, %v4175
  %v4183 = vsel %vm293, %v4179, %v4173
  %v4184 = vmul.f32 %v4182, %v301
  %v4185 = vmul.f32 %v4181, %v305
  %v4186 = vmul.f32 %v4180, %v309
  %v4187 = vmul.f32 %v4183, %v313
  %v4188 = vpack.c.bf16 %v4088, %v4072
  %v4189 = vpack.c.bf16 %v4089, %v4073
  %v4190 = vpack.c.bf16 %v4090, %v4074
  %v4191 = vpack.c.bf16 %v4091, %v4075
  %v4192 = vpack.c.bf16 %v4120, %v4104
  %v4193 = vpack.c.bf16 %v4121, %v4105
  %v4194 = vpack.c.bf16 %v4122, %v4106
  %v4195 = vpack.c.bf16 %v4123, %v4107
  %v4196 = vpack.c.bf16 %v4136, %v3111
  %v4197 = vpack.c.bf16 %v4137, %v3112
  %v4198 = vpack.c.bf16 %v4138, %v3113
  %v4199 = vpack.c.bf16 %v4139, %v3114
  %v4200 = vpack.c.bf16 %v4168, %v4152
  %v4201 = vpack.c.bf16 %v4169, %v4153
  %v4202 = vpack.c.bf16 %v4170, %v4154
  %v4203 = vpack.c.bf16 %v4171, %v4155
  %v4204 = vpack.c.bf16 %v4184, %v4184
  %v4205 = vpack.c.bf16 %v4185, %v4185
  %v4206 = vpack.c.bf16 %v4186, %v4186
  %v4207 = vpack.c.bf16 %v4187, %v4187
  %v4208 = vld [vmem:[%s8 + $0x138] sm:$0xf]
  %v4210 = vsel %vm345, %v4208, 0
  %v4213 = vsel %vm349, %v4204, 0
  %v4216 = vsel %vm349, %v4205, 0
  %v4219 = vsel %vm349, %v4206, 0
  %v4222 = vsel %vm349, %v4207, 0
  %4224 = vmatprep.subr.bf16.mxu0 0
  %4225 = vmatpush1.bf16.msra.mxu0 0
  %4226 = vmatprep.subr.bf16.mxu0 0
  %4227 = vmatpush1.bf16.msra.mxu0 0
  %4228 = vmatprep.subr.bf16.mxu0 0
  %4229 = vmatpush1.bf16.msra.mxu0 0
  %4230 = vmatprep.subr.bf16.mxu0 %v4216
  %4231 = vmatpush1.bf16.msra.mxu0 %v4213
  %4232 = vmatprep.subr.bf16.mxu0 %v4201
  %4233 = vmatpush1.bf16.msra.mxu0 %v4200
  %4234 = vmatprep.subr.bf16.mxu0 %v4197
  %4235 = vmatpush1.bf16.msra.mxu0 %v4196
  %4236 = vmatprep.subr.bf16.mxu0 %v4193
  %4237 = vmatpush1.bf16.msra.mxu0 %v4192
  %4238 = vmatprep.subr.bf16.mxu0 %v4189
  %4239 = vmatpush1.bf16.msra.mxu0 %v4188
  %4240 = vmatprep.subr.bf16.mxu0 0
  %4241 = vmatpush2.bf16.msra.mxu0 0
  %4242 = vmatprep.subr.bf16.mxu0 0
  %4243 = vmatpush2.bf16.msra.mxu0 0
  %4244 = vmatprep.subr.bf16.mxu0 0
  %4245 = vmatpush2.bf16.msra.mxu0 0
  %4246 = vmatprep.subr.bf16.mxu0 0
  %4247 = vmatpush2.bf16.msra.mxu0 0
  %4248 = vmatprep.subr.bf16.mxu0 0
  %4249 = vmatpush2.bf16.msra.mxu0 0
  %4250 = vmatprep.subr.bf16.mxu0 0
  %4251 = vmatpush2.bf16.msra.mxu0 0
  %4252 = vmatprep.subr.bf16.mxu0 0
  %4253 = vmatpush2.bf16.msra.mxu0 0
  %4254 = vmatprep.subr.bf16.mxu0 0
  %4255 = vmatpush2.bf16.msra.mxu0 0
  %4256 = vmatprep.mubr.bf16.mxu0 0
  %4257 = vmatmul.mubr.bf16.gmra.mxu0 %v4210
  %v4258 = vpop.f32.mrf.mxu0
  %v4259 = vadd.f32 0.0, %v4258
  %v4260 = vpop.f32.mrf.mxu0
  %v4261 = vadd.f32 0.0, %v4260
  %v4262 = vpop.f32.mrf.mxu0
  %v4263 = vpop.f32.mrf.mxu0
  %4264 = vdwg.mxu0
  %4265 = vmatprep.subr.bf16.mxu0 0
  %4266 = vmatpush1.bf16.msra.mxu0 0
  %4267 = vmatprep.subr.bf16.mxu0 0
  %4268 = vmatpush1.bf16.msra.mxu0 0
  %4269 = vmatprep.subr.bf16.mxu0 0
  %4270 = vmatpush1.bf16.msra.mxu0 0
  %4271 = vmatprep.subr.bf16.mxu0 %v4222
  %4272 = vmatpush1.bf16.msra.mxu0 %v4219
  %4273 = vmatprep.subr.bf16.mxu0 %v4203
  %4274 = vmatpush1.bf16.msra.mxu0 %v4202
  %4275 = vmatprep.subr.bf16.mxu0 %v4199
  %4276 = vmatpush1.bf16.msra.mxu0 %v4198
  %4277 = vmatprep.subr.bf16.mxu0 %v4195
  %4278 = vmatpush1.bf16.msra.mxu0 %v4194
  %4279 = vmatprep.subr.bf16.mxu0 %v4191
  %4280 = vmatpush1.bf16.msra.mxu0 %v4190
  %4281 = vmatprep.subr.bf16.mxu0 0
  %4282 = vmatpush2.bf16.msra.mxu0 0
  %4283 = vmatprep.subr.bf16.mxu0 0
  %4284 = vmatpush2.bf16.msra.mxu0 0
  %4285 = vmatprep.subr.bf16.mxu0 0
  %4286 = vmatpush2.bf16.msra.mxu0 0
  %4287 = vmatprep.subr.bf16.mxu0 0
  %4288 = vmatpush2.bf16.msra.mxu0 0
  %4289 = vmatprep.subr.bf16.mxu0 0
  %4290 = vmatpush2.bf16.msra.mxu0 0
  %4291 = vmatprep.subr.bf16.mxu0 0
  %4292 = vmatpush2.bf16.msra.mxu0 0
  %4293 = vmatprep.subr.bf16.mxu0 0
  %4294 = vmatpush2.bf16.msra.mxu0 0
  %4295 = vmatprep.subr.bf16.mxu0 0
  %4296 = vmatpush2.bf16.msra.mxu0 0
  %4297 = vmatprep.mubr.bf16.mxu0 0
  %4298 = vmatmul.mubr.bf16.gmra.mxu0 %v4210
  %v4299 = vpop.f32.mrf.mxu0
  %v4300 = vadd.f32 0.0, %v4299
  %v4301 = vpop.f32.mrf.mxu0
  %v4302 = vadd.f32 0.0, %v4301
  %v4303 = vpop.f32.mrf.mxu0
  %v4304 = vpop.f32.mrf.mxu0
  %4305 = vdwg.mxu0
  %v4307 = vsel %vm345, %v4059, 0
  %v4310 = vsel %vm349, %v4055, 0
  %v4313 = vsel %vm349, %v4056, 0
  %v4316 = vsel %vm349, %v4057, 0
  %v4319 = vsel %vm349, %v4058, 0
  %4321 = vmatprep.subr.bf16.mxu0 0
  %4322 = vmatpush1.bf16.msra.mxu0 0
  %4323 = vmatprep.subr.bf16.mxu0 0
  %4324 = vmatpush1.bf16.msra.mxu0 0
  %4325 = vmatprep.subr.bf16.mxu0 0
  %4326 = vmatpush1.bf16.msra.mxu0 0
  %4327 = vmatprep.subr.bf16.mxu0 %v4313
  %4328 = vmatpush1.bf16.msra.mxu0 %v4310
  %4329 = vmatprep.subr.bf16.mxu0 %v4052
  %4330 = vmatpush1.bf16.msra.mxu0 %v4051
  %4331 = vmatprep.subr.bf16.mxu0 %v4048
  %4332 = vmatpush1.bf16.msra.mxu0 %v4047
  %4333 = vmatprep.subr.bf16.mxu0 %v4044
  %4334 = vmatpush1.bf16.msra.mxu0 %v4043
  %4335 = vmatprep.subr.bf16.mxu0 %v4040
  %4336 = vmatpush1.bf16.msra.mxu0 %v4039
  %4337 = vmatprep.subr.bf16.mxu0 0
  %4338 = vmatpush2.bf16.msra.mxu0 0
  %4339 = vmatprep.subr.bf16.mxu0 0
  %4340 = vmatpush2.bf16.msra.mxu0 0
  %4341 = vmatprep.subr.bf16.mxu0 0
  %4342 = vmatpush2.bf16.msra.mxu0 0
  %4343 = vmatprep.subr.bf16.mxu0 0
  %4344 = vmatpush2.bf16.msra.mxu0 0
  %4345 = vmatprep.subr.bf16.mxu0 0
  %4346 = vmatpush2.bf16.msra.mxu0 0
  %4347 = vmatprep.subr.bf16.mxu0 0
  %4348 = vmatpush2.bf16.msra.mxu0 0
  %4349 = vmatprep.subr.bf16.mxu0 0
  %4350 = vmatpush2.bf16.msra.mxu0 0
  %4351 = vmatprep.subr.bf16.mxu0 0
  %4352 = vmatpush2.bf16.msra.mxu0 0
  %4353 = vmatprep.mubr.bf16.mxu0 0
  %4354 = vmatmul.mubr.bf16.gmra.mxu0 %v4307
  %v4355 = vpop.f32.mrf.mxu0
  %v4356 = vadd.f32 %v4259, %v4355
  %v4357 = vpop.f32.mrf.mxu0
  %v4358 = vadd.f32 %v4261, %v4357
  %v4359 = vpop.f32.mrf.mxu0
  %v4360 = vpop.f32.mrf.mxu0
  %4361 = vdwg.mxu0
  %4362 = vmatprep.subr.bf16.mxu0 0
  %4363 = vmatpush1.bf16.msra.mxu0 0
  %4364 = vmatprep.subr.bf16.mxu0 0
  %4365 = vmatpush1.bf16.msra.mxu0 0
  %4366 = vmatprep.subr.bf16.mxu0 0
  %4367 = vmatpush1.bf16.msra.mxu0 0
  %4368 = vmatprep.subr.bf16.mxu0 %v4319
  %4369 = vmatpush1.bf16.msra.mxu0 %v4316
  %4370 = vmatprep.subr.bf16.mxu0 %v4054
  %4371 = vmatpush1.bf16.msra.mxu0 %v4053
  %4372 = vmatprep.subr.bf16.mxu0 %v4050
  %4373 = vmatpush1.bf16.msra.mxu0 %v4049
  %4374 = vmatprep.subr.bf16.mxu0 %v4046
  %4375 = vmatpush1.bf16.msra.mxu0 %v4045
  %4376 = vmatprep.subr.bf16.mxu0 %v4042
  %4377 = vmatpush1.bf16.msra.mxu0 %v4041
  %4378 = vmatprep.subr.bf16.mxu0 0
  %4379 = vmatpush2.bf16.msra.mxu0 0
  %4380 = vmatprep.subr.bf16.mxu0 0
  %4381 = vmatpush2.bf16.msra.mxu0 0
  %4382 = vmatprep.subr.bf16.mxu0 0
  %4383 = vmatpush2.bf16.msra.mxu0 0
  %4384 = vmatprep.subr.bf16.mxu0 0
  %4385 = vmatpush2.bf16.msra.mxu0 0
  %4386 = vmatprep.subr.bf16.mxu0 0
  %4387 = vmatpush2.bf16.msra.mxu0 0
  %4388 = vmatprep.subr.bf16.mxu0 0
  %4389 = vmatpush2.bf16.msra.mxu0 0
  %4390 = vmatprep.subr.bf16.mxu0 0
  %4391 = vmatpush2.bf16.msra.mxu0 0
  %4392 = vmatprep.subr.bf16.mxu0 0
  %4393 = vmatpush2.bf16.msra.mxu0 0
  %4394 = vmatprep.mubr.bf16.mxu0 0
  %4395 = vmatmul.mubr.bf16.gmra.mxu0 %v4307
  %v4396 = vpop.f32.mrf.mxu0
  %v4397 = vadd.f32 %v4300, %v4396
  %v4398 = vpop.f32.mrf.mxu0
  %v4399 = vadd.f32 %v4302, %v4398
  %v4400 = vpop.f32.mrf.mxu0
  %v4401 = vpop.f32.mrf.mxu0
  %4402 = vdwg.mxu0
  %v4403 = vld [vmem:[%s9 + $0xc0] sm:$0xff]
  %4405 = vset.pattern.permute.xlu0 0
  %4406 = vperm.xlu0 %4405, %v4403
  %v4407 = vpop.permute.xlu0 %4406
  %v4409 = vadd.f32 %v4356, %v4407
  %v4410 = vadd.f32 %v4358, %v4407
  %v4411 = vadd.f32 %v4397, %v4407
  %v4412 = vadd.f32 %v4399, %v4407
  %v4413 = vmax.f32 %v4409, 0.0
  %v4414 = vmax.f32 %v4410, 0.0
  %v4415 = vmax.f32 %v4411, 0.0
  %v4416 = vmax.f32 %v4412, 0.0
  %v4417 = vpack.c.bf16 %v4413, %v3111
  %v4418 = vpack.c.bf16 %v4414, %v3112
  %v4419 = vpack.c.bf16 %v4415, %v3113
  %v4420 = vpack.c.bf16 %v4416, %v3114
  %v4421 = vld [vmem:[%s8 + $0x150] sm:$0x1]
  %v4422 = vld [vmem:[%s9 + $0xe0] sm:$0x3]
  %4424 = vset.pattern.permute.xlu0 0
  %4425 = vperm.xlu0 %4424, %v4422
  %v4426 = vpop.permute.xlu0 %4425
  %v4429 = vsel %vm1171, %v4421, 0
  %4431 = vmatprep.subr.bf16.mxu0 0
  %4432 = vmatpush1.bf16.msra.mxu0 0
  %4433 = vmatprep.subr.bf16.mxu0 0
  %4434 = vmatpush1.bf16.msra.mxu0 0
  %4435 = vmatprep.subr.bf16.mxu0 0
  %4436 = vmatpush1.bf16.msra.mxu0 0
  %4437 = vmatprep.subr.bf16.mxu0 0
  %4438 = vmatpush1.bf16.msra.mxu0 0
  %4439 = vmatprep.subr.bf16.mxu0 0
  %4440 = vmatpush1.bf16.msra.mxu0 0
  %4441 = vmatprep.subr.bf16.mxu0 0
  %4442 = vmatpush1.bf16.msra.mxu0 0
  %4443 = vmatprep.subr.bf16.mxu0 0
  %4444 = vmatpush1.bf16.msra.mxu0 0
  %4445 = vmatprep.subr.bf16.mxu0 %v4418
  %4446 = vmatpush1.bf16.msra.mxu0 %v4417
  %4447 = vmatprep.subr.bf16.mxu0 0
  %4448 = vmatpush2.bf16.msra.mxu0 0
  %4449 = vmatprep.subr.bf16.mxu0 0
  %4450 = vmatpush2.bf16.msra.mxu0 0
  %4451 = vmatprep.subr.bf16.mxu0 0
  %4452 = vmatpush2.bf16.msra.mxu0 0
  %4453 = vmatprep.subr.bf16.mxu0 0
  %4454 = vmatpush2.bf16.msra.mxu0 0
  %4455 = vmatprep.subr.bf16.mxu0 0
  %4456 = vmatpush2.bf16.msra.mxu0 0
  %4457 = vmatprep.subr.bf16.mxu0 0
  %4458 = vmatpush2.bf16.msra.mxu0 0
  %4459 = vmatprep.subr.bf16.mxu0 0
  %4460 = vmatpush2.bf16.msra.mxu0 0
  %4461 = vmatprep.subr.bf16.mxu0 0
  %4462 = vmatpush2.bf16.msra.mxu0 0
  %4463 = vmatprep.mubr.bf16.mxu0 0
  %4464 = vmatmul.mubr.bf16.gmra.mxu0 %v4429
  %v4465 = vpop.f32.mrf.mxu0
  %v4466 = vadd.f32 %v4426, %v4465
  %v4467 = vpop.f32.mrf.mxu0
  %v4468 = vadd.f32 %v4426, %v4467
  %v4469 = vpop.f32.mrf.mxu0
  %v4470 = vpop.f32.mrf.mxu0
  %4471 = vdwg.mxu0
  %4472 = vmatprep.subr.bf16.mxu0 0
  %4473 = vmatpush1.bf16.msra.mxu0 0
  %4474 = vmatprep.subr.bf16.mxu0 0
  %4475 = vmatpush1.bf16.msra.mxu0 0
  %4476 = vmatprep.subr.bf16.mxu0 0
  %4477 = vmatpush1.bf16.msra.mxu0 0
  %4478 = vmatprep.subr.bf16.mxu0 0
  %4479 = vmatpush1.bf16.msra.mxu0 0
  %4480 = vmatprep.subr.bf16.mxu0 0
  %4481 = vmatpush1.bf16.msra.mxu0 0
  %4482 = vmatprep.subr.bf16.mxu0 0
  %4483 = vmatpush1.bf16.msra.mxu0 0
  %4484 = vmatprep.subr.bf16.mxu0 0
  %4485 = vmatpush1.bf16.msra.mxu0 0
  %4486 = vmatprep.subr.bf16.mxu0 %v4420
  %4487 = vmatpush1.bf16.msra.mxu0 %v4419
  %4488 = vmatprep.subr.bf16.mxu0 0
  %4489 = vmatpush2.bf16.msra.mxu0 0
  %4490 = vmatprep.subr.bf16.mxu0 0
  %4491 = vmatpush2.bf16.msra.mxu0 0
  %4492 = vmatprep.subr.bf16.mxu0 0
  %4493 = vmatpush2.bf16.msra.mxu0 0
  %4494 = vmatprep.subr.bf16.mxu0 0
  %4495 = vmatpush2.bf16.msra.mxu0 0
  %4496 = vmatprep.subr.bf16.mxu0 0
  %4497 = vmatpush2.bf16.msra.mxu0 0
  %4498 = vmatprep.subr.bf16.mxu0 0
  %4499 = vmatpush2.bf16.msra.mxu0 0
  %4500 = vmatprep.subr.bf16.mxu0 0
  %4501 = vmatpush2.bf16.msra.mxu0 0
  %4502 = vmatprep.subr.bf16.mxu0 0
  %4503 = vmatpush2.bf16.msra.mxu0 0
  %4504 = vmatprep.mubr.bf16.mxu0 0
  %4505 = vmatmul.mubr.bf16.gmra.mxu0 %v4429
  %v4506 = vpop.f32.mrf.mxu0
  %v4507 = vadd.f32 %v4426, %v4506
  %v4508 = vpop.f32.mrf.mxu0
  %v4509 = vadd.f32 %v4426, %v4508
  %v4510 = vpop.f32.mrf.mxu0
  %v4511 = vpop.f32.mrf.mxu0
  %4512 = vdwg.mxu0
  %v4513 = vxor.u32 %v4466, 2147483648
  %v4514 = vxor.u32 %v4468, 2147483648
  %v4515 = vxor.u32 %v4507, 2147483648
  %v4516 = vxor.u32 %v4509, 2147483648
  %v4517 = vmul.f32 %v4513, 1.442695
  %v4518 = vpow.pop %v4517
  %v4519 = vmul.f32 %v4514, 1.442695
  %v4520 = vpow.pop %v4519
  %v4521 = vmul.f32 %v4515, 1.442695
  %v4522 = vpow.pop %v4521
  %v4523 = vmul.f32 %v4516, 1.442695
  %v4524 = vpow.pop %v4523
  %v4525 = vadd.f32 %v4518, 1.0
  %v4526 = vadd.f32 %v4520, 1.0
  %v4527 = vadd.f32 %v4522, 1.0
  %v4528 = vadd.f32 %v4524, 1.0
  %v4529 = vrcp.pop %v4525
  %v4530 = vmul.f32 1.0, %v4529
  %v4531 = vrcp.pop %v4526
  %v4532 = vmul.f32 1.0, %v4531
  %v4533 = vrcp.pop %v4527
  %v4534 = vmul.f32 1.0, %v4533
  %v4535 = vrcp.pop %v4528
  %v4536 = vmul.f32 1.0, %v4535
  %v4541 = vcombine.low %v4530, %v4532
  %v4542 = vcombine.low %v4534, %v4536
  %v4544 = vunpack.c.l.s4 1983009808
  %v4545 = vunpack.c.0.s8 %v4544
  %v4546 = vlaneseq
  %v4547 = vshrl.u32 %v4546, 7
  %v4548 = vsub.s32 %v4545, %v4547
  %v4549 = vrot.slane %v4541, %v4548
  %v4551 = vunpack.c.l.s4 1983009808
  %v4552 = vunpack.c.0.s8 %v4551
  %v4553 = vlaneseq
  %v4554 = vshrl.u32 %v4553, 7
  %v4555 = vsub.s32 %v4552, %v4554
  %v4556 = vrot.slane %v4542, %v4555
  %v4557 = vcombine.low %v4549, %v4556
  %4559 = vst [vmem:[%s10] sm:$0xff] %v4557
  // Predicated region
  $region42: #{model_forward.1} parent=0 // pred_check
    _
  $region43: #{model_forward.1} parent=0 // pred_check_branch
    %4561 = sbr.rel (0) target = $region45
  $region44: #{model_forward.1} parent=0 // pred_region
    _
  $region45: #{model_forward.1} parent=0 // pred_fallthru
    _
  // Predicated region
  $region46: #{model_forward.1} parent=0 // pred_check
    _
  $region47: #{model_forward.1} parent=0 // pred_check_branch
    %4563 = sbr.rel (0) target = $region49
  $region48: #{model_forward.1} parent=0 // pred_region
    _
  $region49: #{model_forward.1} parent=0 // pred_fallthru
    _

</llo_original>
